<compile_context>
chip_gen: v7x
topology: tpu7x:2x2x1
jax: 0.10.0
libtpu: 0.0.40
codegen_flags: <defaults>
</compile_context>

<pallas_src>
import functools
from collections import namedtuple

import jax
import jax.numpy as jnp
import numpy as np
from jax.experimental import pallas as pl
from jax.experimental.pallas import tpu as pltpu  # noqa: F401  (TPU backend)


# ----------------------------------------------------------------------------
# Pallas kernels (single full-array block; every fused tile fits VMEM here)
# ----------------------------------------------------------------------------

def _bn_rows(y, eps=1e-5):
    """BatchNorm2d (training mode, biased var) per row over lane axis M, f32."""
    inv_m = 1.0 / y.shape[1]
    s = jnp.sum(y, axis=1, keepdims=True)
    ss = jnp.sum(y * y, axis=1, keepdims=True)
    mean = s * inv_m
    var = jnp.maximum(ss * inv_m - mean * mean, 0.0)
    return (y - mean) * jax.lax.rsqrt(var + eps)


def _conv_bn_kernel(*refs, apply_bn, affine):
    # p: (K, M) patches (lane-dense M), w: (Cout, K); both pre-cast in glue
    # (bf16 for conv layers, f32 for the tiny classifier).  BN/affine in f32.
    if affine:
        p_ref, w_ref, g_ref, b_ref, o_ref = refs
    else:
        p_ref, w_ref, o_ref = refs
    y = jnp.dot(w_ref[...], p_ref[...], preferred_element_type=jnp.float32)
    if apply_bn:
        y = _bn_rows(y)
    if affine:
        y = y * g_ref[...] + b_ref[...]
    o_ref[...] = y


def _fact_reduce_kernel(p1_ref, p2_ref, w1_ref, w2_ref, o_ref):
    # Two stride-2 1x1 convs sharing one launch, as two real dots, then
    # BN(affine=False).  BN stats are per output channel, so per-half BN is
    # identical to BN of the channel concat.
    o_ref[0] = _bn_rows(jnp.dot(w1_ref[...], p1_ref[...],
                                preferred_element_type=jnp.float32))
    o_ref[1] = _bn_rows(jnp.dot(w2_ref[...], p2_ref[...],
                                preferred_element_type=jnp.float32))


def _dw_pw_bn_kernel(p_ref, dw_ref, pw_ref, o_ref):
    # Depthwise k*k conv (one tap loaded per unrolled step, f32 VPU MAC) ->
    # pointwise 1x1 conv (bf16 MXU) -> BN(affine=False).  ReLU was already
    # applied on the base activation in glue (commutes with zero padding).
    dw = dw_ref[...]                                   # (C, T) f32
    acc = p_ref[0].astype(jnp.float32) * dw[:, 0:1]
    for t in range(1, p_ref.shape[0]):                 # static unroll over taps
        acc = acc + p_ref[t].astype(jnp.float32) * dw[:, t:t + 1]
    y = jnp.dot(pw_ref[...], acc.astype(jnp.bfloat16),
                preferred_element_type=jnp.float32)
    o_ref[...] = _bn_rows(y)


def _maxpool_bn_kernel(p_ref, o_ref):
    # p: (T, C, M) padded with -inf; per-tap max, then BN(affine=False).
    acc = p_ref[0]
    for t in range(1, p_ref.shape[0]):
        acc = jnp.maximum(acc, p_ref[t])
    o_ref[...] = _bn_rows(acc)


def _avgpool_bn_kernel(p_ref, inv_ref, o_ref):
    # p: (T, C, M) zero-padded; inv: (1, M) reciprocal counts
    # (count_include_pad=False); then BN(affine=False).
    acc = p_ref[0]
    for t in range(1, p_ref.shape[0]):
        acc = acc + p_ref[t]
    o_ref[...] = _bn_rows(acc * inv_ref[...])


# ----------------------------------------------------------------------------
# Patch extraction glue ((C, N, H, W) activations, M = N*Ho*Wo lane-dense)
# ----------------------------------------------------------------------------

def _out_hw(H, W, k, stride, padding, dilation):
    Ho = (H + 2 * padding - dilation * (k - 1) - 1) // stride + 1
    Wo = (W + 2 * padding - dilation * (k - 1) - 1) // stride + 1
    return Ho, Wo


def _window_slices(xp, k, stride, dilation, Ho, Wo):
    outs = []
    for dy in range(k):
        for dx in range(k):
            ys, xs = dy * dilation, dx * dilation
            outs.append(xp[:, :, ys:ys + (Ho - 1) * stride + 1:stride,
                               xs:xs + (Wo - 1) * stride + 1:stride])
    return outs


def extract_dense_patches(x, k, stride, padding, dilation=1):
    # (C, N, H, W) -> (C*k*k, M) im2col; row order (cin, ky, kx) matches the
    # (Cout, Cin*k*k) weight layout.
    C, N, H, W = x.shape
    Ho, Wo = _out_hw(H, W, k, stride, padding, dilation)
    xp = jnp.pad(x, ((0, 0), (0, 0), (padding, padding), (padding, padding)))
    pat = jnp.stack(_window_slices(xp, k, stride, dilation, Ho, Wo), axis=1)
    return pat.reshape(C * k * k, N * Ho * Wo), (N, Ho, Wo)


def extract_window_patches(x, k, stride, padding, dilation, fill):
    # (C, N, H, W) -> (k*k, C, M): taps on the leading axis so the in-kernel
    # reduce loads one tap at a time; M stays lane-dense.
    # TODO(synk): at real scale form the taps inside the kernel from a padded
    # activation tile instead of materializing the k*k-inflated tensor in HBM.
    C, N, H, W = x.shape
    Ho, Wo = _out_hw(H, W, k, stride, padding, dilation)
    xp = jnp.pad(x, ((0, 0), (0, 0), (padding, padding), (padding, padding)),
                 constant_values=fill)
    pat = jnp.stack(_window_slices(xp, k, stride, dilation, Ho, Wo), axis=0)
    return pat.reshape(k * k, C, N * Ho * Wo), (N, Ho, Wo)


# ----------------------------------------------------------------------------
# DARTS building blocks on top of the fused kernels
# ----------------------------------------------------------------------------

def conv_1x1_bn(w, x, *, relu_in=True):
    # ReLUConvBN(1x1, stride 1, affine=False): ReLU in glue, bf16 matmul + BN.
    C, N, H, W = x.shape
    xa = jnp.maximum(x, 0.0) if relu_in else x
    patches = xa.astype(jnp.bfloat16).reshape(C, N * H * W)
    Cout = w.shape[0]
    y = pl.pallas_call(
        functools.partial(_conv_bn_kernel, apply_bn=True, affine=False),
        out_shape=jax.ShapeDtypeStruct((Cout, N * H * W), jnp.float32),
    )(patches, w)
    return y.reshape(Cout, N, H, W)


def stem_forward(params, x):
    # Conv2d(3, 3C, 3, pad=1, bias=False) + BatchNorm2d (affine), one launch.
    patches, (N, Ho, Wo) = extract_dense_patches(x.astype(jnp.bfloat16), 3, 1, 1)
    Cout = params['stem_w'].shape[0]
    y = pl.pallas_call(
        functools.partial(_conv_bn_kernel, apply_bn=True, affine=True),
        out_shape=jax.ShapeDtypeStruct((Cout, patches.shape[1]), jnp.float32),
    )(patches, params['stem_w'], params['stem_gamma'], params['stem_beta'])
    return y.reshape(Cout, N, Ho, Wo)


def factorized_reduce(p, x):
    # ReLU -> [conv1x1 s2 || conv1x1 s2 on shifted input] -> concat -> BN,
    # one launch, two real dots.
    # TODO(synk): assumes even H/W (true for the 8->4->2 toy shapes).
    C, N, H, W = x.shape
    xa = jnp.maximum(x, 0.0).astype(jnp.bfloat16)
    x1 = xa[:, :, ::2, ::2]
    x2 = xa[:, :, 1::2, 1::2]
    Ho, Wo = x1.shape[2], x1.shape[3]
    M = N * Ho * Wo
    Ch = p['w1'].shape[0]
    y = pl.pallas_call(
        _fact_reduce_kernel,
        out_shape=jax.ShapeDtypeStruct((2, Ch, M), jnp.float32),
    )(x1.reshape(C, M), x2.reshape(C, M), p['w1'], p['w2'])
    return y.reshape(2 * Ch, N, Ho, Wo)


def dw_pw_bn_block(x, dw, pw, k, stride, padding, dilation=1):
    # ReLU (glue) -> depthwise(k, stride, pad, dil) -> pointwise -> BN, fused.
    xa = jnp.maximum(x, 0.0).astype(jnp.bfloat16)
    patches, (N, Ho, Wo) = extract_window_patches(xa, k, stride, padding,
                                                  dilation, 0.0)
    Cout = pw.shape[0]
    y = pl.pallas_call(
        _dw_pw_bn_kernel,
        out_shape=jax.ShapeDtypeStruct((Cout, N * Ho * Wo), jnp.float32),
    )(patches, dw, pw)
    return y.reshape(Cout, N, Ho, Wo)


def sep_conv(p, x, k, stride, padding):
    y = dw_pw_bn_block(x, p['dw1'], p['pw1'], k, stride, padding)
    return dw_pw_bn_block(y, p['dw2'], p['pw2'], k, 1, padding)


def dil_conv(p, x, k, stride, padding, dilation):
    return dw_pw_bn_block(x, p['dw'], p['pw'], k, stride, padding, dilation)


@functools.lru_cache(maxsize=None)
def _avg_inv_counts(H, W, stride, N):
    # count_include_pad=False reciprocal counts for 3x3/pad-1 average pooling,
    # precomputed on host (constant under jit), lane-dense (1, N*Ho*Wo).
    mask = np.zeros((H + 2, W + 2), np.float32)
    mask[1:H + 1, 1:W + 1] = 1.0
    Ho, Wo = (H - 1) // stride + 1, (W - 1) // stride + 1
    cnt = np.zeros((Ho, Wo), np.float32)
    for dy in range(3):
        for dx in range(3):
            cnt += mask[dy:dy + (Ho - 1) * stride + 1:stride,
                        dx:dx + (Wo - 1) * stride + 1:stride]
    inv = np.tile((1.0 / cnt).reshape(-1), N).reshape(1, N * Ho * Wo)
    return jnp.asarray(inv)


def max_pool_bn(x, stride):
    # MaxPool2d(3, stride, pad=1) + BatchNorm2d(affine=False), fused.
    C, N, H, W = x.shape
    patches, (N_, Ho, Wo) = extract_window_patches(x, 3, stride, 1, 1, -np.inf)
    y = pl.pallas_call(
        _maxpool_bn_kernel,
        out_shape=jax.ShapeDtypeStruct((C, N_ * Ho * Wo), jnp.float32))(patches)
    return y.reshape(C, N_, Ho, Wo)


def avg_pool_bn(x, stride):
    # AvgPool2d(3, stride, pad=1, count_include_pad=False) + BN(affine=False).
    C, N, H, W = x.shape
    patches, (N_, Ho, Wo) = extract_window_patches(x, 3, stride, 1, 1, 0.0)
    inv = _avg_inv_counts(H, W, stride, N)
    y = pl.pallas_call(
        _avgpool_bn_kernel,
        out_shape=jax.ShapeDtypeStruct((C, N_ * Ho * Wo), jnp.float32))(patches, inv)
    return y.reshape(C, N_, Ho, Wo)


PRIMITIVES = ['none', 'max_pool_3x3', 'avg_pool_3x3', 'skip_connect',
              'sep_conv_3x3', 'sep_conv_5x5', 'dil_conv_3x3', 'dil_conv_5x5']


def mixed_op_forward(p, x, w_row, stride):
    # w_row: STATIC Python tuple of 0/1 weights from _topK -> zero-weight
    # primitives are pruned at trace time; 'none' always contributes zero.
    # TODO(synk): at real scale batch the surviving pointwise/1x1 matmuls of
    # an edge into one >=256-wide MXU launch instead of one launch each.
    C, N, H, W = x.shape
    acc = None
    for idx, prim in enumerate(PRIMITIVES):
        wv = float(w_row[idx])
        if wv == 0.0 or prim == 'none':
            continue
        if prim == 'max_pool_3x3':
            out = max_pool_bn(x, stride)
        elif prim == 'avg_pool_3x3':
            out = avg_pool_bn(x, stride)
        elif prim == 'skip_connect':
            out = x if stride == 1 else factorized_reduce(p['skip'], x)
        elif prim == 'sep_conv_3x3':
            out = sep_conv(p['sep3'], x, 3, stride, 1)
        elif prim == 'sep_conv_5x5':
            out = sep_conv(p['sep5'], x, 5, stride, 2)
        elif prim == 'dil_conv_3x3':
            out = dil_conv(p['dil3'], x, 3, stride, 2, 2)
        else:  # 'dil_conv_5x5'
            out = dil_conv(p['dil5'], x, 5, stride, 4, 2)
        if wv != 1.0:
            out = out * wv
        acc = out if acc is None else acc + out
    if acc is None:
        Ho, Wo = (H - 1) // stride + 1, (W - 1) // stride + 1
        acc = jnp.zeros((C, N, Ho, Wo), jnp.float32)
    return acc


def cell_forward(cp, s0, s1, weights, steps, multiplier, reduction, reduction_prev):
    if reduction_prev:
        s0 = factorized_reduce(cp['pre0'], s0)
    else:
        s0 = conv_1x1_bn(cp['pre0']['w'], s0)
    s1 = conv_1x1_bn(cp['pre1']['w'], s1)
    states = [s0, s1]
    offset = 0
    for _ in range(steps):
        s = None
        for j, h in enumerate(states):
            stride = 2 if reduction and j < 2 else 1
            out = mixed_op_forward(cp['ops'][offset + j], h,
                                   weights[offset + j], stride)
            s = out if s is None else s + out
        offset += len(states)
        states.append(s)
    return jnp.concatenate(states[-multiplier:], axis=0)   # channel concat


def top_k_weights(p, K):
    # Faithful host-side reproduction of ValidArch._topK (slice-local row
    # index, in-place zeroing, hard-coded num_nodes=7).
    p = np.array(jax.device_get(p), dtype=np.float32, copy=True)
    new_w = np.zeros_like(p)
    num_ops = p.shape[1]
    offset = 0
    num_nodes = 7
    for i in range(2, num_nodes):
        edge = p[offset:offset + i]
        for _ in range(K):
            index = int(edge.argmax())
            j, opid = index // num_ops, index % num_ops
            new_w[j, opid] = 1.0
            edge[j, opid] = 0.0
        offset += i
    return new_w


def _static_mask(w):
    return tuple(tuple(float(v) for v in row) for row in w)


# ----------------------------------------------------------------------------
# Whole-forward jit (static architecture + static 0/1 masks, traced params)
# ----------------------------------------------------------------------------

Arch = namedtuple('Arch', ['steps', 'multiplier', 'K', 'cell_flags'])


@functools.partial(jax.jit, static_argnums=(0, 1, 2))
def _forward_jit(arch, w_normal, w_reduce, params, x):
    # x: NCHW -> internal (C, N, H, W) so M = N*H*W is the lane axis of every
    # Pallas tile.  The whole forward is one XLA program (single dispatch).
    xc = jnp.transpose(x, (1, 0, 2, 3)).astype(jnp.float32)
    s0 = s1 = stem_forward(params, xc)
    for ci, (reduction, reduction_prev) in enumerate(arch.cell_flags):
        cp = params['cells'][ci]
        w = w_reduce if reduction else w_normal
        s0, s1 = s1, cell_forward(cp, s0, s1, w, arch.steps, arch.multiplier,
                                  reduction, reduction_prev)
    # AdaptiveAvgPool2d(1): trivial reduction kept as JAX glue (fused by XLA).
    pooled = jnp.mean(s1, axis=(2, 3))                      # (C_prev, N)
    nc = params['cls_w'].shape[0]
    logits = pl.pallas_call(
        functools.partial(_conv_bn_kernel, apply_bn=False, affine=True),
        out_shape=jax.ShapeDtypeStruct((nc, pooled.shape[1]), jnp.float32),
    )(pooled, params['cls_w'], jnp.ones((nc, 1), jnp.float32), params['cls_b'])
    return logits.T                                         # (N, num_classes)


def valid_arch_forward(arch, params, x, p_normal, p_reduce):
    # _topK (data-dependent argmax selection) stays on host; the 0/1 masks
    # enter the jitted forward as static tuples so zero-weight primitives are
    # pruned at trace time and the traced program stays a single pipeline.
    w_normal = _static_mask(top_k_weights(p_normal, arch.K))
    w_reduce = _static_mask(top_k_weights(p_reduce, arch.K))
    return _forward_jit(arch, w_normal, w_reduce, params, x)


# ----------------------------------------------------------------------------
# Parameter construction (deterministic, matmul-ready layouts, bf16 MXU wts)
# ----------------------------------------------------------------------------

class KeyGen:
    def __init__(self, seed):
        self._key = jax.random.PRNGKey(seed)

    def __call__(self):
        self._key, sub = jax.random.split(self._key)
        return sub


def _mat(kg, cout, cin):          # 1x1 / pointwise weight, bf16 MXU operand
    return (jax.random.normal(kg(), (cout, cin), jnp.float32) * 0.1
            ).astype(jnp.bfloat16)


def _convmat(kg, cout, cin, k):   # k*k conv weight, (Cout, Cin*k*k) bf16
    return (jax.random.normal(kg(), (cout, cin * k * k), jnp.float32) * 0.1
            ).astype(jnp.bfloat16)


def _dwmat(kg, c, k):             # depthwise weight (C, k*k), f32 (VPU MAC)
    return jax.random.normal(kg(), (c, k * k), jnp.float32) * 0.1


def make_mixed_op_params(kg, C, stride):
    p = {}
    if stride != 1:
        p['skip'] = {'w1': _mat(kg, C // 2, C), 'w2': _mat(kg, C // 2, C)}
    p['sep3'] = {'dw1': _dwmat(kg, C, 3), 'pw1': _mat(kg, C, C),
                 'dw2': _dwmat(kg, C, 3), 'pw2': _mat(kg, C, C)}
    p['sep5'] = {'dw1': _dwmat(kg, C, 5), 'pw1': _mat(kg, C, C),
                 'dw2': _dwmat(kg, C, 5), 'pw2': _mat(kg, C, C)}
    p['dil3'] = {'dw': _dwmat(kg, C, 3), 'pw': _mat(kg, C, C)}
    p['dil5'] = {'dw': _dwmat(kg, C, 5), 'pw': _mat(kg, C, C)}
    return p


def make_valid_arch_params(seed, C, num_classes, layers, steps=4, multiplier=4,
                           stem_multiplier=3, K=2):
    kg = KeyGen(seed)
    C_curr = stem_multiplier * C
    params = {'stem_w': _convmat(kg, C_curr, 3, 3),
              'stem_gamma': jnp.ones((C_curr, 1), jnp.float32),
              'stem_beta': jnp.zeros((C_curr, 1), jnp.float32)}
    C_pp, C_p = C_curr, C_curr
    C_cur = C
    cells, flags = [], []
    reduction_prev = False
    for i in range(layers):
        if i in [layers // 3, 2 * layers // 3]:
            C_cur *= 2
            reduction = True
        else:
            reduction = False
        cp = {}
        if reduction_prev:
            cp['pre0'] = {'w1': _mat(kg, C_cur // 2, C_pp),
                          'w2': _mat(kg, C_cur // 2, C_pp)}
        else:
            cp['pre0'] = {'w': _mat(kg, C_cur, C_pp)}
        cp['pre1'] = {'w': _mat(kg, C_cur, C_p)}
        ops = []
        for st in range(steps):
            for j in range(2 + st):
                stride = 2 if reduction and j < 2 else 1
                ops.append(make_mixed_op_params(kg, C_cur, stride))
        cp['ops'] = ops
        cells.append(cp)
        flags.append((reduction, reduction_prev))
        reduction_prev = reduction
        C_pp, C_p = C_p, multiplier * C_cur
    params['cells'] = cells
    params['cls_w'] = jax.random.normal(kg(), (num_classes, C_p), jnp.float32) * 0.1
    params['cls_b'] = jnp.zeros((num_classes, 1), jnp.float32)
    arch = Arch(steps=steps, multiplier=multiplier, K=K, cell_flags=tuple(flags))
    return arch, params


# ----------------------------------------------------------------------------

if __name__ == "__main__":
    C, num_classes, layers = 4, 10, 2
    arch, params = make_valid_arch_params(seed=0, C=C, num_classes=num_classes,
                                          layers=layers)

    key = jax.random.PRNGKey(0)
    kx, kn, kr = jax.random.split(key, 3)
    x = jax.random.normal(kx, (2, 3, 8, 8), jnp.float32)       # NCHW input
    # _topK hard-codes num_nodes=7 -> needs 2+3+4+5+6 = 20 edge rows, 8 ops.
    p_normal = jax.random.uniform(kn, (20, 8), jnp.float32)
    p_reduce = jax.random.uniform(kr, (20, 8), jnp.float32)

    logits = valid_arch_forward(arch, params, x, p_normal, p_reduce)
    logits = jax.block_until_ready(logits)
    assert logits.shape == (2, num_classes)
    assert bool(jnp.all(jnp.isfinite(logits)))
    print("KERNEL_OK")
</pallas_src>

<mosaic_0001>
module attributes {stable_mosaic.version = 11 : i64} {
  func.func @_conv_bn_kernel(%arg0: memref<27x128xbf16, #tpu.memory_space<vmem>>, %arg1: memref<12x27xbf16, #tpu.memory_space<vmem>>, %arg2: memref<12x1xf32, #tpu.memory_space<vmem>>, %arg3: memref<12x1xf32, #tpu.memory_space<vmem>>, %arg4: memref<12x128xf32, #tpu.memory_space<vmem>>) attributes {dimension_semantics = [], scalar_prefetch = 0 : i64, scratch_operands = 0 : i64, tpu.core_type = #tpu.core_type<tc>} {
    %c0 = arith.constant 0 : index
    %c0_0 = arith.constant 0 : index
    %0 = vector.load %arg1[%c0, %c0_0] : memref<12x27xbf16, #tpu.memory_space<vmem>>, vector<12x27xbf16>
    %c0_1 = arith.constant 0 : index
    %c0_2 = arith.constant 0 : index
    %1 = vector.load %arg0[%c0_1, %c0_2] : memref<27x128xbf16, #tpu.memory_space<vmem>>, vector<27x128xbf16>
    %cst = arith.constant dense<0.000000e+00> : vector<12x128xf32>
    %2 = tpu.matmul %0, %1, %cst {dimension_numbers = #tpu.dot_dimension_numbers<[1], [0], [0], [1], [0, 0, 1, 1], [], []>} : vector<12x27xbf16>, vector<27x128xbf16>, vector<12x128xf32> -> vector<12x128xf32>
    %cst_3 = arith.constant dense<0.000000e+00> : vector<12xf32>
    %3 = vector.multi_reduction <add>, %2, %cst_3 [1] : vector<12x128xf32> to vector<12xf32>
    %4 = vector.shape_cast %3 : vector<12xf32> to vector<12x1xf32>
    %5 = arith.mulf %2, %2 : vector<12x128xf32>
    %cst_4 = arith.constant dense<0.000000e+00> : vector<12xf32>
    %6 = vector.multi_reduction <add>, %5, %cst_4 [1] : vector<12x128xf32> to vector<12xf32>
    %7 = vector.shape_cast %6 : vector<12xf32> to vector<12x1xf32>
    %cst_5 = arith.constant 7.812500e-03 : f32
    %8 = vector.broadcast %cst_5 : f32 to vector<12x1xf32>
    %9 = arith.mulf %4, %8 : vector<12x1xf32>
    %cst_6 = arith.constant 7.812500e-03 : f32
    %10 = vector.broadcast %cst_6 : f32 to vector<12x1xf32>
    %11 = arith.mulf %7, %10 : vector<12x1xf32>
    %12 = arith.mulf %9, %9 : vector<12x1xf32>
    %13 = arith.subf %11, %12 : vector<12x1xf32>
    %cst_7 = arith.constant 0.000000e+00 : f32
    %14 = vector.broadcast %cst_7 : f32 to vector<12x1xf32>
    %15 = arith.maximumf %13, %14 : vector<12x1xf32>
    %16 = vector.broadcast %9 : vector<12x1xf32> to vector<12x128xf32>
    %17 = arith.subf %2, %16 : vector<12x128xf32>
    %cst_8 = arith.constant 9.99999974E-6 : f32
    %18 = vector.broadcast %cst_8 : f32 to vector<12x1xf32>
    %19 = arith.addf %15, %18 : vector<12x1xf32>
    %20 = math.rsqrt %19 : vector<12x1xf32>
    %21 = vector.broadcast %20 : vector<12x1xf32> to vector<12x128xf32>
    %22 = arith.mulf %17, %21 : vector<12x128xf32>
    %c0_9 = arith.constant 0 : index
    %c0_10 = arith.constant 0 : index
    %23 = vector.load %arg2[%c0_9, %c0_10] : memref<12x1xf32, #tpu.memory_space<vmem>>, vector<12x1xf32>
    %24 = vector.broadcast %23 : vector<12x1xf32> to vector<12x128xf32>
    %25 = arith.mulf %22, %24 : vector<12x128xf32>
    %c0_11 = arith.constant 0 : index
    %c0_12 = arith.constant 0 : index
    %26 = vector.load %arg3[%c0_11, %c0_12] : memref<12x1xf32, #tpu.memory_space<vmem>>, vector<12x1xf32>
    %27 = vector.broadcast %26 : vector<12x1xf32> to vector<12x128xf32>
    %28 = arith.addf %25, %27 : vector<12x128xf32>
    %c0_13 = arith.constant 0 : index
    %c0_14 = arith.constant 0 : index
    %29 = vector.load %arg4[%c0_13, %c0_14] : memref<12x128xf32, #tpu.memory_space<vmem>>, vector<12x128xf32>
    tpu.vector_store %arg4[%c0_13, %c0_14], %28 {strides = array<i32>} : memref<12x128xf32, #tpu.memory_space<vmem>>, vector<12x128xf32>,
    return
  }
}

module attributes {stable_mosaic.version = 11 : i64} {
  func.func @_conv_bn_kernel(%arg0: memref<12x128xbf16, #tpu.memory_space<vmem>>, %arg1: memref<8x12xbf16, #tpu.memory_space<vmem>>, %arg2: memref<8x128xf32, #tpu.memory_space<vmem>>) attributes {dimension_semantics = [], scalar_prefetch = 0 : i64, scratch_operands = 0 : i64, tpu.core_type = #tpu.core_type<tc>} {
    %c0 = arith.constant 0 : index
    %c0_0 = arith.constant 0 : index
    %0 = vector.load %arg1[%c0, %c0_0] : memref<8x12xbf16, #tpu.memory_space<vmem>>, vector<8x12xbf16>
    %c0_1 = arith.constant 0 : index
    %c0_2 = arith.constant 0 : index
    %1 = vector.load %arg0[%c0_1, %c0_2] : memref<12x128xbf16, #tpu.memory_space<vmem>>, vector<12x128xbf16>
    %cst = arith.constant dense<0.000000e+00> : vector<8x128xf32>
    %2 = tpu.matmul %0, %1, %cst {dimension_numbers = #tpu.dot_dimension_numbers<[1], [0], [0], [1], [0, 0, 1, 1], [], []>} : vector<8x12xbf16>, vector<12x128xbf16>, vector<8x128xf32> -> vector<8x128xf32>
    %cst_3 = arith.constant dense<0.000000e+00> : vector<8xf32>
    %3 = vector.multi_reduction <add>, %2, %cst_3 [1] : vector<8x128xf32> to vector<8xf32>
    %4 = vector.shape_cast %3 : vector<8xf32> to vector<8x1xf32>
    %5 = arith.mulf %2, %2 : vector<8x128xf32>
    %cst_4 = arith.constant dense<0.000000e+00> : vector<8xf32>
    %6 = vector.multi_reduction <add>, %5, %cst_4 [1] : vector<8x128xf32> to vector<8xf32>
    %7 = vector.shape_cast %6 : vector<8xf32> to vector<8x1xf32>
    %cst_5 = arith.constant 7.812500e-03 : f32
    %8 = vector.broadcast %cst_5 : f32 to vector<8x1xf32>
    %9 = arith.mulf %4, %8 : vector<8x1xf32>
    %cst_6 = arith.constant 7.812500e-03 : f32
    %10 = vector.broadcast %cst_6 : f32 to vector<8x1xf32>
    %11 = arith.mulf %7, %10 : vector<8x1xf32>
    %12 = arith.mulf %9, %9 : vector<8x1xf32>
    %13 = arith.subf %11, %12 : vector<8x1xf32>
    %cst_7 = arith.constant 0.000000e+00 : f32
    %14 = vector.broadcast %cst_7 : f32 to vector<8x1xf32>
    %15 = arith.maximumf %13, %14 : vector<8x1xf32>
    %16 = vector.broadcast %9 : vector<8x1xf32> to vector<8x128xf32>
    %17 = arith.subf %2, %16 : vector<8x128xf32>
    %cst_8 = arith.constant 9.99999974E-6 : f32
    %18 = vector.broadcast %cst_8 : f32 to vector<8x1xf32>
    %19 = arith.addf %15, %18 : vector<8x1xf32>
    %20 = math.rsqrt %19 : vector<8x1xf32>
    %21 = vector.broadcast %20 : vector<8x1xf32> to vector<8x128xf32>
    %22 = arith.mulf %17, %21 : vector<8x128xf32>
    %c0_9 = arith.constant 0 : index
    %c0_10 = arith.constant 0 : index
    %23 = vector.load %arg2[%c0_9, %c0_10] : memref<8x128xf32, #tpu.memory_space<vmem>>, vector<8x128xf32>
    tpu.vector_store %arg2[%c0_9, %c0_10], %22 {strides = array<i32>} : memref<8x128xf32, #tpu.memory_space<vmem>>, vector<8x128xf32>,
    return
  }
}

module attributes {stable_mosaic.version = 11 : i64} {
  func.func @_dw_pw_bn_kernel(%arg0: memref<25x8x32xbf16, #tpu.memory_space<vmem>>, %arg1: memref<8x25xf32, #tpu.memory_space<vmem>>, %arg2: memref<8x8xbf16, #tpu.memory_space<vmem>>, %arg3: memref<8x32xf32, #tpu.memory_space<vmem>>) attributes {dimension_semantics = [], scalar_prefetch = 0 : i64, scratch_operands = 0 : i64, tpu.core_type = #tpu.core_type<tc>} {
    %c0 = arith.constant 0 : index
    %c0_0 = arith.constant 0 : index
    %0 = vector.load %arg1[%c0, %c0_0] : memref<8x25xf32, #tpu.memory_space<vmem>>, vector<8x25xf32>
    %c0_1 = arith.constant 0 : index
    %c0_2 = arith.constant 0 : index
    %c0_3 = arith.constant 0 : index
    %1 = vector.load %arg0[%c0_1, %c0_2, %c0_3] : memref<25x8x32xbf16, #tpu.memory_space<vmem>>, vector<1x8x32xbf16>
    %2 = vector.shape_cast %1 : vector<1x8x32xbf16> to vector<8x32xbf16>
    %3 = arith.extf %2 : vector<8x32xbf16> to vector<8x32xf32>
    %4 = vector.extract_strided_slice %0 {offsets = [0, 0], sizes = [8, 1], strides = [1, 1]} : vector<8x25xf32> to vector<8x1xf32>
    %5 = vector.broadcast %4 : vector<8x1xf32> to vector<8x32xf32>
    %6 = arith.mulf %3, %5 : vector<8x32xf32>
    %c1 = arith.constant 1 : index
    %c0_4 = arith.constant 0 : index
    %c0_5 = arith.constant 0 : index
    %7 = vector.load %arg0[%c1, %c0_4, %c0_5] : memref<25x8x32xbf16, #tpu.memory_space<vmem>>, vector<1x8x32xbf16>
    %8 = vector.shape_cast %7 : vector<1x8x32xbf16> to vector<8x32xbf16>
    %9 = arith.extf %8 : vector<8x32xbf16> to vector<8x32xf32>
    %10 = vector.extract_strided_slice %0 {offsets = [0, 1], sizes = [8, 1], strides = [1, 1]} : vector<8x25xf32> to vector<8x1xf32>
    %11 = vector.broadcast %10 : vector<8x1xf32> to vector<8x32xf32>
    %12 = arith.mulf %9, %11 : vector<8x32xf32>
    %13 = arith.addf %6, %12 : vector<8x32xf32>
    %c2 = arith.constant 2 : index
    %c0_6 = arith.constant 0 : index
    %c0_7 = arith.constant 0 : index
    %14 = vector.load %arg0[%c2, %c0_6, %c0_7] : memref<25x8x32xbf16, #tpu.memory_space<vmem>>, vector<1x8x32xbf16>
    %15 = vector.shape_cast %14 : vector<1x8x32xbf16> to vector<8x32xbf16>
    %16 = arith.extf %15 : vector<8x32xbf16> to vector<8x32xf32>
    %17 = vector.extract_strided_slice %0 {offsets = [0, 2], sizes = [8, 1], strides = [1, 1]} : vector<8x25xf32> to vector<8x1xf32>
    %18 = vector.broadcast %17 : vector<8x1xf32> to vector<8x32xf32>
    %19 = arith.mulf %16, %18 : vector<8x32xf32>
    %20 = arith.addf %13, %19 : vector<8x32xf32>
    %c3 = arith.constant 3 : index
    %c0_8 = arith.constant 0 : index
    %c0_9 = arith.constant 0 : index
    %21 = vector.load %arg0[%c3, %c0_8, %c0_9] : memref<25x8x32xbf16, #tpu.memory_space<vmem>>, vector<1x8x32xbf16>
    %22 = vector.shape_cast %21 : vector<1x8x32xbf16> to vector<8x32xbf16>
    %23 = arith.extf %22 : vector<8x32xbf16> to vector<8x32xf32>
    %24 = vector.extract_strided_slice %0 {offsets = [0, 3], sizes = [8, 1], strides = [1, 1]} : vector<8x25xf32> to vector<8x1xf32>
    %25 = vector.broadcast %24 : vector<8x1xf32> to vector<8x32xf32>
    %26 = arith.mulf %23, %25 : vector<8x32xf32>
    %27 = arith.addf %20, %26 : vector<8x32xf32>
    %c4 = arith.constant 4 : index
    %c0_10 = arith.constant 0 : index
    %c0_11 = arith.constant 0 : index
    %28 = vector.load %arg0[%c4, %c0_10, %c0_11] : memref<25x8x32xbf16, #tpu.memory_space<vmem>>, vector<1x8x32xbf16>
    %29 = vector.shape_cast %28 : vector<1x8x32xbf16> to vector<8x32xbf16>
    %30 = arith.extf %29 : vector<8x32xbf16> to vector<8x32xf32>
    %31 = vector.extract_strided_slice %0 {offsets = [0, 4], sizes = [8, 1], strides = [1, 1]} : vector<8x25xf32> to vector<8x1xf32>
    %32 = vector.broadcast %31 : vector<8x1xf32> to vector<8x32xf32>
    %33 = arith.mulf %30, %32 : vector<8x32xf32>
    %34 = arith.addf %27, %33 : vector<8x32xf32>
    %c5 = arith.constant 5 : index
    %c0_12 = arith.constant 0 : index
    %c0_13 = arith.constant 0 : index
    %35 = vector.load %arg0[%c5, %c0_12, %c0_13] : memref<25x8x32xbf16, #tpu.memory_space<vmem>>, vector<1x8x32xbf16>
    %36 = vector.shape_cast %35 : vector<1x8x32xbf16> to vector<8x32xbf16>
    %37 = arith.extf %36 : vector<8x32xbf16> to vector<8x32xf32>
    %38 = vector.extract_strided_slice %0 {offsets = [0, 5], sizes = [8, 1], strides = [1, 1]} : vector<8x25xf32> to vector<8x1xf32>
    %39 = vector.broadcast %38 : vector<8x1xf32> to vector<8x32xf32>
    %40 = arith.mulf %37, %39 : vector<8x32xf32>
    %41 = arith.addf %34, %40 : vector<8x32xf32>
    %c6 = arith.constant 6 : index
    %c0_14 = arith.constant 0 : index
    %c0_15 = arith.constant 0 : index
    %42 = vector.load %arg0[%c6, %c0_14, %c0_15] : memref<25x8x32xbf16, #tpu.memory_space<vmem>>, vector<1x8x32xbf16>
    %43 = vector.shape_cast %42 : vector<1x8x32xbf16> to vector<8x32xbf16>
    %44 = arith.extf %43 : vector<8x32xbf16> to vector<8x32xf32>
    %45 = vector.extract_strided_slice %0 {offsets = [0, 6], sizes = [8, 1], strides = [1, 1]} : vector<8x25xf32> to vector<8x1xf32>
    %46 = vector.broadcast %45 : vector<8x1xf32> to vector<8x32xf32>
    %47 = arith.mulf %44, %46 : vector<8x32xf32>
    %48 = arith.addf %41, %47 : vector<8x32xf32>
    %c7 = arith.constant 7 : index
    %c0_16 = arith.constant 0 : index
    %c0_17 = arith.constant 0 : index
    %49 = vector.load %arg0[%c7, %c0_16, %c0_17] : memref<25x8x32xbf16, #tpu.memory_space<vmem>>, vector<1x8x32xbf16>
    %50 = vector.shape_cast %49 : vector<1x8x32xbf16> to vector<8x32xbf16>
    %51 = arith.extf %50 : vector<8x32xbf16> to vector<8x32xf32>
    %52 = vector.extract_strided_slice %0 {offsets = [0, 7], sizes = [8, 1], strides = [1, 1]} : vector<8x25xf32> to vector<8x1xf32>
    %53 = vector.broadcast %52 : vector<8x1xf32> to vector<8x32xf32>
    %54 = arith.mulf %51, %53 : vector<8x32xf32>
    %55 = arith.addf %48, %54 : vector<8x32xf32>
    %c8 = arith.constant 8 : index
    %c0_18 = arith.constant 0 : index
    %c0_19 = arith.constant 0 : index
    %56 = vector.load %arg0[%c8, %c0_18, %c0_19] : memref<25x8x32xbf16, #tpu.memory_space<vmem>>, vector<1x8x32xbf16>
    %57 = vector.shape_cast %56 : vector<1x8x32xbf16> to vector<8x32xbf16>
    %58 = arith.extf %57 : vector<8x32xbf16> to vector<8x32xf32>
    %59 = vector.extract_strided_slice %0 {offsets = [0, 8], sizes = [8, 1], strides = [1, 1]} : vector<8x25xf32> to vector<8x1xf32>
    %60 = vector.broadcast %59 : vector<8x1xf32> to vector<8x32xf32>
    %61 = arith.mulf %58, %60 : vector<8x32xf32>
    %62 = arith.addf %55, %61 : vector<8x32xf32>
    %c9 = arith.constant 9 : index
    %c0_20 = arith.constant 0 : index
    %c0_21 = arith.constant 0 : index
    %63 = vector.load %arg0[%c9, %c0_20, %c0_21] : memref<25x8x32xbf16, #tpu.memory_space<vmem>>, vector<1x8x32xbf16>
    %64 = vector.shape_cast %63 : vector<1x8x32xbf16> to vector<8x32xbf16>
    %65 = arith.extf %64 : vector<8x32xbf16> to vector<8x32xf32>
    %66 = vector.extract_strided_slice %0 {offsets = [0, 9], sizes = [8, 1], strides = [1, 1]} : vector<8x25xf32> to vector<8x1xf32>
    %67 = vector.broadcast %66 : vector<8x1xf32> to vector<8x32xf32>
    %68 = arith.mulf %65, %67 : vector<8x32xf32>
    %69 = arith.addf %62, %68 : vector<8x32xf32>
    %c10 = arith.constant 10 : index
    %c0_22 = arith.constant 0 : index
    %c0_23 = arith.constant 0 : index
    %70 = vector.load %arg0[%c10, %c0_22, %c0_23] : memref<25x8x32xbf16, #tpu.memory_space<vmem>>, vector<1x8x32xbf16>
    %71 = vector.shape_cast %70 : vector<1x8x32xbf16> to vector<8x32xbf16>
    %72 = arith.extf %71 : vector<8x32xbf16> to vector<8x32xf32>
    %73 = vector.extract_strided_slice %0 {offsets = [0, 10], sizes = [8, 1], strides = [1, 1]} : vector<8x25xf32> to vector<8x1xf32>
    %74 = vector.broadcast %73 : vector<8x1xf32> to vector<8x32xf32>
    %75 = arith.mulf %72, %74 : vector<8x32xf32>
    %76 = arith.addf %69, %75 : vector<8x32xf32>
    %c11 = arith.constant 11 : index
    %c0_24 = arith.constant 0 : index
    %c0_25 = arith.constant 0 : index
    %77 = vector.load %arg0[%c11, %c0_24, %c0_25] : memref<25x8x32xbf16, #tpu.memory_space<vmem>>, vector<1x8x32xbf16>
    %78 = vector.shape_cast %77 : vector<1x8x32xbf16> to vector<8x32xbf16>
    %79 = arith.extf %78 : vector<8x32xbf16> to vector<8x32xf32>
    %80 = vector.extract_strided_slice %0 {offsets = [0, 11], sizes = [8, 1], strides = [1, 1]} : vector<8x25xf32> to vector<8x1xf32>
    %81 = vector.broadcast %80 : vector<8x1xf32> to vector<8x32xf32>
    %82 = arith.mulf %79, %81 : vector<8x32xf32>
    %83 = arith.addf %76, %82 : vector<8x32xf32>
    %c12 = arith.constant 12 : index
    %c0_26 = arith.constant 0 : index
    %c0_27 = arith.constant 0 : index
    %84 = vector.load %arg0[%c12, %c0_26, %c0_27] : memref<25x8x32xbf16, #tpu.memory_space<vmem>>, vector<1x8x32xbf16>
    %85 = vector.shape_cast %84 : vector<1x8x32xbf16> to vector<8x32xbf16>
    %86 = arith.extf %85 : vector<8x32xbf16> to vector<8x32xf32>
    %87 = vector.extract_strided_slice %0 {offsets = [0, 12], sizes = [8, 1], strides = [1, 1]} : vector<8x25xf32> to vector<8x1xf32>
    %88 = vector.broadcast %87 : vector<8x1xf32> to vector<8x32xf32>
    %89 = arith.mulf %86, %88 : vector<8x32xf32>
    %90 = arith.addf %83, %89 : vector<8x32xf32>
    %c13 = arith.constant 13 : index
    %c0_28 = arith.constant 0 : index
    %c0_29 = arith.constant 0 : index
    %91 = vector.load %arg0[%c13, %c0_28, %c0_29] : memref<25x8x32xbf16, #tpu.memory_space<vmem>>, vector<1x8x32xbf16>
    %92 = vector.shape_cast %91 : vector<1x8x32xbf16> to vector<8x32xbf16>
    %93 = arith.extf %92 : vector<8x32xbf16> to vector<8x32xf32>
    %94 = vector.extract_strided_slice %0 {offsets = [0, 13], sizes = [8, 1], strides = [1, 1]} : vector<8x25xf32> to vector<8x1xf32>
    %95 = vector.broadcast %94 : vector<8x1xf32> to vector<8x32xf32>
    %96 = arith.mulf %93, %95 : vector<8x32xf32>
    %97 = arith.addf %90, %96 : vector<8x32xf32>
    %c14 = arith.constant 14 : index
    %c0_30 = arith.constant 0 : index
    %c0_31 = arith.constant 0 : index
    %98 = vector.load %arg0[%c14, %c0_30, %c0_31] : memref<25x8x32xbf16, #tpu.memory_space<vmem>>, vector<1x8x32xbf16>
    %99 = vector.shape_cast %98 : vector<1x8x32xbf16> to vector<8x32xbf16>
    %100 = arith.extf %99 : vector<8x32xbf16> to vector<8x32xf32>
    %101 = vector.extract_strided_slice %0 {offsets = [0, 14], sizes = [8, 1], strides = [1, 1]} : vector<8x25xf32> to vector<8x1xf32>
    %102 = vector.broadcast %101 : vector<8x1xf32> to vector<8x32xf32>
    %103 = arith.mulf %100, %102 : vector<8x32xf32>
    %104 = arith.addf %97, %103 : vector<8x32xf32>
    %c15 = arith.constant 15 : index
    %c0_32 = arith.constant 0 : index
    %c0_33 = arith.constant 0 : index
    %105 = vector.load %arg0[%c15, %c0_32, %c0_33] : memref<25x8x32xbf16, #tpu.memory_space<vmem>>, vector<1x8x32xbf16>
    %106 = vector.shape_cast %105 : vector<1x8x32xbf16> to vector<8x32xbf16>
    %107 = arith.extf %106 : vector<8x32xbf16> to vector<8x32xf32>
    %108 = vector.extract_strided_slice %0 {offsets = [0, 15], sizes = [8, 1], strides = [1, 1]} : vector<8x25xf32> to vector<8x1xf32>
    %109 = vector.broadcast %108 : vector<8x1xf32> to vector<8x32xf32>
    %110 = arith.mulf %107, %109 : vector<8x32xf32>
    %111 = arith.addf %104, %110 : vector<8x32xf32>
    %c16 = arith.constant 16 : index
    %c0_34 = arith.constant 0 : index
    %c0_35 = arith.constant 0 : index
    %112 = vector.load %arg0[%c16, %c0_34, %c0_35] : memref<25x8x32xbf16, #tpu.memory_space<vmem>>, vector<1x8x32xbf16>
    %113 = vector.shape_cast %112 : vector<1x8x32xbf16> to vector<8x32xbf16>
    %114 = arith.extf %113 : vector<8x32xbf16> to vector<8x32xf32>
    %115 = vector.extract_strided_slice %0 {offsets = [0, 16], sizes = [8, 1], strides = [1, 1]} : vector<8x25xf32> to vector<8x1xf32>
    %116 = vector.broadcast %115 : vector<8x1xf32> to vector<8x32xf32>
    %117 = arith.mulf %114, %116 : vector<8x32xf32>
    %118 = arith.addf %111, %117 : vector<8x32xf32>
    %c17 = arith.constant 17 : index
    %c0_36 = arith.constant 0 : index
    %c0_37 = arith.constant 0 : index
    %119 = vector.load %arg0[%c17, %c0_36, %c0_37] : memref<25x8x32xbf16, #tpu.memory_space<vmem>>, vector<1x8x32xbf16>
    %120 = vector.shape_cast %119 : vector<1x8x32xbf16> to vector<8x32xbf16>
    %121 = arith.extf %120 : vector<8x32xbf16> to vector<8x32xf32>
    %122 = vector.extract_strided_slice %0 {offsets = [0, 17], sizes = [8, 1], strides = [1, 1]} : vector<8x25xf32> to vector<8x1xf32>
    %123 = vector.broadcast %122 : vector<8x1xf32> to vector<8x32xf32>
    %124 = arith.mulf %121, %123 : vector<8x32xf32>
    %125 = arith.addf %118, %124 : vector<8x32xf32>
    %c18 = arith.constant 18 : index
    %c0_38 = arith.constant 0 : index
    %c0_39 = arith.constant 0 : index
    %126 = vector.load %arg0[%c18, %c0_38, %c0_39] : memref<25x8x32xbf16, #tpu.memory_space<vmem>>, vector<1x8x32xbf16>
    %127 = vector.shape_cast %126 : vector<1x8x32xbf16> to vector<8x32xbf16>
    %128 = arith.extf %127 : vector<8x32xbf16> to vector<8x32xf32>
    %129 = vector.extract_strided_slice %0 {offsets = [0, 18], sizes = [8, 1], strides = [1, 1]} : vector<8x25xf32> to vector<8x1xf32>
    %130 = vector.broadcast %129 : vector<8x1xf32> to vector<8x32xf32>
    %131 = arith.mulf %128, %130 : vector<8x32xf32>
    %132 = arith.addf %125, %131 : vector<8x32xf32>
    %c19 = arith.constant 19 : index
    %c0_40 = arith.constant 0 : index
    %c0_41 = arith.constant 0 : index
    %133 = vector.load %arg0[%c19, %c0_40, %c0_41] : memref<25x8x32xbf16, #tpu.memory_space<vmem>>, vector<1x8x32xbf16>
    %134 = vector.shape_cast %133 : vector<1x8x32xbf16> to vector<8x32xbf16>
    %135 = arith.extf %134 : vector<8x32xbf16> to vector<8x32xf32>
    %136 = vector.extract_strided_slice %0 {offsets = [0, 19], sizes = [8, 1], strides = [1, 1]} : vector<8x25xf32> to vector<8x1xf32>
    %137 = vector.broadcast %136 : vector<8x1xf32> to vector<8x32xf32>
    %138 = arith.mulf %135, %137 : vector<8x32xf32>
    %139 = arith.addf %132, %138 : vector<8x32xf32>
    %c20 = arith.constant 20 : index
    %c0_42 = arith.constant 0 : index
    %c0_43 = arith.constant 0 : index
    %140 = vector.load %arg0[%c20, %c0_42, %c0_43] : memref<25x8x32xbf16, #tpu.memory_space<vmem>>, vector<1x8x32xbf16>
    %141 = vector.shape_cast %140 : vector<1x8x32xbf16> to vector<8x32xbf16>
    %142 = arith.extf %141 : vector<8x32xbf16> to vector<8x32xf32>
    %143 = vector.extract_strided_slice %0 {offsets = [0, 20], sizes = [8, 1], strides = [1, 1]} : vector<8x25xf32> to vector<8x1xf32>
    %144 = vector.broadcast %143 : vector<8x1xf32> to vector<8x32xf32>
    %145 = arith.mulf %142, %144 : vector<8x32xf32>
    %146 = arith.addf %139, %145 : vector<8x32xf32>
    %c21 = arith.constant 21 : index
    %c0_44 = arith.constant 0 : index
    %c0_45 = arith.constant 0 : index
    %147 = vector.load %arg0[%c21, %c0_44, %c0_45] : memref<25x8x32xbf16, #tpu.memory_space<vmem>>, vector<1x8x32xbf16>
    %148 = vector.shape_cast %147 : vector<1x8x32xbf16> to vector<8x32xbf16>
    %149 = arith.extf %148 : vector<8x32xbf16> to vector<8x32xf32>
    %150 = vector.extract_strided_slice %0 {offsets = [0, 21], sizes = [8, 1], strides = [1, 1]} : vector<8x25xf32> to vector<8x1xf32>
    %151 = vector.broadcast %150 : vector<8x1xf32> to vector<8x32xf32>
    %152 = arith.mulf %149, %151 : vector<8x32xf32>
    %153 = arith.addf %146, %152 : vector<8x32xf32>
    %c22 = arith.constant 22 : index
    %c0_46 = arith.constant 0 : index
    %c0_47 = arith.constant 0 : index
    %154 = vector.load %arg0[%c22, %c0_46, %c0_47] : memref<25x8x32xbf16, #tpu.memory_space<vmem>>, vector<1x8x32xbf16>
    %155 = vector.shape_cast %154 : vector<1x8x32xbf16> to vector<8x32xbf16>
    %156 = arith.extf %155 : vector<8x32xbf16> to vector<8x32xf32>
    %157 = vector.extract_strided_slice %0 {offsets = [0, 22], sizes = [8, 1], strides = [1, 1]} : vector<8x25xf32> to vector<8x1xf32>
    %158 = vector.broadcast %157 : vector<8x1xf32> to vector<8x32xf32>
    %159 = arith.mulf %156, %158 : vector<8x32xf32>
    %160 = arith.addf %153, %159 : vector<8x32xf32>
    %c23 = arith.constant 23 : index
    %c0_48 = arith.constant 0 : index
    %c0_49 = arith.constant 0 : index
    %161 = vector.load %arg0[%c23, %c0_48, %c0_49] : memref<25x8x32xbf16, #tpu.memory_space<vmem>>, vector<1x8x32xbf16>
    %162 = vector.shape_cast %161 : vector<1x8x32xbf16> to vector<8x32xbf16>
    %163 = arith.extf %162 : vector<8x32xbf16> to vector<8x32xf32>
    %164 = vector.extract_strided_slice %0 {offsets = [0, 23], sizes = [8, 1], strides = [1, 1]} : vector<8x25xf32> to vector<8x1xf32>
    %165 = vector.broadcast %164 : vector<8x1xf32> to vector<8x32xf32>
    %166 = arith.mulf %163, %165 : vector<8x32xf32>
    %167 = arith.addf %160, %166 : vector<8x32xf32>
    %c24 = arith.constant 24 : index
    %c0_50 = arith.constant 0 : index
    %c0_51 = arith.constant 0 : index
    %168 = vector.load %arg0[%c24, %c0_50, %c0_51] : memref<25x8x32xbf16, #tpu.memory_space<vmem>>, vector<1x8x32xbf16>
    %169 = vector.shape_cast %168 : vector<1x8x32xbf16> to vector<8x32xbf16>
    %170 = arith.extf %169 : vector<8x32xbf16> to vector<8x32xf32>
    %171 = vector.extract_strided_slice %0 {offsets = [0, 24], sizes = [8, 1], strides = [1, 1]} : vector<8x25xf32> to vector<8x1xf32>
    %172 = vector.broadcast %171 : vector<8x1xf32> to vector<8x32xf32>
    %173 = arith.mulf %170, %172 : vector<8x32xf32>
    %174 = arith.addf %167, %173 : vector<8x32xf32>
    %c0_52 = arith.constant 0 : index
    %c0_53 = arith.constant 0 : index
    %175 = vector.load %arg2[%c0_52, %c0_53] : memref<8x8xbf16, #tpu.memory_space<vmem>>, vector<8x8xbf16>
    %176 = arith.truncf %174 : vector<8x32xf32> to vector<8x32xbf16>
    %cst = arith.constant dense<0.000000e+00> : vector<8x32xf32>
    %177 = tpu.matmul %175, %176, %cst {dimension_numbers = #tpu.dot_dimension_numbers<[1], [0], [0], [1], [0, 0, 1, 1], [], []>} : vector<8x8xbf16>, vector<8x32xbf16>, vector<8x32xf32> -> vector<8x32xf32>
    %cst_54 = arith.constant dense<0.000000e+00> : vector<8xf32>
    %178 = vector.multi_reduction <add>, %177, %cst_54 [1] : vector<8x32xf32> to vector<8xf32>
    %179 = vector.shape_cast %178 : vector<8xf32> to vector<8x1xf32>
    %180 = arith.mulf %177, %177 : vector<8x32xf32>
    %cst_55 = arith.constant dense<0.000000e+00> : vector<8xf32>
    %181 = vector.multi_reduction <add>, %180, %cst_55 [1] : vector<8x32xf32> to vector<8xf32>
    %182 = vector.shape_cast %181 : vector<8xf32> to vector<8x1xf32>
    %cst_56 = arith.constant 3.125000e-02 : f32
    %183 = vector.broadcast %cst_56 : f32 to vector<8x1xf32>
    %184 = arith.mulf %179, %183 : vector<8x1xf32>
    %cst_57 = arith.constant 3.125000e-02 : f32
    %185 = vector.broadcast %cst_57 : f32 to vector<8x1xf32>
    %186 = arith.mulf %182, %185 : vector<8x1xf32>
    %187 = arith.mulf %184, %184 : vector<8x1xf32>
    %188 = arith.subf %186, %187 : vector<8x1xf32>
    %cst_58 = arith.constant 0.000000e+00 : f32
    %189 = vector.broadcast %cst_58 : f32 to vector<8x1xf32>
    %190 = arith.maximumf %188, %189 : vector<8x1xf32>
    %191 = vector.broadcast %184 : vector<8x1xf32> to vector<8x32xf32>
    %192 = arith.subf %177, %191 : vector<8x32xf32>
    %cst_59 = arith.constant 9.99999974E-6 : f32
    %193 = vector.broadcast %cst_59 : f32 to vector<8x1xf32>
    %194 = arith.addf %190, %193 : vector<8x1xf32>
    %195 = math.rsqrt %194 : vector<8x1xf32>
    %196 = vector.broadcast %195 : vector<8x1xf32> to vector<8x32xf32>
    %197 = arith.mulf %192, %196 : vector<8x32xf32>
    %c0_60 = arith.constant 0 : index
    %c0_61 = arith.constant 0 : index
    %198 = vector.load %arg3[%c0_60, %c0_61] : memref<8x32xf32, #tpu.memory_space<vmem>>, vector<8x32xf32>
    tpu.vector_store %arg3[%c0_60, %c0_61], %197 {strides = array<i32>} : memref<8x32xf32, #tpu.memory_space<vmem>>, vector<8x32xf32>,
    return
  }
}

module attributes {stable_mosaic.version = 11 : i64} {
  func.func @_dw_pw_bn_kernel(%arg0: memref<9x8x32xbf16, #tpu.memory_space<vmem>>, %arg1: memref<8x9xf32, #tpu.memory_space<vmem>>, %arg2: memref<8x8xbf16, #tpu.memory_space<vmem>>, %arg3: memref<8x32xf32, #tpu.memory_space<vmem>>) attributes {dimension_semantics = [], scalar_prefetch = 0 : i64, scratch_operands = 0 : i64, tpu.core_type = #tpu.core_type<tc>} {
    %c0 = arith.constant 0 : index
    %c0_0 = arith.constant 0 : index
    %0 = vector.load %arg1[%c0, %c0_0] : memref<8x9xf32, #tpu.memory_space<vmem>>, vector<8x9xf32>
    %c0_1 = arith.constant 0 : index
    %c0_2 = arith.constant 0 : index
    %c0_3 = arith.constant 0 : index
    %1 = vector.load %arg0[%c0_1, %c0_2, %c0_3] : memref<9x8x32xbf16, #tpu.memory_space<vmem>>, vector<1x8x32xbf16>
    %2 = vector.shape_cast %1 : vector<1x8x32xbf16> to vector<8x32xbf16>
    %3 = arith.extf %2 : vector<8x32xbf16> to vector<8x32xf32>
    %4 = vector.extract_strided_slice %0 {offsets = [0, 0], sizes = [8, 1], strides = [1, 1]} : vector<8x9xf32> to vector<8x1xf32>
    %5 = vector.broadcast %4 : vector<8x1xf32> to vector<8x32xf32>
    %6 = arith.mulf %3, %5 : vector<8x32xf32>
    %c1 = arith.constant 1 : index
    %c0_4 = arith.constant 0 : index
    %c0_5 = arith.constant 0 : index
    %7 = vector.load %arg0[%c1, %c0_4, %c0_5] : memref<9x8x32xbf16, #tpu.memory_space<vmem>>, vector<1x8x32xbf16>
    %8 = vector.shape_cast %7 : vector<1x8x32xbf16> to vector<8x32xbf16>
    %9 = arith.extf %8 : vector<8x32xbf16> to vector<8x32xf32>
    %10 = vector.extract_strided_slice %0 {offsets = [0, 1], sizes = [8, 1], strides = [1, 1]} : vector<8x9xf32> to vector<8x1xf32>
    %11 = vector.broadcast %10 : vector<8x1xf32> to vector<8x32xf32>
    %12 = arith.mulf %9, %11 : vector<8x32xf32>
    %13 = arith.addf %6, %12 : vector<8x32xf32>
    %c2 = arith.constant 2 : index
    %c0_6 = arith.constant 0 : index
    %c0_7 = arith.constant 0 : index
    %14 = vector.load %arg0[%c2, %c0_6, %c0_7] : memref<9x8x32xbf16, #tpu.memory_space<vmem>>, vector<1x8x32xbf16>
    %15 = vector.shape_cast %14 : vector<1x8x32xbf16> to vector<8x32xbf16>
    %16 = arith.extf %15 : vector<8x32xbf16> to vector<8x32xf32>
    %17 = vector.extract_strided_slice %0 {offsets = [0, 2], sizes = [8, 1], strides = [1, 1]} : vector<8x9xf32> to vector<8x1xf32>
    %18 = vector.broadcast %17 : vector<8x1xf32> to vector<8x32xf32>
    %19 = arith.mulf %16, %18 : vector<8x32xf32>
    %20 = arith.addf %13, %19 : vector<8x32xf32>
    %c3 = arith.constant 3 : index
    %c0_8 = arith.constant 0 : index
    %c0_9 = arith.constant 0 : index
    %21 = vector.load %arg0[%c3, %c0_8, %c0_9] : memref<9x8x32xbf16, #tpu.memory_space<vmem>>, vector<1x8x32xbf16>
    %22 = vector.shape_cast %21 : vector<1x8x32xbf16> to vector<8x32xbf16>
    %23 = arith.extf %22 : vector<8x32xbf16> to vector<8x32xf32>
    %24 = vector.extract_strided_slice %0 {offsets = [0, 3], sizes = [8, 1], strides = [1, 1]} : vector<8x9xf32> to vector<8x1xf32>
    %25 = vector.broadcast %24 : vector<8x1xf32> to vector<8x32xf32>
    %26 = arith.mulf %23, %25 : vector<8x32xf32>
    %27 = arith.addf %20, %26 : vector<8x32xf32>
    %c4 = arith.constant 4 : index
    %c0_10 = arith.constant 0 : index
    %c0_11 = arith.constant 0 : index
    %28 = vector.load %arg0[%c4, %c0_10, %c0_11] : memref<9x8x32xbf16, #tpu.memory_space<vmem>>, vector<1x8x32xbf16>
    %29 = vector.shape_cast %28 : vector<1x8x32xbf16> to vector<8x32xbf16>
    %30 = arith.extf %29 : vector<8x32xbf16> to vector<8x32xf32>
    %31 = vector.extract_strided_slice %0 {offsets = [0, 4], sizes = [8, 1], strides = [1, 1]} : vector<8x9xf32> to vector<8x1xf32>
    %32 = vector.broadcast %31 : vector<8x1xf32> to vector<8x32xf32>
    %33 = arith.mulf %30, %32 : vector<8x32xf32>
    %34 = arith.addf %27, %33 : vector<8x32xf32>
    %c5 = arith.constant 5 : index
    %c0_12 = arith.constant 0 : index
    %c0_13 = arith.constant 0 : index
    %35 = vector.load %arg0[%c5, %c0_12, %c0_13] : memref<9x8x32xbf16, #tpu.memory_space<vmem>>, vector<1x8x32xbf16>
    %36 = vector.shape_cast %35 : vector<1x8x32xbf16> to vector<8x32xbf16>
    %37 = arith.extf %36 : vector<8x32xbf16> to vector<8x32xf32>
    %38 = vector.extract_strided_slice %0 {offsets = [0, 5], sizes = [8, 1], strides = [1, 1]} : vector<8x9xf32> to vector<8x1xf32>
    %39 = vector.broadcast %38 : vector<8x1xf32> to vector<8x32xf32>
    %40 = arith.mulf %37, %39 : vector<8x32xf32>
    %41 = arith.addf %34, %40 : vector<8x32xf32>
    %c6 = arith.constant 6 : index
    %c0_14 = arith.constant 0 : index
    %c0_15 = arith.constant 0 : index
    %42 = vector.load %arg0[%c6, %c0_14, %c0_15] : memref<9x8x32xbf16, #tpu.memory_space<vmem>>, vector<1x8x32xbf16>
    %43 = vector.shape_cast %42 : vector<1x8x32xbf16> to vector<8x32xbf16>
    %44 = arith.extf %43 : vector<8x32xbf16> to vector<8x32xf32>
    %45 = vector.extract_strided_slice %0 {offsets = [0, 6], sizes = [8, 1], strides = [1, 1]} : vector<8x9xf32> to vector<8x1xf32>
    %46 = vector.broadcast %45 : vector<8x1xf32> to vector<8x32xf32>
    %47 = arith.mulf %44, %46 : vector<8x32xf32>
    %48 = arith.addf %41, %47 : vector<8x32xf32>
    %c7 = arith.constant 7 : index
    %c0_16 = arith.constant 0 : index
    %c0_17 = arith.constant 0 : index
    %49 = vector.load %arg0[%c7, %c0_16, %c0_17] : memref<9x8x32xbf16, #tpu.memory_space<vmem>>, vector<1x8x32xbf16>
    %50 = vector.shape_cast %49 : vector<1x8x32xbf16> to vector<8x32xbf16>
    %51 = arith.extf %50 : vector<8x32xbf16> to vector<8x32xf32>
    %52 = vector.extract_strided_slice %0 {offsets = [0, 7], sizes = [8, 1], strides = [1, 1]} : vector<8x9xf32> to vector<8x1xf32>
    %53 = vector.broadcast %52 : vector<8x1xf32> to vector<8x32xf32>
    %54 = arith.mulf %51, %53 : vector<8x32xf32>
    %55 = arith.addf %48, %54 : vector<8x32xf32>
    %c8 = arith.constant 8 : index
    %c0_18 = arith.constant 0 : index
    %c0_19 = arith.constant 0 : index
    %56 = vector.load %arg0[%c8, %c0_18, %c0_19] : memref<9x8x32xbf16, #tpu.memory_space<vmem>>, vector<1x8x32xbf16>
    %57 = vector.shape_cast %56 : vector<1x8x32xbf16> to vector<8x32xbf16>
    %58 = arith.extf %57 : vector<8x32xbf16> to vector<8x32xf32>
    %59 = vector.extract_strided_slice %0 {offsets = [0, 8], sizes = [8, 1], strides = [1, 1]} : vector<8x9xf32> to vector<8x1xf32>
    %60 = vector.broadcast %59 : vector<8x1xf32> to vector<8x32xf32>
    %61 = arith.mulf %58, %60 : vector<8x32xf32>
    %62 = arith.addf %55, %61 : vector<8x32xf32>
    %c0_20 = arith.constant 0 : index
    %c0_21 = arith.constant 0 : index
    %63 = vector.load %arg2[%c0_20, %c0_21] : memref<8x8xbf16, #tpu.memory_space<vmem>>, vector<8x8xbf16>
    %64 = arith.truncf %62 : vector<8x32xf32> to vector<8x32xbf16>
    %cst = arith.constant dense<0.000000e+00> : vector<8x32xf32>
    %65 = tpu.matmul %63, %64, %cst {dimension_numbers = #tpu.dot_dimension_numbers<[1], [0], [0], [1], [0, 0, 1, 1], [], []>} : vector<8x8xbf16>, vector<8x32xbf16>, vector<8x32xf32> -> vector<8x32xf32>
    %cst_22 = arith.constant dense<0.000000e+00> : vector<8xf32>
    %66 = vector.multi_reduction <add>, %65, %cst_22 [1] : vector<8x32xf32> to vector<8xf32>
    %67 = vector.shape_cast %66 : vector<8xf32> to vector<8x1xf32>
    %68 = arith.mulf %65, %65 : vector<8x32xf32>
    %cst_23 = arith.constant dense<0.000000e+00> : vector<8xf32>
    %69 = vector.multi_reduction <add>, %68, %cst_23 [1] : vector<8x32xf32> to vector<8xf32>
    %70 = vector.shape_cast %69 : vector<8xf32> to vector<8x1xf32>
    %cst_24 = arith.constant 3.125000e-02 : f32
    %71 = vector.broadcast %cst_24 : f32 to vector<8x1xf32>
    %72 = arith.mulf %67, %71 : vector<8x1xf32>
    %cst_25 = arith.constant 3.125000e-02 : f32
    %73 = vector.broadcast %cst_25 : f32 to vector<8x1xf32>
    %74 = arith.mulf %70, %73 : vector<8x1xf32>
    %75 = arith.mulf %72, %72 : vector<8x1xf32>
    %76 = arith.subf %74, %75 : vector<8x1xf32>
    %cst_26 = arith.constant 0.000000e+00 : f32
    %77 = vector.broadcast %cst_26 : f32 to vector<8x1xf32>
    %78 = arith.maximumf %76, %77 : vector<8x1xf32>
    %79 = vector.broadcast %72 : vector<8x1xf32> to vector<8x32xf32>
    %80 = arith.subf %65, %79 : vector<8x32xf32>
    %cst_27 = arith.constant 9.99999974E-6 : f32
    %81 = vector.broadcast %cst_27 : f32 to vector<8x1xf32>
    %82 = arith.addf %78, %81 : vector<8x1xf32>
    %83 = math.rsqrt %82 : vector<8x1xf32>
    %84 = vector.broadcast %83 : vector<8x1xf32> to vector<8x32xf32>
    %85 = arith.mulf %80, %84 : vector<8x32xf32>
    %c0_28 = arith.constant 0 : index
    %c0_29 = arith.constant 0 : index
    %86 = vector.load %arg3[%c0_28, %c0_29] : memref<8x32xf32, #tpu.memory_space<vmem>>, vector<8x32xf32>
    tpu.vector_store %arg3[%c0_28, %c0_29], %85 {strides = array<i32>} : memref<8x32xf32, #tpu.memory_space<vmem>>, vector<8x32xf32>,
    return
  }
}

module attributes {stable_mosaic.version = 11 : i64} {
  func.func @_avgpool_bn_kernel(%arg0: memref<9x8x32xf32, #tpu.memory_space<vmem>>, %arg1: memref<1x32xf32, #tpu.memory_space<vmem>>, %arg2: memref<8x32xf32, #tpu.memory_space<vmem>>) attributes {dimension_semantics = [], scalar_prefetch = 0 : i64, scratch_operands = 0 : i64, tpu.core_type = #tpu.core_type<tc>} {
    %c0 = arith.constant 0 : index
    %c0_0 = arith.constant 0 : index
    %c0_1 = arith.constant 0 : index
    %0 = vector.load %arg0[%c0, %c0_0, %c0_1] : memref<9x8x32xf32, #tpu.memory_space<vmem>>, vector<1x8x32xf32>
    %1 = vector.shape_cast %0 : vector<1x8x32xf32> to vector<8x32xf32>
    %c1 = arith.constant 1 : index
    %c0_2 = arith.constant 0 : index
    %c0_3 = arith.constant 0 : index
    %2 = vector.load %arg0[%c1, %c0_2, %c0_3] : memref<9x8x32xf32, #tpu.memory_space<vmem>>, vector<1x8x32xf32>
    %3 = vector.shape_cast %2 : vector<1x8x32xf32> to vector<8x32xf32>
    %4 = arith.addf %1, %3 : vector<8x32xf32>
    %c2 = arith.constant 2 : index
    %c0_4 = arith.constant 0 : index
    %c0_5 = arith.constant 0 : index
    %5 = vector.load %arg0[%c2, %c0_4, %c0_5] : memref<9x8x32xf32, #tpu.memory_space<vmem>>, vector<1x8x32xf32>
    %6 = vector.shape_cast %5 : vector<1x8x32xf32> to vector<8x32xf32>
    %7 = arith.addf %4, %6 : vector<8x32xf32>
    %c3 = arith.constant 3 : index
    %c0_6 = arith.constant 0 : index
    %c0_7 = arith.constant 0 : index
    %8 = vector.load %arg0[%c3, %c0_6, %c0_7] : memref<9x8x32xf32, #tpu.memory_space<vmem>>, vector<1x8x32xf32>
    %9 = vector.shape_cast %8 : vector<1x8x32xf32> to vector<8x32xf32>
    %10 = arith.addf %7, %9 : vector<8x32xf32>
    %c4 = arith.constant 4 : index
    %c0_8 = arith.constant 0 : index
    %c0_9 = arith.constant 0 : index
    %11 = vector.load %arg0[%c4, %c0_8, %c0_9] : memref<9x8x32xf32, #tpu.memory_space<vmem>>, vector<1x8x32xf32>
    %12 = vector.shape_cast %11 : vector<1x8x32xf32> to vector<8x32xf32>
    %13 = arith.addf %10, %12 : vector<8x32xf32>
    %c5 = arith.constant 5 : index
    %c0_10 = arith.constant 0 : index
    %c0_11 = arith.constant 0 : index
    %14 = vector.load %arg0[%c5, %c0_10, %c0_11] : memref<9x8x32xf32, #tpu.memory_space<vmem>>, vector<1x8x32xf32>
    %15 = vector.shape_cast %14 : vector<1x8x32xf32> to vector<8x32xf32>
    %16 = arith.addf %13, %15 : vector<8x32xf32>
    %c6 = arith.constant 6 : index
    %c0_12 = arith.constant 0 : index
    %c0_13 = arith.constant 0 : index
    %17 = vector.load %arg0[%c6, %c0_12, %c0_13] : memref<9x8x32xf32, #tpu.memory_space<vmem>>, vector<1x8x32xf32>
    %18 = vector.shape_cast %17 : vector<1x8x32xf32> to vector<8x32xf32>
    %19 = arith.addf %16, %18 : vector<8x32xf32>
    %c7 = arith.constant 7 : index
    %c0_14 = arith.constant 0 : index
    %c0_15 = arith.constant 0 : index
    %20 = vector.load %arg0[%c7, %c0_14, %c0_15] : memref<9x8x32xf32, #tpu.memory_space<vmem>>, vector<1x8x32xf32>
    %21 = vector.shape_cast %20 : vector<1x8x32xf32> to vector<8x32xf32>
    %22 = arith.addf %19, %21 : vector<8x32xf32>
    %c8 = arith.constant 8 : index
    %c0_16 = arith.constant 0 : index
    %c0_17 = arith.constant 0 : index
    %23 = vector.load %arg0[%c8, %c0_16, %c0_17] : memref<9x8x32xf32, #tpu.memory_space<vmem>>, vector<1x8x32xf32>
    %24 = vector.shape_cast %23 : vector<1x8x32xf32> to vector<8x32xf32>
    %25 = arith.addf %22, %24 : vector<8x32xf32>
    %c0_18 = arith.constant 0 : index
    %c0_19 = arith.constant 0 : index
    %26 = vector.load %arg1[%c0_18, %c0_19] : memref<1x32xf32, #tpu.memory_space<vmem>>, vector<1x32xf32>
    %27 = vector.broadcast %26 : vector<1x32xf32> to vector<8x32xf32>
    %28 = arith.mulf %25, %27 : vector<8x32xf32>
    %cst = arith.constant dense<0.000000e+00> : vector<8xf32>
    %29 = vector.multi_reduction <add>, %28, %cst [1] : vector<8x32xf32> to vector<8xf32>
    %30 = vector.shape_cast %29 : vector<8xf32> to vector<8x1xf32>
    %31 = arith.mulf %28, %28 : vector<8x32xf32>
    %cst_20 = arith.constant dense<0.000000e+00> : vector<8xf32>
    %32 = vector.multi_reduction <add>, %31, %cst_20 [1] : vector<8x32xf32> to vector<8xf32>
    %33 = vector.shape_cast %32 : vector<8xf32> to vector<8x1xf32>
    %cst_21 = arith.constant 3.125000e-02 : f32
    %34 = vector.broadcast %cst_21 : f32 to vector<8x1xf32>
    %35 = arith.mulf %30, %34 : vector<8x1xf32>
    %cst_22 = arith.constant 3.125000e-02 : f32
    %36 = vector.broadcast %cst_22 : f32 to vector<8x1xf32>
    %37 = arith.mulf %33, %36 : vector<8x1xf32>
    %38 = arith.mulf %35, %35 : vector<8x1xf32>
    %39 = arith.subf %37, %38 : vector<8x1xf32>
    %cst_23 = arith.constant 0.000000e+00 : f32
    %40 = vector.broadcast %cst_23 : f32 to vector<8x1xf32>
    %41 = arith.maximumf %39, %40 : vector<8x1xf32>
    %42 = vector.broadcast %35 : vector<8x1xf32> to vector<8x32xf32>
    %43 = arith.subf %28, %42 : vector<8x32xf32>
    %cst_24 = arith.constant 9.99999974E-6 : f32
    %44 = vector.broadcast %cst_24 : f32 to vector<8x1xf32>
    %45 = arith.addf %41, %44 : vector<8x1xf32>
    %46 = math.rsqrt %45 : vector<8x1xf32>
    %47 = vector.broadcast %46 : vector<8x1xf32> to vector<8x32xf32>
    %48 = arith.mulf %43, %47 : vector<8x32xf32>
    %c0_25 = arith.constant 0 : index
    %c0_26 = arith.constant 0 : index
    %49 = vector.load %arg2[%c0_25, %c0_26] : memref<8x32xf32, #tpu.memory_space<vmem>>, vector<8x32xf32>
    tpu.vector_store %arg2[%c0_25, %c0_26], %48 {strides = array<i32>} : memref<8x32xf32, #tpu.memory_space<vmem>>, vector<8x32xf32>,
    return
  }
}

module attributes {stable_mosaic.version = 11 : i64} {
  func.func @_maxpool_bn_kernel(%arg0: memref<9x8x32xf32, #tpu.memory_space<vmem>>, %arg1: memref<8x32xf32, #tpu.memory_space<vmem>>) attributes {dimension_semantics = [], scalar_prefetch = 0 : i64, scratch_operands = 0 : i64, tpu.core_type = #tpu.core_type<tc>} {
    %c0 = arith.constant 0 : index
    %c0_0 = arith.constant 0 : index
    %c0_1 = arith.constant 0 : index
    %0 = vector.load %arg0[%c0, %c0_0, %c0_1] : memref<9x8x32xf32, #tpu.memory_space<vmem>>, vector<1x8x32xf32>
    %1 = vector.shape_cast %0 : vector<1x8x32xf32> to vector<8x32xf32>
    %c1 = arith.constant 1 : index
    %c0_2 = arith.constant 0 : index
    %c0_3 = arith.constant 0 : index
    %2 = vector.load %arg0[%c1, %c0_2, %c0_3] : memref<9x8x32xf32, #tpu.memory_space<vmem>>, vector<1x8x32xf32>
    %3 = vector.shape_cast %2 : vector<1x8x32xf32> to vector<8x32xf32>
    %4 = arith.maximumf %1, %3 : vector<8x32xf32>
    %c2 = arith.constant 2 : index
    %c0_4 = arith.constant 0 : index
    %c0_5 = arith.constant 0 : index
    %5 = vector.load %arg0[%c2, %c0_4, %c0_5] : memref<9x8x32xf32, #tpu.memory_space<vmem>>, vector<1x8x32xf32>
    %6 = vector.shape_cast %5 : vector<1x8x32xf32> to vector<8x32xf32>
    %7 = arith.maximumf %4, %6 : vector<8x32xf32>
    %c3 = arith.constant 3 : index
    %c0_6 = arith.constant 0 : index
    %c0_7 = arith.constant 0 : index
    %8 = vector.load %arg0[%c3, %c0_6, %c0_7] : memref<9x8x32xf32, #tpu.memory_space<vmem>>, vector<1x8x32xf32>
    %9 = vector.shape_cast %8 : vector<1x8x32xf32> to vector<8x32xf32>
    %10 = arith.maximumf %7, %9 : vector<8x32xf32>
    %c4 = arith.constant 4 : index
    %c0_8 = arith.constant 0 : index
    %c0_9 = arith.constant 0 : index
    %11 = vector.load %arg0[%c4, %c0_8, %c0_9] : memref<9x8x32xf32, #tpu.memory_space<vmem>>, vector<1x8x32xf32>
    %12 = vector.shape_cast %11 : vector<1x8x32xf32> to vector<8x32xf32>
    %13 = arith.maximumf %10, %12 : vector<8x32xf32>
    %c5 = arith.constant 5 : index
    %c0_10 = arith.constant 0 : index
    %c0_11 = arith.constant 0 : index
    %14 = vector.load %arg0[%c5, %c0_10, %c0_11] : memref<9x8x32xf32, #tpu.memory_space<vmem>>, vector<1x8x32xf32>
    %15 = vector.shape_cast %14 : vector<1x8x32xf32> to vector<8x32xf32>
    %16 = arith.maximumf %13, %15 : vector<8x32xf32>
    %c6 = arith.constant 6 : index
    %c0_12 = arith.constant 0 : index
    %c0_13 = arith.constant 0 : index
    %17 = vector.load %arg0[%c6, %c0_12, %c0_13] : memref<9x8x32xf32, #tpu.memory_space<vmem>>, vector<1x8x32xf32>
    %18 = vector.shape_cast %17 : vector<1x8x32xf32> to vector<8x32xf32>
    %19 = arith.maximumf %16, %18 : vector<8x32xf32>
    %c7 = arith.constant 7 : index
    %c0_14 = arith.constant 0 : index
    %c0_15 = arith.constant 0 : index
    %20 = vector.load %arg0[%c7, %c0_14, %c0_15] : memref<9x8x32xf32, #tpu.memory_space<vmem>>, vector<1x8x32xf32>
    %21 = vector.shape_cast %20 : vector<1x8x32xf32> to vector<8x32xf32>
    %22 = arith.maximumf %19, %21 : vector<8x32xf32>
    %c8 = arith.constant 8 : index
    %c0_16 = arith.constant 0 : index
    %c0_17 = arith.constant 0 : index
    %23 = vector.load %arg0[%c8, %c0_16, %c0_17] : memref<9x8x32xf32, #tpu.memory_space<vmem>>, vector<1x8x32xf32>
    %24 = vector.shape_cast %23 : vector<1x8x32xf32> to vector<8x32xf32>
    %25 = arith.maximumf %22, %24 : vector<8x32xf32>
    %cst = arith.constant dense<0.000000e+00> : vector<8xf32>
    %26 = vector.multi_reduction <add>, %25, %cst [1] : vector<8x32xf32> to vector<8xf32>
    %27 = vector.shape_cast %26 : vector<8xf32> to vector<8x1xf32>
    %28 = arith.mulf %25, %25 : vector<8x32xf32>
    %cst_18 = arith.constant dense<0.000000e+00> : vector<8xf32>
    %29 = vector.multi_reduction <add>, %28, %cst_18 [1] : vector<8x32xf32> to vector<8xf32>
    %30 = vector.shape_cast %29 : vector<8xf32> to vector<8x1xf32>
    %cst_19 = arith.constant 3.125000e-02 : f32
    %31 = vector.broadcast %cst_19 : f32 to vector<8x1xf32>
    %32 = arith.mulf %27, %31 : vector<8x1xf32>
    %cst_20 = arith.constant 3.125000e-02 : f32
    %33 = vector.broadcast %cst_20 : f32 to vector<8x1xf32>
    %34 = arith.mulf %30, %33 : vector<8x1xf32>
    %35 = arith.mulf %32, %32 : vector<8x1xf32>
    %36 = arith.subf %34, %35 : vector<8x1xf32>
    %cst_21 = arith.constant 0.000000e+00 : f32
    %37 = vector.broadcast %cst_21 : f32 to vector<8x1xf32>
    %38 = arith.maximumf %36, %37 : vector<8x1xf32>
    %39 = vector.broadcast %32 : vector<8x1xf32> to vector<8x32xf32>
    %40 = arith.subf %25, %39 : vector<8x32xf32>
    %cst_22 = arith.constant 9.99999974E-6 : f32
    %41 = vector.broadcast %cst_22 : f32 to vector<8x1xf32>
    %42 = arith.addf %38, %41 : vector<8x1xf32>
    %43 = math.rsqrt %42 : vector<8x1xf32>
    %44 = vector.broadcast %43 : vector<8x1xf32> to vector<8x32xf32>
    %45 = arith.mulf %40, %44 : vector<8x32xf32>
    %c0_23 = arith.constant 0 : index
    %c0_24 = arith.constant 0 : index
    %46 = vector.load %arg1[%c0_23, %c0_24] : memref<8x32xf32, #tpu.memory_space<vmem>>, vector<8x32xf32>
    tpu.vector_store %arg1[%c0_23, %c0_24], %45 {strides = array<i32>} : memref<8x32xf32, #tpu.memory_space<vmem>>, vector<8x32xf32>,
    return
  }
}

module attributes {stable_mosaic.version = 11 : i64} {
  func.func @_fact_reduce_kernel(%arg0: memref<8x32xbf16, #tpu.memory_space<vmem>>, %arg1: memref<8x32xbf16, #tpu.memory_space<vmem>>, %arg2: memref<4x8xbf16, #tpu.memory_space<vmem>>, %arg3: memref<4x8xbf16, #tpu.memory_space<vmem>>, %arg4: memref<2x4x32xf32, #tpu.memory_space<vmem>>) attributes {dimension_semantics = [], scalar_prefetch = 0 : i64, scratch_operands = 0 : i64, tpu.core_type = #tpu.core_type<tc>} {
    %c0 = arith.constant 0 : index
    %c0_0 = arith.constant 0 : index
    %0 = vector.load %arg2[%c0, %c0_0] : memref<4x8xbf16, #tpu.memory_space<vmem>>, vector<4x8xbf16>
    %c0_1 = arith.constant 0 : index
    %c0_2 = arith.constant 0 : index
    %1 = vector.load %arg0[%c0_1, %c0_2] : memref<8x32xbf16, #tpu.memory_space<vmem>>, vector<8x32xbf16>
    %cst = arith.constant dense<0.000000e+00> : vector<4x32xf32>
    %2 = tpu.matmul %0, %1, %cst {dimension_numbers = #tpu.dot_dimension_numbers<[1], [0], [0], [1], [0, 0, 1, 1], [], []>} : vector<4x8xbf16>, vector<8x32xbf16>, vector<4x32xf32> -> vector<4x32xf32>
    %cst_3 = arith.constant dense<0.000000e+00> : vector<4xf32>
    %3 = vector.multi_reduction <add>, %2, %cst_3 [1] : vector<4x32xf32> to vector<4xf32>
    %4 = vector.shape_cast %3 : vector<4xf32> to vector<4x1xf32>
    %5 = arith.mulf %2, %2 : vector<4x32xf32>
    %cst_4 = arith.constant dense<0.000000e+00> : vector<4xf32>
    %6 = vector.multi_reduction <add>, %5, %cst_4 [1] : vector<4x32xf32> to vector<4xf32>
    %7 = vector.shape_cast %6 : vector<4xf32> to vector<4x1xf32>
    %cst_5 = arith.constant 3.125000e-02 : f32
    %8 = vector.broadcast %cst_5 : f32 to vector<4x1xf32>
    %9 = arith.mulf %4, %8 : vector<4x1xf32>
    %cst_6 = arith.constant 3.125000e-02 : f32
    %10 = vector.broadcast %cst_6 : f32 to vector<4x1xf32>
    %11 = arith.mulf %7, %10 : vector<4x1xf32>
    %12 = arith.mulf %9, %9 : vector<4x1xf32>
    %13 = arith.subf %11, %12 : vector<4x1xf32>
    %cst_7 = arith.constant 0.000000e+00 : f32
    %14 = vector.broadcast %cst_7 : f32 to vector<4x1xf32>
    %15 = arith.maximumf %13, %14 : vector<4x1xf32>
    %16 = vector.broadcast %9 : vector<4x1xf32> to vector<4x32xf32>
    %17 = arith.subf %2, %16 : vector<4x32xf32>
    %cst_8 = arith.constant 9.99999974E-6 : f32
    %18 = vector.broadcast %cst_8 : f32 to vector<4x1xf32>
    %19 = arith.addf %15, %18 : vector<4x1xf32>
    %20 = math.rsqrt %19 : vector<4x1xf32>
    %21 = vector.broadcast %20 : vector<4x1xf32> to vector<4x32xf32>
    %22 = arith.mulf %17, %21 : vector<4x32xf32>
    %c0_9 = arith.constant 0 : index
    %c0_10 = arith.constant 0 : index
    %c0_11 = arith.constant 0 : index
    %23 = vector.load %arg4[%c0_9, %c0_10, %c0_11] : memref<2x4x32xf32, #tpu.memory_space<vmem>>, vector<1x4x32xf32>
    %24 = vector.shape_cast %23 : vector<1x4x32xf32> to vector<4x32xf32>
    %25 = vector.shape_cast %22 : vector<4x32xf32> to vector<1x4x32xf32>
    tpu.vector_store %arg4[%c0_9, %c0_10, %c0_11], %25 {strides = array<i32>} : memref<2x4x32xf32, #tpu.memory_space<vmem>>, vector<1x4x32xf32>,
    %c0_12 = arith.constant 0 : index
    %c0_13 = arith.constant 0 : index
    %26 = vector.load %arg3[%c0_12, %c0_13] : memref<4x8xbf16, #tpu.memory_space<vmem>>, vector<4x8xbf16>
    %c0_14 = arith.constant 0 : index
    %c0_15 = arith.constant 0 : index
    %27 = vector.load %arg1[%c0_14, %c0_15] : memref<8x32xbf16, #tpu.memory_space<vmem>>, vector<8x32xbf16>
    %cst_16 = arith.constant dense<0.000000e+00> : vector<4x32xf32>
    %28 = tpu.matmul %26, %27, %cst_16 {dimension_numbers = #tpu.dot_dimension_numbers<[1], [0], [0], [1], [0, 0, 1, 1], [], []>} : vector<4x8xbf16>, vector<8x32xbf16>, vector<4x32xf32> -> vector<4x32xf32>
    %cst_17 = arith.constant dense<0.000000e+00> : vector<4xf32>
    %29 = vector.multi_reduction <add>, %28, %cst_17 [1] : vector<4x32xf32> to vector<4xf32>
    %30 = vector.shape_cast %29 : vector<4xf32> to vector<4x1xf32>
    %31 = arith.mulf %28, %28 : vector<4x32xf32>
    %cst_18 = arith.constant dense<0.000000e+00> : vector<4xf32>
    %32 = vector.multi_reduction <add>, %31, %cst_18 [1] : vector<4x32xf32> to vector<4xf32>
    %33 = vector.shape_cast %32 : vector<4xf32> to vector<4x1xf32>
    %cst_19 = arith.constant 3.125000e-02 : f32
    %34 = vector.broadcast %cst_19 : f32 to vector<4x1xf32>
    %35 = arith.mulf %30, %34 : vector<4x1xf32>
    %cst_20 = arith.constant 3.125000e-02 : f32
    %36 = vector.broadcast %cst_20 : f32 to vector<4x1xf32>
    %37 = arith.mulf %33, %36 : vector<4x1xf32>
    %38 = arith.mulf %35, %35 : vector<4x1xf32>
    %39 = arith.subf %37, %38 : vector<4x1xf32>
    %cst_21 = arith.constant 0.000000e+00 : f32
    %40 = vector.broadcast %cst_21 : f32 to vector<4x1xf32>
    %41 = arith.maximumf %39, %40 : vector<4x1xf32>
    %42 = vector.broadcast %35 : vector<4x1xf32> to vector<4x32xf32>
    %43 = arith.subf %28, %42 : vector<4x32xf32>
    %cst_22 = arith.constant 9.99999974E-6 : f32
    %44 = vector.broadcast %cst_22 : f32 to vector<4x1xf32>
    %45 = arith.addf %41, %44 : vector<4x1xf32>
    %46 = math.rsqrt %45 : vector<4x1xf32>
    %47 = vector.broadcast %46 : vector<4x1xf32> to vector<4x32xf32>
    %48 = arith.mulf %43, %47 : vector<4x32xf32>
    %c1 = arith.constant 1 : index
    %c0_23 = arith.constant 0 : index
    %c0_24 = arith.constant 0 : index
    %49 = vector.load %arg4[%c1, %c0_23, %c0_24] : memref<2x4x32xf32, #tpu.memory_space<vmem>>, vector<1x4x32xf32>
    %50 = vector.shape_cast %49 : vector<1x4x32xf32> to vector<4x32xf32>
    %51 = vector.shape_cast %48 : vector<4x32xf32> to vector<1x4x32xf32>
    tpu.vector_store %arg4[%c1, %c0_23, %c0_24], %51 {strides = array<i32>} : memref<2x4x32xf32, #tpu.memory_space<vmem>>, vector<1x4x32xf32>,
    return
  }
}

module attributes {stable_mosaic.version = 11 : i64} {
  func.func @_conv_bn_kernel(%arg0: memref<32x32xbf16, #tpu.memory_space<vmem>>, %arg1: memref<16x32xbf16, #tpu.memory_space<vmem>>, %arg2: memref<16x32xf32, #tpu.memory_space<vmem>>) attributes {dimension_semantics = [], scalar_prefetch = 0 : i64, scratch_operands = 0 : i64, tpu.core_type = #tpu.core_type<tc>} {
    %c0 = arith.constant 0 : index
    %c0_0 = arith.constant 0 : index
    %0 = vector.load %arg1[%c0, %c0_0] : memref<16x32xbf16, #tpu.memory_space<vmem>>, vector<16x32xbf16>
    %c0_1 = arith.constant 0 : index
    %c0_2 = arith.constant 0 : index
    %1 = vector.load %arg0[%c0_1, %c0_2] : memref<32x32xbf16, #tpu.memory_space<vmem>>, vector<32x32xbf16>
    %cst = arith.constant dense<0.000000e+00> : vector<16x32xf32>
    %2 = tpu.matmul %0, %1, %cst {dimension_numbers = #tpu.dot_dimension_numbers<[1], [0], [0], [1], [0, 0, 1, 1], [], []>} : vector<16x32xbf16>, vector<32x32xbf16>, vector<16x32xf32> -> vector<16x32xf32>
    %cst_3 = arith.constant dense<0.000000e+00> : vector<16xf32>
    %3 = vector.multi_reduction <add>, %2, %cst_3 [1] : vector<16x32xf32> to vector<16xf32>
    %4 = vector.shape_cast %3 : vector<16xf32> to vector<16x1xf32>
    %5 = arith.mulf %2, %2 : vector<16x32xf32>
    %cst_4 = arith.constant dense<0.000000e+00> : vector<16xf32>
    %6 = vector.multi_reduction <add>, %5, %cst_4 [1] : vector<16x32xf32> to vector<16xf32>
    %7 = vector.shape_cast %6 : vector<16xf32> to vector<16x1xf32>
    %cst_5 = arith.constant 3.125000e-02 : f32
    %8 = vector.broadcast %cst_5 : f32 to vector<16x1xf32>
    %9 = arith.mulf %4, %8 : vector<16x1xf32>
    %cst_6 = arith.constant 3.125000e-02 : f32
    %10 = vector.broadcast %cst_6 : f32 to vector<16x1xf32>
    %11 = arith.mulf %7, %10 : vector<16x1xf32>
    %12 = arith.mulf %9, %9 : vector<16x1xf32>
    %13 = arith.subf %11, %12 : vector<16x1xf32>
    %cst_7 = arith.constant 0.000000e+00 : f32
    %14 = vector.broadcast %cst_7 : f32 to vector<16x1xf32>
    %15 = arith.maximumf %13, %14 : vector<16x1xf32>
    %16 = vector.broadcast %9 : vector<16x1xf32> to vector<16x32xf32>
    %17 = arith.subf %2, %16 : vector<16x32xf32>
    %cst_8 = arith.constant 9.99999974E-6 : f32
    %18 = vector.broadcast %cst_8 : f32 to vector<16x1xf32>
    %19 = arith.addf %15, %18 : vector<16x1xf32>
    %20 = math.rsqrt %19 : vector<16x1xf32>
    %21 = vector.broadcast %20 : vector<16x1xf32> to vector<16x32xf32>
    %22 = arith.mulf %17, %21 : vector<16x32xf32>
    %c0_9 = arith.constant 0 : index
    %c0_10 = arith.constant 0 : index
    %23 = vector.load %arg2[%c0_9, %c0_10] : memref<16x32xf32, #tpu.memory_space<vmem>>, vector<16x32xf32>
    tpu.vector_store %arg2[%c0_9, %c0_10], %22 {strides = array<i32>} : memref<16x32xf32, #tpu.memory_space<vmem>>, vector<16x32xf32>,
    return
  }
}

module attributes {stable_mosaic.version = 11 : i64} {
  func.func @_dw_pw_bn_kernel(%arg0: memref<9x16x8xbf16, #tpu.memory_space<vmem>>, %arg1: memref<16x9xf32, #tpu.memory_space<vmem>>, %arg2: memref<16x16xbf16, #tpu.memory_space<vmem>>, %arg3: memref<16x8xf32, #tpu.memory_space<vmem>>) attributes {dimension_semantics = [], scalar_prefetch = 0 : i64, scratch_operands = 0 : i64, tpu.core_type = #tpu.core_type<tc>} {
    %c0 = arith.constant 0 : index
    %c0_0 = arith.constant 0 : index
    %0 = vector.load %arg1[%c0, %c0_0] : memref<16x9xf32, #tpu.memory_space<vmem>>, vector<16x9xf32>
    %c0_1 = arith.constant 0 : index
    %c0_2 = arith.constant 0 : index
    %c0_3 = arith.constant 0 : index
    %1 = vector.load %arg0[%c0_1, %c0_2, %c0_3] : memref<9x16x8xbf16, #tpu.memory_space<vmem>>, vector<1x16x8xbf16>
    %2 = vector.shape_cast %1 : vector<1x16x8xbf16> to vector<16x8xbf16>
    %3 = arith.extf %2 : vector<16x8xbf16> to vector<16x8xf32>
    %4 = vector.extract_strided_slice %0 {offsets = [0, 0], sizes = [16, 1], strides = [1, 1]} : vector<16x9xf32> to vector<16x1xf32>
    %5 = vector.broadcast %4 : vector<16x1xf32> to vector<16x8xf32>
    %6 = arith.mulf %3, %5 : vector<16x8xf32>
    %c1 = arith.constant 1 : index
    %c0_4 = arith.constant 0 : index
    %c0_5 = arith.constant 0 : index
    %7 = vector.load %arg0[%c1, %c0_4, %c0_5] : memref<9x16x8xbf16, #tpu.memory_space<vmem>>, vector<1x16x8xbf16>
    %8 = vector.shape_cast %7 : vector<1x16x8xbf16> to vector<16x8xbf16>
    %9 = arith.extf %8 : vector<16x8xbf16> to vector<16x8xf32>
    %10 = vector.extract_strided_slice %0 {offsets = [0, 1], sizes = [16, 1], strides = [1, 1]} : vector<16x9xf32> to vector<16x1xf32>
    %11 = vector.broadcast %10 : vector<16x1xf32> to vector<16x8xf32>
    %12 = arith.mulf %9, %11 : vector<16x8xf32>
    %13 = arith.addf %6, %12 : vector<16x8xf32>
    %c2 = arith.constant 2 : index
    %c0_6 = arith.constant 0 : index
    %c0_7 = arith.constant 0 : index
    %14 = vector.load %arg0[%c2, %c0_6, %c0_7] : memref<9x16x8xbf16, #tpu.memory_space<vmem>>, vector<1x16x8xbf16>
    %15 = vector.shape_cast %14 : vector<1x16x8xbf16> to vector<16x8xbf16>
    %16 = arith.extf %15 : vector<16x8xbf16> to vector<16x8xf32>
    %17 = vector.extract_strided_slice %0 {offsets = [0, 2], sizes = [16, 1], strides = [1, 1]} : vector<16x9xf32> to vector<16x1xf32>
    %18 = vector.broadcast %17 : vector<16x1xf32> to vector<16x8xf32>
    %19 = arith.mulf %16, %18 : vector<16x8xf32>
    %20 = arith.addf %13, %19 : vector<16x8xf32>
    %c3 = arith.constant 3 : index
    %c0_8 = arith.constant 0 : index
    %c0_9 = arith.constant 0 : index
    %21 = vector.load %arg0[%c3, %c0_8, %c0_9] : memref<9x16x8xbf16, #tpu.memory_space<vmem>>, vector<1x16x8xbf16>
    %22 = vector.shape_cast %21 : vector<1x16x8xbf16> to vector<16x8xbf16>
    %23 = arith.extf %22 : vector<16x8xbf16> to vector<16x8xf32>
    %24 = vector.extract_strided_slice %0 {offsets = [0, 3], sizes = [16, 1], strides = [1, 1]} : vector<16x9xf32> to vector<16x1xf32>
    %25 = vector.broadcast %24 : vector<16x1xf32> to vector<16x8xf32>
    %26 = arith.mulf %23, %25 : vector<16x8xf32>
    %27 = arith.addf %20, %26 : vector<16x8xf32>
    %c4 = arith.constant 4 : index
    %c0_10 = arith.constant 0 : index
    %c0_11 = arith.constant 0 : index
    %28 = vector.load %arg0[%c4, %c0_10, %c0_11] : memref<9x16x8xbf16, #tpu.memory_space<vmem>>, vector<1x16x8xbf16>
    %29 = vector.shape_cast %28 : vector<1x16x8xbf16> to vector<16x8xbf16>
    %30 = arith.extf %29 : vector<16x8xbf16> to vector<16x8xf32>
    %31 = vector.extract_strided_slice %0 {offsets = [0, 4], sizes = [16, 1], strides = [1, 1]} : vector<16x9xf32> to vector<16x1xf32>
    %32 = vector.broadcast %31 : vector<16x1xf32> to vector<16x8xf32>
    %33 = arith.mulf %30, %32 : vector<16x8xf32>
    %34 = arith.addf %27, %33 : vector<16x8xf32>
    %c5 = arith.constant 5 : index
    %c0_12 = arith.constant 0 : index
    %c0_13 = arith.constant 0 : index
    %35 = vector.load %arg0[%c5, %c0_12, %c0_13] : memref<9x16x8xbf16, #tpu.memory_space<vmem>>, vector<1x16x8xbf16>
    %36 = vector.shape_cast %35 : vector<1x16x8xbf16> to vector<16x8xbf16>
    %37 = arith.extf %36 : vector<16x8xbf16> to vector<16x8xf32>
    %38 = vector.extract_strided_slice %0 {offsets = [0, 5], sizes = [16, 1], strides = [1, 1]} : vector<16x9xf32> to vector<16x1xf32>
    %39 = vector.broadcast %38 : vector<16x1xf32> to vector<16x8xf32>
    %40 = arith.mulf %37, %39 : vector<16x8xf32>
    %41 = arith.addf %34, %40 : vector<16x8xf32>
    %c6 = arith.constant 6 : index
    %c0_14 = arith.constant 0 : index
    %c0_15 = arith.constant 0 : index
    %42 = vector.load %arg0[%c6, %c0_14, %c0_15] : memref<9x16x8xbf16, #tpu.memory_space<vmem>>, vector<1x16x8xbf16>
    %43 = vector.shape_cast %42 : vector<1x16x8xbf16> to vector<16x8xbf16>
    %44 = arith.extf %43 : vector<16x8xbf16> to vector<16x8xf32>
    %45 = vector.extract_strided_slice %0 {offsets = [0, 6], sizes = [16, 1], strides = [1, 1]} : vector<16x9xf32> to vector<16x1xf32>
    %46 = vector.broadcast %45 : vector<16x1xf32> to vector<16x8xf32>
    %47 = arith.mulf %44, %46 : vector<16x8xf32>
    %48 = arith.addf %41, %47 : vector<16x8xf32>
    %c7 = arith.constant 7 : index
    %c0_16 = arith.constant 0 : index
    %c0_17 = arith.constant 0 : index
    %49 = vector.load %arg0[%c7, %c0_16, %c0_17] : memref<9x16x8xbf16, #tpu.memory_space<vmem>>, vector<1x16x8xbf16>
    %50 = vector.shape_cast %49 : vector<1x16x8xbf16> to vector<16x8xbf16>
    %51 = arith.extf %50 : vector<16x8xbf16> to vector<16x8xf32>
    %52 = vector.extract_strided_slice %0 {offsets = [0, 7], sizes = [16, 1], strides = [1, 1]} : vector<16x9xf32> to vector<16x1xf32>
    %53 = vector.broadcast %52 : vector<16x1xf32> to vector<16x8xf32>
    %54 = arith.mulf %51, %53 : vector<16x8xf32>
    %55 = arith.addf %48, %54 : vector<16x8xf32>
    %c8 = arith.constant 8 : index
    %c0_18 = arith.constant 0 : index
    %c0_19 = arith.constant 0 : index
    %56 = vector.load %arg0[%c8, %c0_18, %c0_19] : memref<9x16x8xbf16, #tpu.memory_space<vmem>>, vector<1x16x8xbf16>
    %57 = vector.shape_cast %56 : vector<1x16x8xbf16> to vector<16x8xbf16>
    %58 = arith.extf %57 : vector<16x8xbf16> to vector<16x8xf32>
    %59 = vector.extract_strided_slice %0 {offsets = [0, 8], sizes = [16, 1], strides = [1, 1]} : vector<16x9xf32> to vector<16x1xf32>
    %60 = vector.broadcast %59 : vector<16x1xf32> to vector<16x8xf32>
    %61 = arith.mulf %58, %60 : vector<16x8xf32>
    %62 = arith.addf %55, %61 : vector<16x8xf32>
    %c0_20 = arith.constant 0 : index
    %c0_21 = arith.constant 0 : index
    %63 = vector.load %arg2[%c0_20, %c0_21] : memref<16x16xbf16, #tpu.memory_space<vmem>>, vector<16x16xbf16>
    %64 = arith.truncf %62 : vector<16x8xf32> to vector<16x8xbf16>
    %cst = arith.constant dense<0.000000e+00> : vector<16x8xf32>
    %65 = tpu.matmul %63, %64, %cst {dimension_numbers = #tpu.dot_dimension_numbers<[1], [0], [0], [1], [0, 0, 1, 1], [], []>} : vector<16x16xbf16>, vector<16x8xbf16>, vector<16x8xf32> -> vector<16x8xf32>
    %cst_22 = arith.constant dense<0.000000e+00> : vector<16xf32>
    %66 = vector.multi_reduction <add>, %65, %cst_22 [1] : vector<16x8xf32> to vector<16xf32>
    %67 = vector.shape_cast %66 : vector<16xf32> to vector<16x1xf32>
    %68 = arith.mulf %65, %65 : vector<16x8xf32>
    %cst_23 = arith.constant dense<0.000000e+00> : vector<16xf32>
    %69 = vector.multi_reduction <add>, %68, %cst_23 [1] : vector<16x8xf32> to vector<16xf32>
    %70 = vector.shape_cast %69 : vector<16xf32> to vector<16x1xf32>
    %cst_24 = arith.constant 1.250000e-01 : f32
    %71 = vector.broadcast %cst_24 : f32 to vector<16x1xf32>
    %72 = arith.mulf %67, %71 : vector<16x1xf32>
    %cst_25 = arith.constant 1.250000e-01 : f32
    %73 = vector.broadcast %cst_25 : f32 to vector<16x1xf32>
    %74 = arith.mulf %70, %73 : vector<16x1xf32>
    %75 = arith.mulf %72, %72 : vector<16x1xf32>
    %76 = arith.subf %74, %75 : vector<16x1xf32>
    %cst_26 = arith.constant 0.000000e+00 : f32
    %77 = vector.broadcast %cst_26 : f32 to vector<16x1xf32>
    %78 = arith.maximumf %76, %77 : vector<16x1xf32>
    %79 = vector.broadcast %72 : vector<16x1xf32> to vector<16x8xf32>
    %80 = arith.subf %65, %79 : vector<16x8xf32>
    %cst_27 = arith.constant 9.99999974E-6 : f32
    %81 = vector.broadcast %cst_27 : f32 to vector<16x1xf32>
    %82 = arith.addf %78, %81 : vector<16x1xf32>
    %83 = math.rsqrt %82 : vector<16x1xf32>
    %84 = vector.broadcast %83 : vector<16x1xf32> to vector<16x8xf32>
    %85 = arith.mulf %80, %84 : vector<16x8xf32>
    %c0_28 = arith.constant 0 : index
    %c0_29 = arith.constant 0 : index
    %86 = vector.load %arg3[%c0_28, %c0_29] : memref<16x8xf32, #tpu.memory_space<vmem>>, vector<16x8xf32>
    tpu.vector_store %arg3[%c0_28, %c0_29], %85 {strides = array<i32>} : memref<16x8xf32, #tpu.memory_space<vmem>>, vector<16x8xf32>,
    return
  }
}

module attributes {stable_mosaic.version = 11 : i64} {
  func.func @_fact_reduce_kernel(%arg0: memref<16x8xbf16, #tpu.memory_space<vmem>>, %arg1: memref<16x8xbf16, #tpu.memory_space<vmem>>, %arg2: memref<8x16xbf16, #tpu.memory_space<vmem>>, %arg3: memref<8x16xbf16, #tpu.memory_space<vmem>>, %arg4: memref<2x8x8xf32, #tpu.memory_space<vmem>>) attributes {dimension_semantics = [], scalar_prefetch = 0 : i64, scratch_operands = 0 : i64, tpu.core_type = #tpu.core_type<tc>} {
    %c0 = arith.constant 0 : index
    %c0_0 = arith.constant 0 : index
    %0 = vector.load %arg2[%c0, %c0_0] : memref<8x16xbf16, #tpu.memory_space<vmem>>, vector<8x16xbf16>
    %c0_1 = arith.constant 0 : index
    %c0_2 = arith.constant 0 : index
    %1 = vector.load %arg0[%c0_1, %c0_2] : memref<16x8xbf16, #tpu.memory_space<vmem>>, vector<16x8xbf16>
    %cst = arith.constant dense<0.000000e+00> : vector<8x8xf32>
    %2 = tpu.matmul %0, %1, %cst {dimension_numbers = #tpu.dot_dimension_numbers<[1], [0], [0], [1], [0, 0, 1, 1], [], []>} : vector<8x16xbf16>, vector<16x8xbf16>, vector<8x8xf32> -> vector<8x8xf32>
    %cst_3 = arith.constant dense<0.000000e+00> : vector<8xf32>
    %3 = vector.multi_reduction <add>, %2, %cst_3 [1] : vector<8x8xf32> to vector<8xf32>
    %4 = vector.shape_cast %3 : vector<8xf32> to vector<8x1xf32>
    %5 = arith.mulf %2, %2 : vector<8x8xf32>
    %cst_4 = arith.constant dense<0.000000e+00> : vector<8xf32>
    %6 = vector.multi_reduction <add>, %5, %cst_4 [1] : vector<8x8xf32> to vector<8xf32>
    %7 = vector.shape_cast %6 : vector<8xf32> to vector<8x1xf32>
    %cst_5 = arith.constant 1.250000e-01 : f32
    %8 = vector.broadcast %cst_5 : f32 to vector<8x1xf32>
    %9 = arith.mulf %4, %8 : vector<8x1xf32>
    %cst_6 = arith.constant 1.250000e-01 : f32
    %10 = vector.broadcast %cst_6 : f32 to vector<8x1xf32>
    %11 = arith.mulf %7, %10 : vector<8x1xf32>
    %12 = arith.mulf %9, %9 : vector<8x1xf32>
    %13 = arith.subf %11, %12 : vector<8x1xf32>
    %cst_7 = arith.constant 0.000000e+00 : f32
    %14 = vector.broadcast %cst_7 : f32 to vector<8x1xf32>
    %15 = arith.maximumf %13, %14 : vector<8x1xf32>
    %16 = vector.broadcast %9 : vector<8x1xf32> to vector<8x8xf32>
    %17 = arith.subf %2, %16 : vector<8x8xf32>
    %cst_8 = arith.constant 9.99999974E-6 : f32
    %18 = vector.broadcast %cst_8 : f32 to vector<8x1xf32>
    %19 = arith.addf %15, %18 : vector<8x1xf32>
    %20 = math.rsqrt %19 : vector<8x1xf32>
    %21 = vector.broadcast %20 : vector<8x1xf32> to vector<8x8xf32>
    %22 = arith.mulf %17, %21 : vector<8x8xf32>
    %c0_9 = arith.constant 0 : index
    %c0_10 = arith.constant 0 : index
    %c0_11 = arith.constant 0 : index
    %23 = vector.load %arg4[%c0_9, %c0_10, %c0_11] : memref<2x8x8xf32, #tpu.memory_space<vmem>>, vector<1x8x8xf32>
    %24 = vector.shape_cast %23 : vector<1x8x8xf32> to vector<8x8xf32>
    %25 = vector.shape_cast %22 : vector<8x8xf32> to vector<1x8x8xf32>
    tpu.vector_store %arg4[%c0_9, %c0_10, %c0_11], %25 {strides = array<i32>} : memref<2x8x8xf32, #tpu.memory_space<vmem>>, vector<1x8x8xf32>,
    %c0_12 = arith.constant 0 : index
    %c0_13 = arith.constant 0 : index
    %26 = vector.load %arg3[%c0_12, %c0_13] : memref<8x16xbf16, #tpu.memory_space<vmem>>, vector<8x16xbf16>
    %c0_14 = arith.constant 0 : index
    %c0_15 = arith.constant 0 : index
    %27 = vector.load %arg1[%c0_14, %c0_15] : memref<16x8xbf16, #tpu.memory_space<vmem>>, vector<16x8xbf16>
    %cst_16 = arith.constant dense<0.000000e+00> : vector<8x8xf32>
    %28 = tpu.matmul %26, %27, %cst_16 {dimension_numbers = #tpu.dot_dimension_numbers<[1], [0], [0], [1], [0, 0, 1, 1], [], []>} : vector<8x16xbf16>, vector<16x8xbf16>, vector<8x8xf32> -> vector<8x8xf32>
    %cst_17 = arith.constant dense<0.000000e+00> : vector<8xf32>
    %29 = vector.multi_reduction <add>, %28, %cst_17 [1] : vector<8x8xf32> to vector<8xf32>
    %30 = vector.shape_cast %29 : vector<8xf32> to vector<8x1xf32>
    %31 = arith.mulf %28, %28 : vector<8x8xf32>
    %cst_18 = arith.constant dense<0.000000e+00> : vector<8xf32>
    %32 = vector.multi_reduction <add>, %31, %cst_18 [1] : vector<8x8xf32> to vector<8xf32>
    %33 = vector.shape_cast %32 : vector<8xf32> to vector<8x1xf32>
    %cst_19 = arith.constant 1.250000e-01 : f32
    %34 = vector.broadcast %cst_19 : f32 to vector<8x1xf32>
    %35 = arith.mulf %30, %34 : vector<8x1xf32>
    %cst_20 = arith.constant 1.250000e-01 : f32
    %36 = vector.broadcast %cst_20 : f32 to vector<8x1xf32>
    %37 = arith.mulf %33, %36 : vector<8x1xf32>
    %38 = arith.mulf %35, %35 : vector<8x1xf32>
    %39 = arith.subf %37, %38 : vector<8x1xf32>
    %cst_21 = arith.constant 0.000000e+00 : f32
    %40 = vector.broadcast %cst_21 : f32 to vector<8x1xf32>
    %41 = arith.maximumf %39, %40 : vector<8x1xf32>
    %42 = vector.broadcast %35 : vector<8x1xf32> to vector<8x8xf32>
    %43 = arith.subf %28, %42 : vector<8x8xf32>
    %cst_22 = arith.constant 9.99999974E-6 : f32
    %44 = vector.broadcast %cst_22 : f32 to vector<8x1xf32>
    %45 = arith.addf %41, %44 : vector<8x1xf32>
    %46 = math.rsqrt %45 : vector<8x1xf32>
    %47 = vector.broadcast %46 : vector<8x1xf32> to vector<8x8xf32>
    %48 = arith.mulf %43, %47 : vector<8x8xf32>
    %c1 = arith.constant 1 : index
    %c0_23 = arith.constant 0 : index
    %c0_24 = arith.constant 0 : index
    %49 = vector.load %arg4[%c1, %c0_23, %c0_24] : memref<2x8x8xf32, #tpu.memory_space<vmem>>, vector<1x8x8xf32>
    %50 = vector.shape_cast %49 : vector<1x8x8xf32> to vector<8x8xf32>
    %51 = vector.shape_cast %48 : vector<8x8xf32> to vector<1x8x8xf32>
    tpu.vector_store %arg4[%c1, %c0_23, %c0_24], %51 {strides = array<i32>} : memref<2x8x8xf32, #tpu.memory_space<vmem>>, vector<1x8x8xf32>,
    return
  }
}

module attributes {stable_mosaic.version = 11 : i64} {
  func.func @_dw_pw_bn_kernel(%arg0: memref<25x16x8xbf16, #tpu.memory_space<vmem>>, %arg1: memref<16x25xf32, #tpu.memory_space<vmem>>, %arg2: memref<16x16xbf16, #tpu.memory_space<vmem>>, %arg3: memref<16x8xf32, #tpu.memory_space<vmem>>) attributes {dimension_semantics = [], scalar_prefetch = 0 : i64, scratch_operands = 0 : i64, tpu.core_type = #tpu.core_type<tc>} {
    %c0 = arith.constant 0 : index
    %c0_0 = arith.constant 0 : index
    %0 = vector.load %arg1[%c0, %c0_0] : memref<16x25xf32, #tpu.memory_space<vmem>>, vector<16x25xf32>
    %c0_1 = arith.constant 0 : index
    %c0_2 = arith.constant 0 : index
    %c0_3 = arith.constant 0 : index
    %1 = vector.load %arg0[%c0_1, %c0_2, %c0_3] : memref<25x16x8xbf16, #tpu.memory_space<vmem>>, vector<1x16x8xbf16>
    %2 = vector.shape_cast %1 : vector<1x16x8xbf16> to vector<16x8xbf16>
    %3 = arith.extf %2 : vector<16x8xbf16> to vector<16x8xf32>
    %4 = vector.extract_strided_slice %0 {offsets = [0, 0], sizes = [16, 1], strides = [1, 1]} : vector<16x25xf32> to vector<16x1xf32>
    %5 = vector.broadcast %4 : vector<16x1xf32> to vector<16x8xf32>
    %6 = arith.mulf %3, %5 : vector<16x8xf32>
    %c1 = arith.constant 1 : index
    %c0_4 = arith.constant 0 : index
    %c0_5 = arith.constant 0 : index
    %7 = vector.load %arg0[%c1, %c0_4, %c0_5] : memref<25x16x8xbf16, #tpu.memory_space<vmem>>, vector<1x16x8xbf16>
    %8 = vector.shape_cast %7 : vector<1x16x8xbf16> to vector<16x8xbf16>
    %9 = arith.extf %8 : vector<16x8xbf16> to vector<16x8xf32>
    %10 = vector.extract_strided_slice %0 {offsets = [0, 1], sizes = [16, 1], strides = [1, 1]} : vector<16x25xf32> to vector<16x1xf32>
    %11 = vector.broadcast %10 : vector<16x1xf32> to vector<16x8xf32>
    %12 = arith.mulf %9, %11 : vector<16x8xf32>
    %13 = arith.addf %6, %12 : vector<16x8xf32>
    %c2 = arith.constant 2 : index
    %c0_6 = arith.constant 0 : index
    %c0_7 = arith.constant 0 : index
    %14 = vector.load %arg0[%c2, %c0_6, %c0_7] : memref<25x16x8xbf16, #tpu.memory_space<vmem>>, vector<1x16x8xbf16>
    %15 = vector.shape_cast %14 : vector<1x16x8xbf16> to vector<16x8xbf16>
    %16 = arith.extf %15 : vector<16x8xbf16> to vector<16x8xf32>
    %17 = vector.extract_strided_slice %0 {offsets = [0, 2], sizes = [16, 1], strides = [1, 1]} : vector<16x25xf32> to vector<16x1xf32>
    %18 = vector.broadcast %17 : vector<16x1xf32> to vector<16x8xf32>
    %19 = arith.mulf %16, %18 : vector<16x8xf32>
    %20 = arith.addf %13, %19 : vector<16x8xf32>
    %c3 = arith.constant 3 : index
    %c0_8 = arith.constant 0 : index
    %c0_9 = arith.constant 0 : index
    %21 = vector.load %arg0[%c3, %c0_8, %c0_9] : memref<25x16x8xbf16, #tpu.memory_space<vmem>>, vector<1x16x8xbf16>
    %22 = vector.shape_cast %21 : vector<1x16x8xbf16> to vector<16x8xbf16>
    %23 = arith.extf %22 : vector<16x8xbf16> to vector<16x8xf32>
    %24 = vector.extract_strided_slice %0 {offsets = [0, 3], sizes = [16, 1], strides = [1, 1]} : vector<16x25xf32> to vector<16x1xf32>
    %25 = vector.broadcast %24 : vector<16x1xf32> to vector<16x8xf32>
    %26 = arith.mulf %23, %25 : vector<16x8xf32>
    %27 = arith.addf %20, %26 : vector<16x8xf32>
    %c4 = arith.constant 4 : index
    %c0_10 = arith.constant 0 : index
    %c0_11 = arith.constant 0 : index
    %28 = vector.load %arg0[%c4, %c0_10, %c0_11] : memref<25x16x8xbf16, #tpu.memory_space<vmem>>, vector<1x16x8xbf16>
    %29 = vector.shape_cast %28 : vector<1x16x8xbf16> to vector<16x8xbf16>
    %30 = arith.extf %29 : vector<16x8xbf16> to vector<16x8xf32>
    %31 = vector.extract_strided_slice %0 {offsets = [0, 4], sizes = [16, 1], strides = [1, 1]} : vector<16x25xf32> to vector<16x1xf32>
    %32 = vector.broadcast %31 : vector<16x1xf32> to vector<16x8xf32>
    %33 = arith.mulf %30, %32 : vector<16x8xf32>
    %34 = arith.addf %27, %33 : vector<16x8xf32>
    %c5 = arith.constant 5 : index
    %c0_12 = arith.constant 0 : index
    %c0_13 = arith.constant 0 : index
    %35 = vector.load %arg0[%c5, %c0_12, %c0_13] : memref<25x16x8xbf16, #tpu.memory_space<vmem>>, vector<1x16x8xbf16>
    %36 = vector.shape_cast %35 : vector<1x16x8xbf16> to vector<16x8xbf16>
    %37 = arith.extf %36 : vector<16x8xbf16> to vector<16x8xf32>
    %38 = vector.extract_strided_slice %0 {offsets = [0, 5], sizes = [16, 1], strides = [1, 1]} : vector<16x25xf32> to vector<16x1xf32>
    %39 = vector.broadcast %38 : vector<16x1xf32> to vector<16x8xf32>
    %40 = arith.mulf %37, %39 : vector<16x8xf32>
    %41 = arith.addf %34, %40 : vector<16x8xf32>
    %c6 = arith.constant 6 : index
    %c0_14 = arith.constant 0 : index
    %c0_15 = arith.constant 0 : index
    %42 = vector.load %arg0[%c6, %c0_14, %c0_15] : memref<25x16x8xbf16, #tpu.memory_space<vmem>>, vector<1x16x8xbf16>
    %43 = vector.shape_cast %42 : vector<1x16x8xbf16> to vector<16x8xbf16>
    %44 = arith.extf %43 : vector<16x8xbf16> to vector<16x8xf32>
    %45 = vector.extract_strided_slice %0 {offsets = [0, 6], sizes = [16, 1], strides = [1, 1]} : vector<16x25xf32> to vector<16x1xf32>
    %46 = vector.broadcast %45 : vector<16x1xf32> to vector<16x8xf32>
    %47 = arith.mulf %44, %46 : vector<16x8xf32>
    %48 = arith.addf %41, %47 : vector<16x8xf32>
    %c7 = arith.constant 7 : index
    %c0_16 = arith.constant 0 : index
    %c0_17 = arith.constant 0 : index
    %49 = vector.load %arg0[%c7, %c0_16, %c0_17] : memref<25x16x8xbf16, #tpu.memory_space<vmem>>, vector<1x16x8xbf16>
    %50 = vector.shape_cast %49 : vector<1x16x8xbf16> to vector<16x8xbf16>
    %51 = arith.extf %50 : vector<16x8xbf16> to vector<16x8xf32>
    %52 = vector.extract_strided_slice %0 {offsets = [0, 7], sizes = [16, 1], strides = [1, 1]} : vector<16x25xf32> to vector<16x1xf32>
    %53 = vector.broadcast %52 : vector<16x1xf32> to vector<16x8xf32>
    %54 = arith.mulf %51, %53 : vector<16x8xf32>
    %55 = arith.addf %48, %54 : vector<16x8xf32>
    %c8 = arith.constant 8 : index
    %c0_18 = arith.constant 0 : index
    %c0_19 = arith.constant 0 : index
    %56 = vector.load %arg0[%c8, %c0_18, %c0_19] : memref<25x16x8xbf16, #tpu.memory_space<vmem>>, vector<1x16x8xbf16>
    %57 = vector.shape_cast %56 : vector<1x16x8xbf16> to vector<16x8xbf16>
    %58 = arith.extf %57 : vector<16x8xbf16> to vector<16x8xf32>
    %59 = vector.extract_strided_slice %0 {offsets = [0, 8], sizes = [16, 1], strides = [1, 1]} : vector<16x25xf32> to vector<16x1xf32>
    %60 = vector.broadcast %59 : vector<16x1xf32> to vector<16x8xf32>
    %61 = arith.mulf %58, %60 : vector<16x8xf32>
    %62 = arith.addf %55, %61 : vector<16x8xf32>
    %c9 = arith.constant 9 : index
    %c0_20 = arith.constant 0 : index
    %c0_21 = arith.constant 0 : index
    %63 = vector.load %arg0[%c9, %c0_20, %c0_21] : memref<25x16x8xbf16, #tpu.memory_space<vmem>>, vector<1x16x8xbf16>
    %64 = vector.shape_cast %63 : vector<1x16x8xbf16> to vector<16x8xbf16>
    %65 = arith.extf %64 : vector<16x8xbf16> to vector<16x8xf32>
    %66 = vector.extract_strided_slice %0 {offsets = [0, 9], sizes = [16, 1], strides = [1, 1]} : vector<16x25xf32> to vector<16x1xf32>
    %67 = vector.broadcast %66 : vector<16x1xf32> to vector<16x8xf32>
    %68 = arith.mulf %65, %67 : vector<16x8xf32>
    %69 = arith.addf %62, %68 : vector<16x8xf32>
    %c10 = arith.constant 10 : index
    %c0_22 = arith.constant 0 : index
    %c0_23 = arith.constant 0 : index
    %70 = vector.load %arg0[%c10, %c0_22, %c0_23] : memref<25x16x8xbf16, #tpu.memory_space<vmem>>, vector<1x16x8xbf16>
    %71 = vector.shape_cast %70 : vector<1x16x8xbf16> to vector<16x8xbf16>
    %72 = arith.extf %71 : vector<16x8xbf16> to vector<16x8xf32>
    %73 = vector.extract_strided_slice %0 {offsets = [0, 10], sizes = [16, 1], strides = [1, 1]} : vector<16x25xf32> to vector<16x1xf32>
    %74 = vector.broadcast %73 : vector<16x1xf32> to vector<16x8xf32>
    %75 = arith.mulf %72, %74 : vector<16x8xf32>
    %76 = arith.addf %69, %75 : vector<16x8xf32>
    %c11 = arith.constant 11 : index
    %c0_24 = arith.constant 0 : index
    %c0_25 = arith.constant 0 : index
    %77 = vector.load %arg0[%c11, %c0_24, %c0_25] : memref<25x16x8xbf16, #tpu.memory_space<vmem>>, vector<1x16x8xbf16>
    %78 = vector.shape_cast %77 : vector<1x16x8xbf16> to vector<16x8xbf16>
    %79 = arith.extf %78 : vector<16x8xbf16> to vector<16x8xf32>
    %80 = vector.extract_strided_slice %0 {offsets = [0, 11], sizes = [16, 1], strides = [1, 1]} : vector<16x25xf32> to vector<16x1xf32>
    %81 = vector.broadcast %80 : vector<16x1xf32> to vector<16x8xf32>
    %82 = arith.mulf %79, %81 : vector<16x8xf32>
    %83 = arith.addf %76, %82 : vector<16x8xf32>
    %c12 = arith.constant 12 : index
    %c0_26 = arith.constant 0 : index
    %c0_27 = arith.constant 0 : index
    %84 = vector.load %arg0[%c12, %c0_26, %c0_27] : memref<25x16x8xbf16, #tpu.memory_space<vmem>>, vector<1x16x8xbf16>
    %85 = vector.shape_cast %84 : vector<1x16x8xbf16> to vector<16x8xbf16>
    %86 = arith.extf %85 : vector<16x8xbf16> to vector<16x8xf32>
    %87 = vector.extract_strided_slice %0 {offsets = [0, 12], sizes = [16, 1], strides = [1, 1]} : vector<16x25xf32> to vector<16x1xf32>
    %88 = vector.broadcast %87 : vector<16x1xf32> to vector<16x8xf32>
    %89 = arith.mulf %86, %88 : vector<16x8xf32>
    %90 = arith.addf %83, %89 : vector<16x8xf32>
    %c13 = arith.constant 13 : index
    %c0_28 = arith.constant 0 : index
    %c0_29 = arith.constant 0 : index
    %91 = vector.load %arg0[%c13, %c0_28, %c0_29] : memref<25x16x8xbf16, #tpu.memory_space<vmem>>, vector<1x16x8xbf16>
    %92 = vector.shape_cast %91 : vector<1x16x8xbf16> to vector<16x8xbf16>
    %93 = arith.extf %92 : vector<16x8xbf16> to vector<16x8xf32>
    %94 = vector.extract_strided_slice %0 {offsets = [0, 13], sizes = [16, 1], strides = [1, 1]} : vector<16x25xf32> to vector<16x1xf32>
    %95 = vector.broadcast %94 : vector<16x1xf32> to vector<16x8xf32>
    %96 = arith.mulf %93, %95 : vector<16x8xf32>
    %97 = arith.addf %90, %96 : vector<16x8xf32>
    %c14 = arith.constant 14 : index
    %c0_30 = arith.constant 0 : index
    %c0_31 = arith.constant 0 : index
    %98 = vector.load %arg0[%c14, %c0_30, %c0_31] : memref<25x16x8xbf16, #tpu.memory_space<vmem>>, vector<1x16x8xbf16>
    %99 = vector.shape_cast %98 : vector<1x16x8xbf16> to vector<16x8xbf16>
    %100 = arith.extf %99 : vector<16x8xbf16> to vector<16x8xf32>
    %101 = vector.extract_strided_slice %0 {offsets = [0, 14], sizes = [16, 1], strides = [1, 1]} : vector<16x25xf32> to vector<16x1xf32>
    %102 = vector.broadcast %101 : vector<16x1xf32> to vector<16x8xf32>
    %103 = arith.mulf %100, %102 : vector<16x8xf32>
    %104 = arith.addf %97, %103 : vector<16x8xf32>
    %c15 = arith.constant 15 : index
    %c0_32 = arith.constant 0 : index
    %c0_33 = arith.constant 0 : index
    %105 = vector.load %arg0[%c15, %c0_32, %c0_33] : memref<25x16x8xbf16, #tpu.memory_space<vmem>>, vector<1x16x8xbf16>
    %106 = vector.shape_cast %105 : vector<1x16x8xbf16> to vector<16x8xbf16>
    %107 = arith.extf %106 : vector<16x8xbf16> to vector<16x8xf32>
    %108 = vector.extract_strided_slice %0 {offsets = [0, 15], sizes = [16, 1], strides = [1, 1]} : vector<16x25xf32> to vector<16x1xf32>
    %109 = vector.broadcast %108 : vector<16x1xf32> to vector<16x8xf32>
    %110 = arith.mulf %107, %109 : vector<16x8xf32>
    %111 = arith.addf %104, %110 : vector<16x8xf32>
    %c16 = arith.constant 16 : index
    %c0_34 = arith.constant 0 : index
    %c0_35 = arith.constant 0 : index
    %112 = vector.load %arg0[%c16, %c0_34, %c0_35] : memref<25x16x8xbf16, #tpu.memory_space<vmem>>, vector<1x16x8xbf16>
    %113 = vector.shape_cast %112 : vector<1x16x8xbf16> to vector<16x8xbf16>
    %114 = arith.extf %113 : vector<16x8xbf16> to vector<16x8xf32>
    %115 = vector.extract_strided_slice %0 {offsets = [0, 16], sizes = [16, 1], strides = [1, 1]} : vector<16x25xf32> to vector<16x1xf32>
    %116 = vector.broadcast %115 : vector<16x1xf32> to vector<16x8xf32>
    %117 = arith.mulf %114, %116 : vector<16x8xf32>
    %118 = arith.addf %111, %117 : vector<16x8xf32>
    %c17 = arith.constant 17 : index
    %c0_36 = arith.constant 0 : index
    %c0_37 = arith.constant 0 : index
    %119 = vector.load %arg0[%c17, %c0_36, %c0_37] : memref<25x16x8xbf16, #tpu.memory_space<vmem>>, vector<1x16x8xbf16>
    %120 = vector.shape_cast %119 : vector<1x16x8xbf16> to vector<16x8xbf16>
    %121 = arith.extf %120 : vector<16x8xbf16> to vector<16x8xf32>
    %122 = vector.extract_strided_slice %0 {offsets = [0, 17], sizes = [16, 1], strides = [1, 1]} : vector<16x25xf32> to vector<16x1xf32>
    %123 = vector.broadcast %122 : vector<16x1xf32> to vector<16x8xf32>
    %124 = arith.mulf %121, %123 : vector<16x8xf32>
    %125 = arith.addf %118, %124 : vector<16x8xf32>
    %c18 = arith.constant 18 : index
    %c0_38 = arith.constant 0 : index
    %c0_39 = arith.constant 0 : index
    %126 = vector.load %arg0[%c18, %c0_38, %c0_39] : memref<25x16x8xbf16, #tpu.memory_space<vmem>>, vector<1x16x8xbf16>
    %127 = vector.shape_cast %126 : vector<1x16x8xbf16> to vector<16x8xbf16>
    %128 = arith.extf %127 : vector<16x8xbf16> to vector<16x8xf32>
    %129 = vector.extract_strided_slice %0 {offsets = [0, 18], sizes = [16, 1], strides = [1, 1]} : vector<16x25xf32> to vector<16x1xf32>
    %130 = vector.broadcast %129 : vector<16x1xf32> to vector<16x8xf32>
    %131 = arith.mulf %128, %130 : vector<16x8xf32>
    %132 = arith.addf %125, %131 : vector<16x8xf32>
    %c19 = arith.constant 19 : index
    %c0_40 = arith.constant 0 : index
    %c0_41 = arith.constant 0 : index
    %133 = vector.load %arg0[%c19, %c0_40, %c0_41] : memref<25x16x8xbf16, #tpu.memory_space<vmem>>, vector<1x16x8xbf16>
    %134 = vector.shape_cast %133 : vector<1x16x8xbf16> to vector<16x8xbf16>
    %135 = arith.extf %134 : vector<16x8xbf16> to vector<16x8xf32>
    %136 = vector.extract_strided_slice %0 {offsets = [0, 19], sizes = [16, 1], strides = [1, 1]} : vector<16x25xf32> to vector<16x1xf32>
    %137 = vector.broadcast %136 : vector<16x1xf32> to vector<16x8xf32>
    %138 = arith.mulf %135, %137 : vector<16x8xf32>
    %139 = arith.addf %132, %138 : vector<16x8xf32>
    %c20 = arith.constant 20 : index
    %c0_42 = arith.constant 0 : index
    %c0_43 = arith.constant 0 : index
    %140 = vector.load %arg0[%c20, %c0_42, %c0_43] : memref<25x16x8xbf16, #tpu.memory_space<vmem>>, vector<1x16x8xbf16>
    %141 = vector.shape_cast %140 : vector<1x16x8xbf16> to vector<16x8xbf16>
    %142 = arith.extf %141 : vector<16x8xbf16> to vector<16x8xf32>
    %143 = vector.extract_strided_slice %0 {offsets = [0, 20], sizes = [16, 1], strides = [1, 1]} : vector<16x25xf32> to vector<16x1xf32>
    %144 = vector.broadcast %143 : vector<16x1xf32> to vector<16x8xf32>
    %145 = arith.mulf %142, %144 : vector<16x8xf32>
    %146 = arith.addf %139, %145 : vector<16x8xf32>
    %c21 = arith.constant 21 : index
    %c0_44 = arith.constant 0 : index
    %c0_45 = arith.constant 0 : index
    %147 = vector.load %arg0[%c21, %c0_44, %c0_45] : memref<25x16x8xbf16, #tpu.memory_space<vmem>>, vector<1x16x8xbf16>
    %148 = vector.shape_cast %147 : vector<1x16x8xbf16> to vector<16x8xbf16>
    %149 = arith.extf %148 : vector<16x8xbf16> to vector<16x8xf32>
    %150 = vector.extract_strided_slice %0 {offsets = [0, 21], sizes = [16, 1], strides = [1, 1]} : vector<16x25xf32> to vector<16x1xf32>
    %151 = vector.broadcast %150 : vector<16x1xf32> to vector<16x8xf32>
    %152 = arith.mulf %149, %151 : vector<16x8xf32>
    %153 = arith.addf %146, %152 : vector<16x8xf32>
    %c22 = arith.constant 22 : index
    %c0_46 = arith.constant 0 : index
    %c0_47 = arith.constant 0 : index
    %154 = vector.load %arg0[%c22, %c0_46, %c0_47] : memref<25x16x8xbf16, #tpu.memory_space<vmem>>, vector<1x16x8xbf16>
    %155 = vector.shape_cast %154 : vector<1x16x8xbf16> to vector<16x8xbf16>
    %156 = arith.extf %155 : vector<16x8xbf16> to vector<16x8xf32>
    %157 = vector.extract_strided_slice %0 {offsets = [0, 22], sizes = [16, 1], strides = [1, 1]} : vector<16x25xf32> to vector<16x1xf32>
    %158 = vector.broadcast %157 : vector<16x1xf32> to vector<16x8xf32>
    %159 = arith.mulf %156, %158 : vector<16x8xf32>
    %160 = arith.addf %153, %159 : vector<16x8xf32>
    %c23 = arith.constant 23 : index
    %c0_48 = arith.constant 0 : index
    %c0_49 = arith.constant 0 : index
    %161 = vector.load %arg0[%c23, %c0_48, %c0_49] : memref<25x16x8xbf16, #tpu.memory_space<vmem>>, vector<1x16x8xbf16>
    %162 = vector.shape_cast %161 : vector<1x16x8xbf16> to vector<16x8xbf16>
    %163 = arith.extf %162 : vector<16x8xbf16> to vector<16x8xf32>
    %164 = vector.extract_strided_slice %0 {offsets = [0, 23], sizes = [16, 1], strides = [1, 1]} : vector<16x25xf32> to vector<16x1xf32>
    %165 = vector.broadcast %164 : vector<16x1xf32> to vector<16x8xf32>
    %166 = arith.mulf %163, %165 : vector<16x8xf32>
    %167 = arith.addf %160, %166 : vector<16x8xf32>
    %c24 = arith.constant 24 : index
    %c0_50 = arith.constant 0 : index
    %c0_51 = arith.constant 0 : index
    %168 = vector.load %arg0[%c24, %c0_50, %c0_51] : memref<25x16x8xbf16, #tpu.memory_space<vmem>>, vector<1x16x8xbf16>
    %169 = vector.shape_cast %168 : vector<1x16x8xbf16> to vector<16x8xbf16>
    %170 = arith.extf %169 : vector<16x8xbf16> to vector<16x8xf32>
    %171 = vector.extract_strided_slice %0 {offsets = [0, 24], sizes = [16, 1], strides = [1, 1]} : vector<16x25xf32> to vector<16x1xf32>
    %172 = vector.broadcast %171 : vector<16x1xf32> to vector<16x8xf32>
    %173 = arith.mulf %170, %172 : vector<16x8xf32>
    %174 = arith.addf %167, %173 : vector<16x8xf32>
    %c0_52 = arith.constant 0 : index
    %c0_53 = arith.constant 0 : index
    %175 = vector.load %arg2[%c0_52, %c0_53] : memref<16x16xbf16, #tpu.memory_space<vmem>>, vector<16x16xbf16>
    %176 = arith.truncf %174 : vector<16x8xf32> to vector<16x8xbf16>
    %cst = arith.constant dense<0.000000e+00> : vector<16x8xf32>
    %177 = tpu.matmul %175, %176, %cst {dimension_numbers = #tpu.dot_dimension_numbers<[1], [0], [0], [1], [0, 0, 1, 1], [], []>} : vector<16x16xbf16>, vector<16x8xbf16>, vector<16x8xf32> -> vector<16x8xf32>
    %cst_54 = arith.constant dense<0.000000e+00> : vector<16xf32>
    %178 = vector.multi_reduction <add>, %177, %cst_54 [1] : vector<16x8xf32> to vector<16xf32>
    %179 = vector.shape_cast %178 : vector<16xf32> to vector<16x1xf32>
    %180 = arith.mulf %177, %177 : vector<16x8xf32>
    %cst_55 = arith.constant dense<0.000000e+00> : vector<16xf32>
    %181 = vector.multi_reduction <add>, %180, %cst_55 [1] : vector<16x8xf32> to vector<16xf32>
    %182 = vector.shape_cast %181 : vector<16xf32> to vector<16x1xf32>
    %cst_56 = arith.constant 1.250000e-01 : f32
    %183 = vector.broadcast %cst_56 : f32 to vector<16x1xf32>
    %184 = arith.mulf %179, %183 : vector<16x1xf32>
    %cst_57 = arith.constant 1.250000e-01 : f32
    %185 = vector.broadcast %cst_57 : f32 to vector<16x1xf32>
    %186 = arith.mulf %182, %185 : vector<16x1xf32>
    %187 = arith.mulf %184, %184 : vector<16x1xf32>
    %188 = arith.subf %186, %187 : vector<16x1xf32>
    %cst_58 = arith.constant 0.000000e+00 : f32
    %189 = vector.broadcast %cst_58 : f32 to vector<16x1xf32>
    %190 = arith.maximumf %188, %189 : vector<16x1xf32>
    %191 = vector.broadcast %184 : vector<16x1xf32> to vector<16x8xf32>
    %192 = arith.subf %177, %191 : vector<16x8xf32>
    %cst_59 = arith.constant 9.99999974E-6 : f32
    %193 = vector.broadcast %cst_59 : f32 to vector<16x1xf32>
    %194 = arith.addf %190, %193 : vector<16x1xf32>
    %195 = math.rsqrt %194 : vector<16x1xf32>
    %196 = vector.broadcast %195 : vector<16x1xf32> to vector<16x8xf32>
    %197 = arith.mulf %192, %196 : vector<16x8xf32>
    %c0_60 = arith.constant 0 : index
    %c0_61 = arith.constant 0 : index
    %198 = vector.load %arg3[%c0_60, %c0_61] : memref<16x8xf32, #tpu.memory_space<vmem>>, vector<16x8xf32>
    tpu.vector_store %arg3[%c0_60, %c0_61], %197 {strides = array<i32>} : memref<16x8xf32, #tpu.memory_space<vmem>>, vector<16x8xf32>,
    return
  }
}

module attributes {stable_mosaic.version = 11 : i64} {
  func.func @_fact_reduce_kernel(%arg0: memref<12x32xbf16, #tpu.memory_space<vmem>>, %arg1: memref<12x32xbf16, #tpu.memory_space<vmem>>, %arg2: memref<8x12xbf16, #tpu.memory_space<vmem>>, %arg3: memref<8x12xbf16, #tpu.memory_space<vmem>>, %arg4: memref<2x8x32xf32, #tpu.memory_space<vmem>>) attributes {dimension_semantics = [], scalar_prefetch = 0 : i64, scratch_operands = 0 : i64, tpu.core_type = #tpu.core_type<tc>} {
    %c0 = arith.constant 0 : index
    %c0_0 = arith.constant 0 : index
    %0 = vector.load %arg2[%c0, %c0_0] : memref<8x12xbf16, #tpu.memory_space<vmem>>, vector<8x12xbf16>
    %c0_1 = arith.constant 0 : index
    %c0_2 = arith.constant 0 : index
    %1 = vector.load %arg0[%c0_1, %c0_2] : memref<12x32xbf16, #tpu.memory_space<vmem>>, vector<12x32xbf16>
    %cst = arith.constant dense<0.000000e+00> : vector<8x32xf32>
    %2 = tpu.matmul %0, %1, %cst {dimension_numbers = #tpu.dot_dimension_numbers<[1], [0], [0], [1], [0, 0, 1, 1], [], []>} : vector<8x12xbf16>, vector<12x32xbf16>, vector<8x32xf32> -> vector<8x32xf32>
    %cst_3 = arith.constant dense<0.000000e+00> : vector<8xf32>
    %3 = vector.multi_reduction <add>, %2, %cst_3 [1] : vector<8x32xf32> to vector<8xf32>
    %4 = vector.shape_cast %3 : vector<8xf32> to vector<8x1xf32>
    %5 = arith.mulf %2, %2 : vector<8x32xf32>
    %cst_4 = arith.constant dense<0.000000e+00> : vector<8xf32>
    %6 = vector.multi_reduction <add>, %5, %cst_4 [1] : vector<8x32xf32> to vector<8xf32>
    %7 = vector.shape_cast %6 : vector<8xf32> to vector<8x1xf32>
    %cst_5 = arith.constant 3.125000e-02 : f32
    %8 = vector.broadcast %cst_5 : f32 to vector<8x1xf32>
    %9 = arith.mulf %4, %8 : vector<8x1xf32>
    %cst_6 = arith.constant 3.125000e-02 : f32
    %10 = vector.broadcast %cst_6 : f32 to vector<8x1xf32>
    %11 = arith.mulf %7, %10 : vector<8x1xf32>
    %12 = arith.mulf %9, %9 : vector<8x1xf32>
    %13 = arith.subf %11, %12 : vector<8x1xf32>
    %cst_7 = arith.constant 0.000000e+00 : f32
    %14 = vector.broadcast %cst_7 : f32 to vector<8x1xf32>
    %15 = arith.maximumf %13, %14 : vector<8x1xf32>
    %16 = vector.broadcast %9 : vector<8x1xf32> to vector<8x32xf32>
    %17 = arith.subf %2, %16 : vector<8x32xf32>
    %cst_8 = arith.constant 9.99999974E-6 : f32
    %18 = vector.broadcast %cst_8 : f32 to vector<8x1xf32>
    %19 = arith.addf %15, %18 : vector<8x1xf32>
    %20 = math.rsqrt %19 : vector<8x1xf32>
    %21 = vector.broadcast %20 : vector<8x1xf32> to vector<8x32xf32>
    %22 = arith.mulf %17, %21 : vector<8x32xf32>
    %c0_9 = arith.constant 0 : index
    %c0_10 = arith.constant 0 : index
    %c0_11 = arith.constant 0 : index
    %23 = vector.load %arg4[%c0_9, %c0_10, %c0_11] : memref<2x8x32xf32, #tpu.memory_space<vmem>>, vector<1x8x32xf32>
    %24 = vector.shape_cast %23 : vector<1x8x32xf32> to vector<8x32xf32>
    %25 = vector.shape_cast %22 : vector<8x32xf32> to vector<1x8x32xf32>
    tpu.vector_store %arg4[%c0_9, %c0_10, %c0_11], %25 {strides = array<i32>} : memref<2x8x32xf32, #tpu.memory_space<vmem>>, vector<1x8x32xf32>,
    %c0_12 = arith.constant 0 : index
    %c0_13 = arith.constant 0 : index
    %26 = vector.load %arg3[%c0_12, %c0_13] : memref<8x12xbf16, #tpu.memory_space<vmem>>, vector<8x12xbf16>
    %c0_14 = arith.constant 0 : index
    %c0_15 = arith.constant 0 : index
    %27 = vector.load %arg1[%c0_14, %c0_15] : memref<12x32xbf16, #tpu.memory_space<vmem>>, vector<12x32xbf16>
    %cst_16 = arith.constant dense<0.000000e+00> : vector<8x32xf32>
    %28 = tpu.matmul %26, %27, %cst_16 {dimension_numbers = #tpu.dot_dimension_numbers<[1], [0], [0], [1], [0, 0, 1, 1], [], []>} : vector<8x12xbf16>, vector<12x32xbf16>, vector<8x32xf32> -> vector<8x32xf32>
    %cst_17 = arith.constant dense<0.000000e+00> : vector<8xf32>
    %29 = vector.multi_reduction <add>, %28, %cst_17 [1] : vector<8x32xf32> to vector<8xf32>
    %30 = vector.shape_cast %29 : vector<8xf32> to vector<8x1xf32>
    %31 = arith.mulf %28, %28 : vector<8x32xf32>
    %cst_18 = arith.constant dense<0.000000e+00> : vector<8xf32>
    %32 = vector.multi_reduction <add>, %31, %cst_18 [1] : vector<8x32xf32> to vector<8xf32>
    %33 = vector.shape_cast %32 : vector<8xf32> to vector<8x1xf32>
    %cst_19 = arith.constant 3.125000e-02 : f32
    %34 = vector.broadcast %cst_19 : f32 to vector<8x1xf32>
    %35 = arith.mulf %30, %34 : vector<8x1xf32>
    %cst_20 = arith.constant 3.125000e-02 : f32
    %36 = vector.broadcast %cst_20 : f32 to vector<8x1xf32>
    %37 = arith.mulf %33, %36 : vector<8x1xf32>
    %38 = arith.mulf %35, %35 : vector<8x1xf32>
    %39 = arith.subf %37, %38 : vector<8x1xf32>
    %cst_21 = arith.constant 0.000000e+00 : f32
    %40 = vector.broadcast %cst_21 : f32 to vector<8x1xf32>
    %41 = arith.maximumf %39, %40 : vector<8x1xf32>
    %42 = vector.broadcast %35 : vector<8x1xf32> to vector<8x32xf32>
    %43 = arith.subf %28, %42 : vector<8x32xf32>
    %cst_22 = arith.constant 9.99999974E-6 : f32
    %44 = vector.broadcast %cst_22 : f32 to vector<8x1xf32>
    %45 = arith.addf %41, %44 : vector<8x1xf32>
    %46 = math.rsqrt %45 : vector<8x1xf32>
    %47 = vector.broadcast %46 : vector<8x1xf32> to vector<8x32xf32>
    %48 = arith.mulf %43, %47 : vector<8x32xf32>
    %c1 = arith.constant 1 : index
    %c0_23 = arith.constant 0 : index
    %c0_24 = arith.constant 0 : index
    %49 = vector.load %arg4[%c1, %c0_23, %c0_24] : memref<2x8x32xf32, #tpu.memory_space<vmem>>, vector<1x8x32xf32>
    %50 = vector.shape_cast %49 : vector<1x8x32xf32> to vector<8x32xf32>
    %51 = vector.shape_cast %48 : vector<8x32xf32> to vector<1x8x32xf32>
    tpu.vector_store %arg4[%c1, %c0_23, %c0_24], %51 {strides = array<i32>} : memref<2x8x32xf32, #tpu.memory_space<vmem>>, vector<1x8x32xf32>,
    return
  }
}

module attributes {stable_mosaic.version = 11 : i64} {
  func.func @_avgpool_bn_kernel(%arg0: memref<9x16x8xf32, #tpu.memory_space<vmem>>, %arg1: memref<1x8xf32, #tpu.memory_space<vmem>>, %arg2: memref<16x8xf32, #tpu.memory_space<vmem>>) attributes {dimension_semantics = [], scalar_prefetch = 0 : i64, scratch_operands = 0 : i64, tpu.core_type = #tpu.core_type<tc>} {
    %c0 = arith.constant 0 : index
    %c0_0 = arith.constant 0 : index
    %c0_1 = arith.constant 0 : index
    %0 = vector.load %arg0[%c0, %c0_0, %c0_1] : memref<9x16x8xf32, #tpu.memory_space<vmem>>, vector<1x16x8xf32>
    %1 = vector.shape_cast %0 : vector<1x16x8xf32> to vector<16x8xf32>
    %c1 = arith.constant 1 : index
    %c0_2 = arith.constant 0 : index
    %c0_3 = arith.constant 0 : index
    %2 = vector.load %arg0[%c1, %c0_2, %c0_3] : memref<9x16x8xf32, #tpu.memory_space<vmem>>, vector<1x16x8xf32>
    %3 = vector.shape_cast %2 : vector<1x16x8xf32> to vector<16x8xf32>
    %4 = arith.addf %1, %3 : vector<16x8xf32>
    %c2 = arith.constant 2 : index
    %c0_4 = arith.constant 0 : index
    %c0_5 = arith.constant 0 : index
    %5 = vector.load %arg0[%c2, %c0_4, %c0_5] : memref<9x16x8xf32, #tpu.memory_space<vmem>>, vector<1x16x8xf32>
    %6 = vector.shape_cast %5 : vector<1x16x8xf32> to vector<16x8xf32>
    %7 = arith.addf %4, %6 : vector<16x8xf32>
    %c3 = arith.constant 3 : index
    %c0_6 = arith.constant 0 : index
    %c0_7 = arith.constant 0 : index
    %8 = vector.load %arg0[%c3, %c0_6, %c0_7] : memref<9x16x8xf32, #tpu.memory_space<vmem>>, vector<1x16x8xf32>
    %9 = vector.shape_cast %8 : vector<1x16x8xf32> to vector<16x8xf32>
    %10 = arith.addf %7, %9 : vector<16x8xf32>
    %c4 = arith.constant 4 : index
    %c0_8 = arith.constant 0 : index
    %c0_9 = arith.constant 0 : index
    %11 = vector.load %arg0[%c4, %c0_8, %c0_9] : memref<9x16x8xf32, #tpu.memory_space<vmem>>, vector<1x16x8xf32>
    %12 = vector.shape_cast %11 : vector<1x16x8xf32> to vector<16x8xf32>
    %13 = arith.addf %10, %12 : vector<16x8xf32>
    %c5 = arith.constant 5 : index
    %c0_10 = arith.constant 0 : index
    %c0_11 = arith.constant 0 : index
    %14 = vector.load %arg0[%c5, %c0_10, %c0_11] : memref<9x16x8xf32, #tpu.memory_space<vmem>>, vector<1x16x8xf32>
    %15 = vector.shape_cast %14 : vector<1x16x8xf32> to vector<16x8xf32>
    %16 = arith.addf %13, %15 : vector<16x8xf32>
    %c6 = arith.constant 6 : index
    %c0_12 = arith.constant 0 : index
    %c0_13 = arith.constant 0 : index
    %17 = vector.load %arg0[%c6, %c0_12, %c0_13] : memref<9x16x8xf32, #tpu.memory_space<vmem>>, vector<1x16x8xf32>
    %18 = vector.shape_cast %17 : vector<1x16x8xf32> to vector<16x8xf32>
    %19 = arith.addf %16, %18 : vector<16x8xf32>
    %c7 = arith.constant 7 : index
    %c0_14 = arith.constant 0 : index
    %c0_15 = arith.constant 0 : index
    %20 = vector.load %arg0[%c7, %c0_14, %c0_15] : memref<9x16x8xf32, #tpu.memory_space<vmem>>, vector<1x16x8xf32>
    %21 = vector.shape_cast %20 : vector<1x16x8xf32> to vector<16x8xf32>
    %22 = arith.addf %19, %21 : vector<16x8xf32>
    %c8 = arith.constant 8 : index
    %c0_16 = arith.constant 0 : index
    %c0_17 = arith.constant 0 : index
    %23 = vector.load %arg0[%c8, %c0_16, %c0_17] : memref<9x16x8xf32, #tpu.memory_space<vmem>>, vector<1x16x8xf32>
    %24 = vector.shape_cast %23 : vector<1x16x8xf32> to vector<16x8xf32>
    %25 = arith.addf %22, %24 : vector<16x8xf32>
    %c0_18 = arith.constant 0 : index
    %c0_19 = arith.constant 0 : index
    %26 = vector.load %arg1[%c0_18, %c0_19] : memref<1x8xf32, #tpu.memory_space<vmem>>, vector<1x8xf32>
    %27 = vector.broadcast %26 : vector<1x8xf32> to vector<16x8xf32>
    %28 = arith.mulf %25, %27 : vector<16x8xf32>
    %cst = arith.constant dense<0.000000e+00> : vector<16xf32>
    %29 = vector.multi_reduction <add>, %28, %cst [1] : vector<16x8xf32> to vector<16xf32>
    %30 = vector.shape_cast %29 : vector<16xf32> to vector<16x1xf32>
    %31 = arith.mulf %28, %28 : vector<16x8xf32>
    %cst_20 = arith.constant dense<0.000000e+00> : vector<16xf32>
    %32 = vector.multi_reduction <add>, %31, %cst_20 [1] : vector<16x8xf32> to vector<16xf32>
    %33 = vector.shape_cast %32 : vector<16xf32> to vector<16x1xf32>
    %cst_21 = arith.constant 1.250000e-01 : f32
    %34 = vector.broadcast %cst_21 : f32 to vector<16x1xf32>
    %35 = arith.mulf %30, %34 : vector<16x1xf32>
    %cst_22 = arith.constant 1.250000e-01 : f32
    %36 = vector.broadcast %cst_22 : f32 to vector<16x1xf32>
    %37 = arith.mulf %33, %36 : vector<16x1xf32>
    %38 = arith.mulf %35, %35 : vector<16x1xf32>
    %39 = arith.subf %37, %38 : vector<16x1xf32>
    %cst_23 = arith.constant 0.000000e+00 : f32
    %40 = vector.broadcast %cst_23 : f32 to vector<16x1xf32>
    %41 = arith.maximumf %39, %40 : vector<16x1xf32>
    %42 = vector.broadcast %35 : vector<16x1xf32> to vector<16x8xf32>
    %43 = arith.subf %28, %42 : vector<16x8xf32>
    %cst_24 = arith.constant 9.99999974E-6 : f32
    %44 = vector.broadcast %cst_24 : f32 to vector<16x1xf32>
    %45 = arith.addf %41, %44 : vector<16x1xf32>
    %46 = math.rsqrt %45 : vector<16x1xf32>
    %47 = vector.broadcast %46 : vector<16x1xf32> to vector<16x8xf32>
    %48 = arith.mulf %43, %47 : vector<16x8xf32>
    %c0_25 = arith.constant 0 : index
    %c0_26 = arith.constant 0 : index
    %49 = vector.load %arg2[%c0_25, %c0_26] : memref<16x8xf32, #tpu.memory_space<vmem>>, vector<16x8xf32>
    tpu.vector_store %arg2[%c0_25, %c0_26], %48 {strides = array<i32>} : memref<16x8xf32, #tpu.memory_space<vmem>>, vector<16x8xf32>,
    return
  }
}

module attributes {stable_mosaic.version = 11 : i64} {
  func.func @_maxpool_bn_kernel(%arg0: memref<9x16x8xf32, #tpu.memory_space<vmem>>, %arg1: memref<16x8xf32, #tpu.memory_space<vmem>>) attributes {dimension_semantics = [], scalar_prefetch = 0 : i64, scratch_operands = 0 : i64, tpu.core_type = #tpu.core_type<tc>} {
    %c0 = arith.constant 0 : index
    %c0_0 = arith.constant 0 : index
    %c0_1 = arith.constant 0 : index
    %0 = vector.load %arg0[%c0, %c0_0, %c0_1] : memref<9x16x8xf32, #tpu.memory_space<vmem>>, vector<1x16x8xf32>
    %1 = vector.shape_cast %0 : vector<1x16x8xf32> to vector<16x8xf32>
    %c1 = arith.constant 1 : index
    %c0_2 = arith.constant 0 : index
    %c0_3 = arith.constant 0 : index
    %2 = vector.load %arg0[%c1, %c0_2, %c0_3] : memref<9x16x8xf32, #tpu.memory_space<vmem>>, vector<1x16x8xf32>
    %3 = vector.shape_cast %2 : vector<1x16x8xf32> to vector<16x8xf32>
    %4 = arith.maximumf %1, %3 : vector<16x8xf32>
    %c2 = arith.constant 2 : index
    %c0_4 = arith.constant 0 : index
    %c0_5 = arith.constant 0 : index
    %5 = vector.load %arg0[%c2, %c0_4, %c0_5] : memref<9x16x8xf32, #tpu.memory_space<vmem>>, vector<1x16x8xf32>
    %6 = vector.shape_cast %5 : vector<1x16x8xf32> to vector<16x8xf32>
    %7 = arith.maximumf %4, %6 : vector<16x8xf32>
    %c3 = arith.constant 3 : index
    %c0_6 = arith.constant 0 : index
    %c0_7 = arith.constant 0 : index
    %8 = vector.load %arg0[%c3, %c0_6, %c0_7] : memref<9x16x8xf32, #tpu.memory_space<vmem>>, vector<1x16x8xf32>
    %9 = vector.shape_cast %8 : vector<1x16x8xf32> to vector<16x8xf32>
    %10 = arith.maximumf %7, %9 : vector<16x8xf32>
    %c4 = arith.constant 4 : index
    %c0_8 = arith.constant 0 : index
    %c0_9 = arith.constant 0 : index
    %11 = vector.load %arg0[%c4, %c0_8, %c0_9] : memref<9x16x8xf32, #tpu.memory_space<vmem>>, vector<1x16x8xf32>
    %12 = vector.shape_cast %11 : vector<1x16x8xf32> to vector<16x8xf32>
    %13 = arith.maximumf %10, %12 : vector<16x8xf32>
    %c5 = arith.constant 5 : index
    %c0_10 = arith.constant 0 : index
    %c0_11 = arith.constant 0 : index
    %14 = vector.load %arg0[%c5, %c0_10, %c0_11] : memref<9x16x8xf32, #tpu.memory_space<vmem>>, vector<1x16x8xf32>
    %15 = vector.shape_cast %14 : vector<1x16x8xf32> to vector<16x8xf32>
    %16 = arith.maximumf %13, %15 : vector<16x8xf32>
    %c6 = arith.constant 6 : index
    %c0_12 = arith.constant 0 : index
    %c0_13 = arith.constant 0 : index
    %17 = vector.load %arg0[%c6, %c0_12, %c0_13] : memref<9x16x8xf32, #tpu.memory_space<vmem>>, vector<1x16x8xf32>
    %18 = vector.shape_cast %17 : vector<1x16x8xf32> to vector<16x8xf32>
    %19 = arith.maximumf %16, %18 : vector<16x8xf32>
    %c7 = arith.constant 7 : index
    %c0_14 = arith.constant 0 : index
    %c0_15 = arith.constant 0 : index
    %20 = vector.load %arg0[%c7, %c0_14, %c0_15] : memref<9x16x8xf32, #tpu.memory_space<vmem>>, vector<1x16x8xf32>
    %21 = vector.shape_cast %20 : vector<1x16x8xf32> to vector<16x8xf32>
    %22 = arith.maximumf %19, %21 : vector<16x8xf32>
    %c8 = arith.constant 8 : index
    %c0_16 = arith.constant 0 : index
    %c0_17 = arith.constant 0 : index
    %23 = vector.load %arg0[%c8, %c0_16, %c0_17] : memref<9x16x8xf32, #tpu.memory_space<vmem>>, vector<1x16x8xf32>
    %24 = vector.shape_cast %23 : vector<1x16x8xf32> to vector<16x8xf32>
    %25 = arith.maximumf %22, %24 : vector<16x8xf32>
    %cst = arith.constant dense<0.000000e+00> : vector<16xf32>
    %26 = vector.multi_reduction <add>, %25, %cst [1] : vector<16x8xf32> to vector<16xf32>
    %27 = vector.shape_cast %26 : vector<16xf32> to vector<16x1xf32>
    %28 = arith.mulf %25, %25 : vector<16x8xf32>
    %cst_18 = arith.constant dense<0.000000e+00> : vector<16xf32>
    %29 = vector.multi_reduction <add>, %28, %cst_18 [1] : vector<16x8xf32> to vector<16xf32>
    %30 = vector.shape_cast %29 : vector<16xf32> to vector<16x1xf32>
    %cst_19 = arith.constant 1.250000e-01 : f32
    %31 = vector.broadcast %cst_19 : f32 to vector<16x1xf32>
    %32 = arith.mulf %27, %31 : vector<16x1xf32>
    %cst_20 = arith.constant 1.250000e-01 : f32
    %33 = vector.broadcast %cst_20 : f32 to vector<16x1xf32>
    %34 = arith.mulf %30, %33 : vector<16x1xf32>
    %35 = arith.mulf %32, %32 : vector<16x1xf32>
    %36 = arith.subf %34, %35 : vector<16x1xf32>
    %cst_21 = arith.constant 0.000000e+00 : f32
    %37 = vector.broadcast %cst_21 : f32 to vector<16x1xf32>
    %38 = arith.maximumf %36, %37 : vector<16x1xf32>
    %39 = vector.broadcast %32 : vector<16x1xf32> to vector<16x8xf32>
    %40 = arith.subf %25, %39 : vector<16x8xf32>
    %cst_22 = arith.constant 9.99999974E-6 : f32
    %41 = vector.broadcast %cst_22 : f32 to vector<16x1xf32>
    %42 = arith.addf %38, %41 : vector<16x1xf32>
    %43 = math.rsqrt %42 : vector<16x1xf32>
    %44 = vector.broadcast %43 : vector<16x1xf32> to vector<16x8xf32>
    %45 = arith.mulf %40, %44 : vector<16x8xf32>
    %c0_23 = arith.constant 0 : index
    %c0_24 = arith.constant 0 : index
    %46 = vector.load %arg1[%c0_23, %c0_24] : memref<16x8xf32, #tpu.memory_space<vmem>>, vector<16x8xf32>
    tpu.vector_store %arg1[%c0_23, %c0_24], %45 {strides = array<i32>} : memref<16x8xf32, #tpu.memory_space<vmem>>, vector<16x8xf32>,
    return
  }
}

module attributes {stable_mosaic.version = 11 : i64} {
  func.func @_conv_bn_kernel(%arg0: memref<64x2xf32, #tpu.memory_space<vmem>>, %arg1: memref<10x64xf32, #tpu.memory_space<vmem>>, %arg2: memref<10x1xf32, #tpu.memory_space<vmem>>, %arg3: memref<10x1xf32, #tpu.memory_space<vmem>>, %arg4: memref<10x2xf32, #tpu.memory_space<vmem>>) attributes {dimension_semantics = [], scalar_prefetch = 0 : i64, scratch_operands = 0 : i64, tpu.core_type = #tpu.core_type<tc>} {
    %c0 = arith.constant 0 : index
    %c0_0 = arith.constant 0 : index
    %0 = vector.load %arg1[%c0, %c0_0] : memref<10x64xf32, #tpu.memory_space<vmem>>, vector<10x64xf32>
    %c0_1 = arith.constant 0 : index
    %c0_2 = arith.constant 0 : index
    %1 = vector.load %arg0[%c0_1, %c0_2] : memref<64x2xf32, #tpu.memory_space<vmem>>, vector<64x2xf32>
    %cst = arith.constant dense<0.000000e+00> : vector<10x2xf32>
    %2 = tpu.matmul %0, %1, %cst {dimension_numbers = #tpu.dot_dimension_numbers<[1], [0], [0], [1], [0, 0, 1, 1], [], []>} : vector<10x64xf32>, vector<64x2xf32>, vector<10x2xf32> -> vector<10x2xf32>
    %c0_3 = arith.constant 0 : index
    %c0_4 = arith.constant 0 : index
    %3 = vector.load %arg2[%c0_3, %c0_4] : memref<10x1xf32, #tpu.memory_space<vmem>>, vector<10x1xf32>
    %4 = vector.broadcast %3 : vector<10x1xf32> to vector<10x2xf32>
    %5 = arith.mulf %2, %4 : vector<10x2xf32>
    %c0_5 = arith.constant 0 : index
    %c0_6 = arith.constant 0 : index
    %6 = vector.load %arg3[%c0_5, %c0_6] : memref<10x1xf32, #tpu.memory_space<vmem>>, vector<10x1xf32>
    %7 = vector.broadcast %6 : vector<10x1xf32> to vector<10x2xf32>
    %8 = arith.addf %5, %7 : vector<10x2xf32>
    %c0_7 = arith.constant 0 : index
    %c0_8 = arith.constant 0 : index
    %9 = vector.load %arg4[%c0_7, %c0_8] : memref<10x2xf32, #tpu.memory_space<vmem>>, vector<10x2xf32>
    tpu.vector_store %arg4[%c0_7, %c0_8], %8 {strides = array<i32>} : memref<10x2xf32, #tpu.memory_space<vmem>>, vector<10x2xf32>,
    return
  }
}

</mosaic_0001>

<llo_original>
// kernel: _forward_jit.26
$region0: #{_forward_jit.26}
  #allocation0 [shape = 'u32[]', space=smem, size = 0x4, offset = 0x4, fixed_abs, tag = 'smem constant byte address 0x4 - core index']
  #allocation1 [shape = 'u32[144,128]{1,0:T(1,128)}', space=vmem, size = 0x12000, scoped, tag = 'internal scratch']
  %s0 = inlined_call_operand.vmem [shape: bf16[12,128], index: 0, kind: input, shape index: {}]
  %s1 = inlined_call_operand.vmem [shape: bf16[8,12], index: 1, kind: input, shape index: {}]
  %s2 = inlined_call_operand.vmem [shape: f32[8,128], index: 2, kind: output, shape index: {}]
  %s3 = sld [smem:[#allocation0]]
  $region18: #{_forward_jit.26} parent=0
    _
  %s5 = ssub.s32 1, %s3
  %s6 = scalar_select 0, %s5, %s3
  // Predicated region
  $region2: #{_forward_jit.26} parent=0 // pred_check
    _
  $region3: #{_forward_jit.26} parent=0 // pred_check_branch
    %8 = sbr.rel (0) target = $region5
  $region4: #{_forward_jit.26} parent=0 // pred_region
    _
  $region5: #{_forward_jit.26} parent=0 // pred_fallthru
    _
  // Predicated region
  $region6: #{_forward_jit.26} parent=0 // pred_check
    _
  $region7: #{_forward_jit.26} parent=0 // pred_check_branch
    %10 = sbr.rel (0) target = $region9
  $region8: #{_forward_jit.26} parent=0 // pred_region
    _
  $region9: #{_forward_jit.26} parent=0 // pred_fallthru
    _
  %v12 = vld [vmem:[%s1] sm:$0xf]
  %v13 = vld [vmem:[%s0] sm:$0xf]
  %v14 = vld [vmem:[%s0 + $0x4] sm:$0x3]
  %v17 = vunpack.c.l.b16 %v13
  %v18 = vunpack.c.l.b16 %v14
  %v19 = vpack.c.b16 %v18, %v17
  %vm20 = vcmask 97280
  %v22 = vsel %vm20, %v12, 0
  %vm24 = vcmask 1045504
  %v26 = vsel %vm24, %v19, 0
  %28 = vmatprep.subr.bf16.mxu0 0
  %29 = vmatpush1.bf16.msra.mxu0 %v26
  %30 = vmatprep.subr.bf16.mxu0 0
  %31 = vmatpush1.bf16.msra.mxu0 0
  %32 = vmatprep.subr.bf16.mxu0 0
  %33 = vmatpush1.bf16.msra.mxu0 0
  %34 = vmatprep.subr.bf16.mxu0 0
  %35 = vmatpush1.bf16.msra.mxu0 0
  %36 = vmatprep.subr.bf16.mxu0 0
  %37 = vmatpush1.bf16.msra.mxu0 0
  %38 = vmatprep.subr.bf16.mxu0 0
  %39 = vmatpush1.bf16.msra.mxu0 0
  %40 = vmatprep.subr.bf16.mxu0 0
  %41 = vmatpush1.bf16.msra.mxu0 0
  %42 = vmatprep.subr.bf16.mxu0 0
  %43 = vmatpush1.bf16.msra.mxu0 0
  %44 = vmatprep.subr.bf16.mxu0 0
  %45 = vmatpush1.bf16.msra.mxu0 0
  %46 = vmatprep.subr.bf16.mxu0 0
  %47 = vmatpush1.bf16.msra.mxu0 0
  %48 = vmatprep.subr.bf16.mxu0 0
  %49 = vmatpush1.bf16.msra.mxu0 0
  %50 = vmatprep.subr.bf16.mxu0 0
  %51 = vmatpush1.bf16.msra.mxu0 0
  %52 = vmatprep.subr.bf16.mxu0 0
  %53 = vmatpush1.bf16.msra.mxu0 0
  %54 = vmatprep.subr.bf16.mxu0 0
  %55 = vmatpush1.bf16.msra.mxu0 0
  %56 = vmatprep.subr.bf16.mxu0 0
  %57 = vmatpush1.bf16.msra.mxu0 0
  %58 = vmatprep.subr.bf16.mxu0 0
  %59 = vmatpush1.bf16.msra.mxu0 0
  %60 = vmatprep.mubr.bf16.mxu0 0
  %61 = vmatmul.mubr.bf16.gmra.mrb[0].mxu0 %v22
  %v62 = vpop.f32.mrb[0].mxu0
  %v63 = vadd.f32 0.0, %v62
  %v64 = vpop.f32.mrb[0].mxu0
  %v65 = vpop.f32.mrb[0].mxu0
  %v66 = vpop.f32.mrb[0].mxu0
  %67 = vdwg.mxu0
  %68 = vadd.xlane.f32.xlu0 %v63
  %v69 = vpop.xlane.xlu0 %68
  %v70 = vmul.f32 %v63, %v63
  %71 = vadd.xlane.f32.xlu0 %v70
  %v72 = vpop.xlane.xlu0 %71
  %v73 = vmul.f32 %v69, 0.0078125
  %v74 = vmul.f32 %v72, 0.0078125
  %v75 = vmul.f32 %v73, %v73
  %v76 = vsub.f32 %v74, %v75
  %v77 = vmax.f32 %v76, 0.0
  %v78 = vsub.f32 %v63, %v73
  %v79 = vadd.f32 %v77, 1e-05
  %v80 = vrsqrt.pop %v79
  %v81 = vmul.f32 %v78, %v80
  %82 = vst [vmem:[%s2] sm:$0xff] %v81
  // Predicated region
  $region10: #{_forward_jit.26} parent=0 // pred_check
    _
  $region11: #{_forward_jit.26} parent=0 // pred_check_branch
    %84 = sbr.rel (0) target = $region13
  $region12: #{_forward_jit.26} parent=0 // pred_region
    _
  $region13: #{_forward_jit.26} parent=0 // pred_fallthru
    _
  // Predicated region
  $region14: #{_forward_jit.26} parent=0 // pred_check
    _
  $region15: #{_forward_jit.26} parent=0 // pred_check_branch
    %86 = sbr.rel (0) target = $region17
  $region16: #{_forward_jit.26} parent=0 // pred_region
    _
  $region17: #{_forward_jit.26} parent=0 // pred_fallthru
    _

// kernel: _forward_jit.24
$region0: #{_forward_jit.24}
  #allocation0 [shape = 'u32[]', space=smem, size = 0x4, offset = 0x4, fixed_abs, tag = 'smem constant byte address 0x4 - core index']
  #allocation1 [shape = 'u32[144,128]{1,0:T(1,128)}', space=vmem, size = 0x12000, scoped, tag = 'internal scratch']
  %s0 = inlined_call_operand.vmem [shape: bf16[27,128], index: 0, kind: input, shape index: {}]
  %s1 = inlined_call_operand.vmem [shape: bf16[12,27], index: 1, kind: input, shape index: {}]
  %s2 = inlined_call_operand.vmem [shape: f32[12,1], index: 2, kind: input, shape index: {}]
  %s3 = inlined_call_operand.vmem [shape: f32[12,1], index: 3, kind: input, shape index: {}]
  %s4 = inlined_call_operand.vmem [shape: f32[12,128], index: 4, kind: output, shape index: {}]
  %s5 = sld [smem:[#allocation0]]
  $region26: #{_forward_jit.24} parent=0
    _
  %s7 = ssub.s32 1, %s5
  %s8 = scalar_select 0, %s7, %s5
  // Predicated region
  $region2: #{_forward_jit.24} parent=0 // pred_check
    _
  $region3: #{_forward_jit.24} parent=0 // pred_check_branch
    %10 = sbr.rel (0) target = $region5
  $region4: #{_forward_jit.24} parent=0 // pred_region
    _
  $region5: #{_forward_jit.24} parent=0 // pred_fallthru
    _
  // Predicated region
  $region6: #{_forward_jit.24} parent=0 // pred_check
    _
  $region7: #{_forward_jit.24} parent=0 // pred_check_branch
    %12 = sbr.rel (0) target = $region9
  $region8: #{_forward_jit.24} parent=0 // pred_region
    _
  $region9: #{_forward_jit.24} parent=0 // pred_fallthru
    _
  // Predicated region
  $region10: #{_forward_jit.24} parent=0 // pred_check
    _
  $region11: #{_forward_jit.24} parent=0 // pred_check_branch
    %14 = sbr.rel (0) target = $region13
  $region12: #{_forward_jit.24} parent=0 // pred_region
    _
  $region13: #{_forward_jit.24} parent=0 // pred_fallthru
    _
  // Predicated region
  $region14: #{_forward_jit.24} parent=0 // pred_check
    _
  $region15: #{_forward_jit.24} parent=0 // pred_check_branch
    %16 = sbr.rel (0) target = $region17
  $region16: #{_forward_jit.24} parent=0 // pred_region
    _
  $region17: #{_forward_jit.24} parent=0 // pred_fallthru
    _
  %v18 = vld [vmem:[%s1] sm:$0xf]
  %v19 = vld [vmem:[%s1 + $0x4] sm:$0x3]
  %v20 = vld [vmem:[%s0] sm:$0xf]
  %v21 = vld [vmem:[%s0 + $0x4] sm:$0xf]
  %v22 = vld [vmem:[%s0 + $0x8] sm:$0xf]
  %v23 = vld [vmem:[%s0 + $0xc] sm:$0x3]
  %v26 = vunpack.c.l.b16 %v18
  %v27 = vunpack.c.l.b16 %v19
  %v28 = vpack.c.b16 %v27, %v26
  %v33 = vunpack.c.l.b16 %v20
  %v34 = vunpack.c.l.b16 %v21
  %v35 = vunpack.c.l.b16 %v22
  %v36 = vunpack.c.l.b16 %v23
  %v37 = vpack.c.b16 %v34, %v33
  %v38 = vpack.c.b16 %v36, %v35
  %vm40 = vcmask 220160
  %v42 = vsel %vm40, %v28, 0
  %vm44 = vcmask 1044480
  %vm45 = vcmask 1045504
  %v46 = vsel %vm44, 4294967295, 65535
  %v47 = vsel %vm45, %v46, 0
  %v49 = vand.u32 %v38, %v47
  %51 = vmatprep.subr.bf16.mxu0 0
  %52 = vmatpush1.bf16.msra.mxu0 %v37
  %53 = vmatprep.subr.bf16.mxu0 0
  %54 = vmatpush1.bf16.msra.mxu0 %v49
  %55 = vmatprep.subr.bf16.mxu0 0
  %56 = vmatpush1.bf16.msra.mxu0 0
  %57 = vmatprep.subr.bf16.mxu0 0
  %58 = vmatpush1.bf16.msra.mxu0 0
  %59 = vmatprep.subr.bf16.mxu0 0
  %60 = vmatpush1.bf16.msra.mxu0 0
  %61 = vmatprep.subr.bf16.mxu0 0
  %62 = vmatpush1.bf16.msra.mxu0 0
  %63 = vmatprep.subr.bf16.mxu0 0
  %64 = vmatpush1.bf16.msra.mxu0 0
  %65 = vmatprep.subr.bf16.mxu0 0
  %66 = vmatpush1.bf16.msra.mxu0 0
  %67 = vmatprep.subr.bf16.mxu0 0
  %68 = vmatpush1.bf16.msra.mxu0 0
  %69 = vmatprep.subr.bf16.mxu0 0
  %70 = vmatpush1.bf16.msra.mxu0 0
  %71 = vmatprep.subr.bf16.mxu0 0
  %72 = vmatpush1.bf16.msra.mxu0 0
  %73 = vmatprep.subr.bf16.mxu0 0
  %74 = vmatpush1.bf16.msra.mxu0 0
  %75 = vmatprep.subr.bf16.mxu0 0
  %76 = vmatpush1.bf16.msra.mxu0 0
  %77 = vmatprep.subr.bf16.mxu0 0
  %78 = vmatpush1.bf16.msra.mxu0 0
  %79 = vmatprep.subr.bf16.mxu0 0
  %80 = vmatpush1.bf16.msra.mxu0 0
  %81 = vmatprep.subr.bf16.mxu0 0
  %82 = vmatpush1.bf16.msra.mxu0 0
  %83 = vmatprep.mubr.bf16.mxu0 0
  %84 = vmatmul.mubr.bf16.gmra.mrb[0].mxu0 %v42
  %v85 = vpop.f32.mrb[0].mxu0
  %v86 = vadd.f32 0.0, %v85
  %v87 = vpop.f32.mrb[0].mxu0
  %v88 = vpop.f32.mrb[0].mxu0
  %v89 = vadd.f32 0.0, %v88
  %v90 = vpop.f32.mrb[0].mxu0
  %91 = vdwg.mxu0
  %92 = vadd.xlane.f32.xlu0 %v86
  %v93 = vpop.xlane.xlu0 %92
  %vm94 = vcmask 1043456
  %v95 = vsel %vm94, %v89, 0.0
  %96 = vadd.xlane.f32.xlu0 %v95
  %v97 = vpop.xlane.xlu0 %96
  %v98 = vmul.f32 %v86, %v86
  %v99 = vmul.f32 %v89, %v89
  %100 = vadd.xlane.f32.xlu0 %v98
  %v101 = vpop.xlane.xlu0 %100
  %v102 = vsel %vm94, %v99, 0.0
  %103 = vadd.xlane.f32.xlu0 %v102
  %v104 = vpop.xlane.xlu0 %103
  %v105 = vmul.f32 %v93, 0.0078125
  %v106 = vmul.f32 %v97, 0.0078125
  %v107 = vmul.f32 %v101, 0.0078125
  %v108 = vmul.f32 %v104, 0.0078125
  %v109 = vmul.f32 %v105, %v105
  %v110 = vmul.f32 %v106, %v106
  %v111 = vsub.f32 %v107, %v109
  %v112 = vsub.f32 %v108, %v110
  %v113 = vmax.f32 %v111, 0.0
  %v114 = vmax.f32 %v112, 0.0
  %v115 = vsub.f32 %v86, %v105
  %v116 = vsub.f32 %v89, %v106
  %v117 = vadd.f32 %v113, 1e-05
  %v118 = vadd.f32 %v114, 1e-05
  %v119 = vrsqrt.pop %v117
  %v120 = vrsqrt.pop %v118
  %v121 = vmul.f32 %v115, %v119
  %v122 = vmul.f32 %v116, %v120
  %v123 = vld [vmem:[%s2] sm:$0xff]
  %v124 = vld [vmem:[%s2 + $0x8] sm:$0xf]
  %126 = vset.pattern.permute.xlu0 0
  %127 = vperm.xlu0 %126, %v123
  %v128 = vpop.permute.xlu0 %127
  %131 = vset.pattern.permute.xlu0 0
  %132 = vperm.xlu0 %131, %v124
  %v133 = vpop.permute.xlu0 %132
  %v135 = vmul.f32 %v121, %v128
  %v136 = vmul.f32 %v122, %v133
  %v137 = vld [vmem:[%s3] sm:$0xff]
  %v138 = vld [vmem:[%s3 + $0x8] sm:$0xf]
  %140 = vset.pattern.permute.xlu0 0
  %141 = vperm.xlu0 %140, %v137
  %v142 = vpop.permute.xlu0 %141
  %145 = vset.pattern.permute.xlu0 0
  %146 = vperm.xlu0 %145, %v138
  %v147 = vpop.permute.xlu0 %146
  %v149 = vadd.f32 %v135, %v142
  %v150 = vadd.f32 %v136, %v147
  %151 = vst [vmem:[%s4] sm:$0xff] %v149
  %152 = vst [vmem:[%s4 + $0x8] sm:$0xf] %v150
  // Predicated region
  $region18: #{_forward_jit.24} parent=0 // pred_check
    _
  $region19: #{_forward_jit.24} parent=0 // pred_check_branch
    %154 = sbr.rel (0) target = $region21
  $region20: #{_forward_jit.24} parent=0 // pred_region
    _
  $region21: #{_forward_jit.24} parent=0 // pred_fallthru
    _
  // Predicated region
  $region22: #{_forward_jit.24} parent=0 // pred_check
    _
  $region23: #{_forward_jit.24} parent=0 // pred_check_branch
    %156 = sbr.rel (0) target = $region25
  $region24: #{_forward_jit.24} parent=0 // pred_region
    _
  $region25: #{_forward_jit.24} parent=0 // pred_fallthru
    _

// kernel: _forward_jit.33
$region0: #{_forward_jit.33}
  #allocation0 [shape = 'u32[]', space=smem, size = 0x4, offset = 0x4, fixed_abs, tag = 'smem constant byte address 0x4 - core index']
  #allocation1 [shape = 'u32[144,128]{1,0:T(1,128)}', space=vmem, size = 0x12000, scoped, tag = 'internal scratch']
  %s0 = inlined_call_operand.vmem [shape: bf16[25,8,32], index: 0, kind: input, shape index: {}]
  %s1 = inlined_call_operand.vmem [shape: f32[8,25], index: 1, kind: input, shape index: {}]
  %s2 = inlined_call_operand.vmem [shape: bf16[8,8], index: 2, kind: input, shape index: {}]
  %s3 = inlined_call_operand.vmem [shape: f32[8,32], index: 3, kind: output, shape index: {}]
  %s4 = sld [smem:[#allocation0]]
  $region22: #{_forward_jit.33} parent=0
    _
  %s6 = ssub.s32 1, %s4
  %s7 = scalar_select 0, %s6, %s4
  // Predicated region
  $region2: #{_forward_jit.33} parent=0 // pred_check
    _
  $region3: #{_forward_jit.33} parent=0 // pred_check_branch
    %9 = sbr.rel (0) target = $region5
  $region4: #{_forward_jit.33} parent=0 // pred_region
    _
  $region5: #{_forward_jit.33} parent=0 // pred_fallthru
    _
  // Predicated region
  $region6: #{_forward_jit.33} parent=0 // pred_check
    _
  $region7: #{_forward_jit.33} parent=0 // pred_check_branch
    %11 = sbr.rel (0) target = $region9
  $region8: #{_forward_jit.33} parent=0 // pred_region
    _
  $region9: #{_forward_jit.33} parent=0 // pred_fallthru
    _
  // Predicated region
  $region10: #{_forward_jit.33} parent=0 // pred_check
    _
  $region11: #{_forward_jit.33} parent=0 // pred_check_branch
    %13 = sbr.rel (0) target = $region13
  $region12: #{_forward_jit.33} parent=0 // pred_region
    _
  $region13: #{_forward_jit.33} parent=0 // pred_fallthru
    _
  %v15 = vld [vmem:[%s1] sm:$0xff]
  %v16 = vld [vmem:[%s0] sm:$0xf]
  %v17 = vunpack.c.l.bf16 %v16
  %19 = vset.pattern.permute.xlu0 0
  %20 = vperm.xlu0 %19, %v15
  %v21 = vpop.permute.xlu0 %20
  %v23 = vmul.f32 %v17, %v21
  %s24 = scalar_lea.vmem %s0, 4
  %v25 = vld [vmem:[%s24] sm:$0xf]
  %v26 = vunpack.c.l.bf16 %v25
  %27 = vset.pattern.permute.xlu0 1
  %28 = vperm.xlu0 %27, %v15
  %v29 = vpop.permute.xlu0 %28
  %v31 = vmul.f32 %v26, %v29
  %v32 = vadd.f32 %v23, %v31
  %s33 = scalar_lea.vmem %s0, 8
  %v34 = vld [vmem:[%s33] sm:$0xf]
  %v35 = vunpack.c.l.bf16 %v34
  %36 = vset.pattern.permute.xlu0 2
  %37 = vperm.xlu0 %36, %v15
  %v38 = vpop.permute.xlu0 %37
  %v40 = vmul.f32 %v35, %v38
  %v41 = vadd.f32 %v32, %v40
  %s42 = scalar_lea.vmem %s0, 12
  %v43 = vld [vmem:[%s42] sm:$0xf]
  %v44 = vunpack.c.l.bf16 %v43
  %45 = vset.pattern.permute.xlu0 3
  %46 = vperm.xlu0 %45, %v15
  %v47 = vpop.permute.xlu0 %46
  %v49 = vmul.f32 %v44, %v47
  %v50 = vadd.f32 %v41, %v49
  %s51 = scalar_lea.vmem %s0, 16
  %v52 = vld [vmem:[%s51] sm:$0xf]
  %v53 = vunpack.c.l.bf16 %v52
  %54 = vset.pattern.permute.xlu0 4
  %55 = vperm.xlu0 %54, %v15
  %v56 = vpop.permute.xlu0 %55
  %v58 = vmul.f32 %v53, %v56
  %v59 = vadd.f32 %v50, %v58
  %s60 = scalar_lea.vmem %s0, 20
  %v61 = vld [vmem:[%s60] sm:$0xf]
  %v62 = vunpack.c.l.bf16 %v61
  %63 = vset.pattern.permute.xlu0 5
  %64 = vperm.xlu0 %63, %v15
  %v65 = vpop.permute.xlu0 %64
  %v67 = vmul.f32 %v62, %v65
  %v68 = vadd.f32 %v59, %v67
  %s69 = scalar_lea.vmem %s0, 24
  %v70 = vld [vmem:[%s69] sm:$0xf]
  %v71 = vunpack.c.l.bf16 %v70
  %72 = vset.pattern.permute.xlu0 6
  %73 = vperm.xlu0 %72, %v15
  %v74 = vpop.permute.xlu0 %73
  %v76 = vmul.f32 %v71, %v74
  %v77 = vadd.f32 %v68, %v76
  %s78 = scalar_lea.vmem %s0, 28
  %v79 = vld [vmem:[%s78] sm:$0xf]
  %v80 = vunpack.c.l.bf16 %v79
  %81 = vset.pattern.permute.xlu0 7
  %82 = vperm.xlu0 %81, %v15
  %v83 = vpop.permute.xlu0 %82
  %v85 = vmul.f32 %v80, %v83
  %v86 = vadd.f32 %v77, %v85
  %s87 = scalar_lea.vmem %s0, 32
  %v88 = vld [vmem:[%s87] sm:$0xf]
  %v89 = vunpack.c.l.bf16 %v88
  %90 = vset.pattern.permute.xlu0 8
  %91 = vperm.xlu0 %90, %v15
  %v92 = vpop.permute.xlu0 %91
  %v94 = vmul.f32 %v89, %v92
  %v95 = vadd.f32 %v86, %v94
  %s96 = scalar_lea.vmem %s0, 36
  %v97 = vld [vmem:[%s96] sm:$0xf]
  %v98 = vunpack.c.l.bf16 %v97
  %99 = vset.pattern.permute.xlu0 9
  %100 = vperm.xlu0 %99, %v15
  %v101 = vpop.permute.xlu0 %100
  %v103 = vmul.f32 %v98, %v101
  %v104 = vadd.f32 %v95, %v103
  %s105 = scalar_lea.vmem %s0, 40
  %v106 = vld [vmem:[%s105] sm:$0xf]
  %v107 = vunpack.c.l.bf16 %v106
  %108 = vset.pattern.permute.xlu0 10
  %109 = vperm.xlu0 %108, %v15
  %v110 = vpop.permute.xlu0 %109
  %v112 = vmul.f32 %v107, %v110
  %v113 = vadd.f32 %v104, %v112
  %s114 = scalar_lea.vmem %s0, 44
  %v115 = vld [vmem:[%s114] sm:$0xf]
  %v116 = vunpack.c.l.bf16 %v115
  %117 = vset.pattern.permute.xlu0 11
  %118 = vperm.xlu0 %117, %v15
  %v119 = vpop.permute.xlu0 %118
  %v121 = vmul.f32 %v116, %v119
  %v122 = vadd.f32 %v113, %v121
  %s123 = scalar_lea.vmem %s0, 48
  %v124 = vld [vmem:[%s123] sm:$0xf]
  %v125 = vunpack.c.l.bf16 %v124
  %126 = vset.pattern.permute.xlu0 12
  %127 = vperm.xlu0 %126, %v15
  %v128 = vpop.permute.xlu0 %127
  %v130 = vmul.f32 %v125, %v128
  %v131 = vadd.f32 %v122, %v130
  %s132 = scalar_lea.vmem %s0, 52
  %v133 = vld [vmem:[%s132] sm:$0xf]
  %v134 = vunpack.c.l.bf16 %v133
  %135 = vset.pattern.permute.xlu0 13
  %136 = vperm.xlu0 %135, %v15
  %v137 = vpop.permute.xlu0 %136
  %v139 = vmul.f32 %v134, %v137
  %v140 = vadd.f32 %v131, %v139
  %s141 = scalar_lea.vmem %s0, 56
  %v142 = vld [vmem:[%s141] sm:$0xf]
  %v143 = vunpack.c.l.bf16 %v142
  %144 = vset.pattern.permute.xlu0 14
  %145 = vperm.xlu0 %144, %v15
  %v146 = vpop.permute.xlu0 %145
  %v148 = vmul.f32 %v143, %v146
  %v149 = vadd.f32 %v140, %v148
  %s150 = scalar_lea.vmem %s0, 60
  %v151 = vld [vmem:[%s150] sm:$0xf]
  %v152 = vunpack.c.l.bf16 %v151
  %153 = vset.pattern.permute.xlu0 15
  %154 = vperm.xlu0 %153, %v15
  %v155 = vpop.permute.xlu0 %154
  %v157 = vmul.f32 %v152, %v155
  %v158 = vadd.f32 %v149, %v157
  %s159 = scalar_lea.vmem %s0, 64
  %v160 = vld [vmem:[%s159] sm:$0xf]
  %v161 = vunpack.c.l.bf16 %v160
  %162 = vset.pattern.permute.xlu0 16
  %163 = vperm.xlu0 %162, %v15
  %v164 = vpop.permute.xlu0 %163
  %v166 = vmul.f32 %v161, %v164
  %v167 = vadd.f32 %v158, %v166
  %s168 = scalar_lea.vmem %s0, 68
  %v169 = vld [vmem:[%s168] sm:$0xf]
  %v170 = vunpack.c.l.bf16 %v169
  %171 = vset.pattern.permute.xlu0 17
  %172 = vperm.xlu0 %171, %v15
  %v173 = vpop.permute.xlu0 %172
  %v175 = vmul.f32 %v170, %v173
  %v176 = vadd.f32 %v167, %v175
  %s177 = scalar_lea.vmem %s0, 72
  %v178 = vld [vmem:[%s177] sm:$0xf]
  %v179 = vunpack.c.l.bf16 %v178
  %180 = vset.pattern.permute.xlu0 18
  %181 = vperm.xlu0 %180, %v15
  %v182 = vpop.permute.xlu0 %181
  %v184 = vmul.f32 %v179, %v182
  %v185 = vadd.f32 %v176, %v184
  %s186 = scalar_lea.vmem %s0, 76
  %v187 = vld [vmem:[%s186] sm:$0xf]
  %v188 = vunpack.c.l.bf16 %v187
  %189 = vset.pattern.permute.xlu0 19
  %190 = vperm.xlu0 %189, %v15
  %v191 = vpop.permute.xlu0 %190
  %v193 = vmul.f32 %v188, %v191
  %v194 = vadd.f32 %v185, %v193
  %s195 = scalar_lea.vmem %s0, 80
  %v196 = vld [vmem:[%s195] sm:$0xf]
  %v197 = vunpack.c.l.bf16 %v196
  %198 = vset.pattern.permute.xlu0 20
  %199 = vperm.xlu0 %198, %v15
  %v200 = vpop.permute.xlu0 %199
  %v202 = vmul.f32 %v197, %v200
  %v203 = vadd.f32 %v194, %v202
  %s204 = scalar_lea.vmem %s0, 84
  %v205 = vld [vmem:[%s204] sm:$0xf]
  %v206 = vunpack.c.l.bf16 %v205
  %207 = vset.pattern.permute.xlu0 21
  %208 = vperm.xlu0 %207, %v15
  %v209 = vpop.permute.xlu0 %208
  %v211 = vmul.f32 %v206, %v209
  %v212 = vadd.f32 %v203, %v211
  %s213 = scalar_lea.vmem %s0, 88
  %v214 = vld [vmem:[%s213] sm:$0xf]
  %v215 = vunpack.c.l.bf16 %v214
  %216 = vset.pattern.permute.xlu0 22
  %217 = vperm.xlu0 %216, %v15
  %v218 = vpop.permute.xlu0 %217
  %v220 = vmul.f32 %v215, %v218
  %v221 = vadd.f32 %v212, %v220
  %s222 = scalar_lea.vmem %s0, 92
  %v223 = vld [vmem:[%s222] sm:$0xf]
  %v224 = vunpack.c.l.bf16 %v223
  %225 = vset.pattern.permute.xlu0 23
  %226 = vperm.xlu0 %225, %v15
  %v227 = vpop.permute.xlu0 %226
  %v229 = vmul.f32 %v224, %v227
  %v230 = vadd.f32 %v221, %v229
  %s231 = scalar_lea.vmem %s0, 96
  %v232 = vld [vmem:[%s231] sm:$0xf]
  %v233 = vunpack.c.l.bf16 %v232
  %234 = vset.pattern.permute.xlu0 24
  %235 = vperm.xlu0 %234, %v15
  %v236 = vpop.permute.xlu0 %235
  %v238 = vmul.f32 %v233, %v236
  %v239 = vadd.f32 %v230, %v238
  %v240 = vld [vmem:[%s2] sm:$0xf]
  %v241 = vpack.c.bf16 %v239, %v239
  %vm242 = vcmask 64512
  %v244 = vsel %vm242, %v240, 0
  %vm246 = vcmask 1043456
  %v248 = vsel %vm246, %v241, 0
  %250 = vmatprep.subr.bf16.mxu0 0
  %251 = vmatpush1.bf16.msra.mxu0 %v248
  %252 = vmatprep.subr.bf16.mxu0 0
  %253 = vmatpush1.bf16.msra.mxu0 0
  %254 = vmatprep.subr.bf16.mxu0 0
  %255 = vmatpush1.bf16.msra.mxu0 0
  %256 = vmatprep.subr.bf16.mxu0 0
  %257 = vmatpush1.bf16.msra.mxu0 0
  %258 = vmatprep.subr.bf16.mxu0 0
  %259 = vmatpush1.bf16.msra.mxu0 0
  %260 = vmatprep.subr.bf16.mxu0 0
  %261 = vmatpush1.bf16.msra.mxu0 0
  %262 = vmatprep.subr.bf16.mxu0 0
  %263 = vmatpush1.bf16.msra.mxu0 0
  %264 = vmatprep.subr.bf16.mxu0 0
  %265 = vmatpush1.bf16.msra.mxu0 0
  %266 = vmatprep.subr.bf16.mxu0 0
  %267 = vmatpush1.bf16.msra.mxu0 0
  %268 = vmatprep.subr.bf16.mxu0 0
  %269 = vmatpush1.bf16.msra.mxu0 0
  %270 = vmatprep.subr.bf16.mxu0 0
  %271 = vmatpush1.bf16.msra.mxu0 0
  %272 = vmatprep.subr.bf16.mxu0 0
  %273 = vmatpush1.bf16.msra.mxu0 0
  %274 = vmatprep.subr.bf16.mxu0 0
  %275 = vmatpush1.bf16.msra.mxu0 0
  %276 = vmatprep.subr.bf16.mxu0 0
  %277 = vmatpush1.bf16.msra.mxu0 0
  %278 = vmatprep.subr.bf16.mxu0 0
  %279 = vmatpush1.bf16.msra.mxu0 0
  %280 = vmatprep.subr.bf16.mxu0 0
  %281 = vmatpush1.bf16.msra.mxu0 0
  %282 = vmatprep.mubr.bf16.mxu0 0
  %283 = vmatmul.mubr.bf16.gmra.mrb[0].mxu0 %v244
  %v284 = vpop.f32.mrb[0].mxu0
  %v285 = vadd.f32 0.0, %v284
  %v286 = vpop.f32.mrb[0].mxu0
  %v287 = vpop.f32.mrb[0].mxu0
  %v288 = vpop.f32.mrb[0].mxu0
  %289 = vdwg.mxu0
  %vm290 = vcmask 261120
  %v291 = vsel %vm290, %v285, 0.0
  %292 = vadd.xlane.f32.xlu0 %v291
  %v293 = vpop.xlane.xlu0 %292
  %v294 = vmul.f32 %v285, %v285
  %v295 = vsel %vm290, %v294, 0.0
  %296 = vadd.xlane.f32.xlu0 %v295
  %v297 = vpop.xlane.xlu0 %296
  %v298 = vmul.f32 %v293, 0.03125
  %v299 = vmul.f32 %v297, 0.03125
  %v300 = vmul.f32 %v298, %v298
  %v301 = vsub.f32 %v299, %v300
  %v302 = vmax.f32 %v301, 0.0
  %v303 = vsub.f32 %v285, %v298
  %v304 = vadd.f32 %v302, 1e-05
  %v305 = vrsqrt.pop %v304
  %v306 = vmul.f32 %v303, %v305
  %307 = vst.msk [vmem:[%s3] sm:$0xff] %vm290, %v306
  // Predicated region
  $region14: #{_forward_jit.33} parent=0 // pred_check
    _
  $region15: #{_forward_jit.33} parent=0 // pred_check_branch
    %309 = sbr.rel (0) target = $region17
  $region16: #{_forward_jit.33} parent=0 // pred_region
    _
  $region17: #{_forward_jit.33} parent=0 // pred_fallthru
    _
  // Predicated region
  $region18: #{_forward_jit.33} parent=0 // pred_check
    _
  $region19: #{_forward_jit.33} parent=0 // pred_check_branch
    %311 = sbr.rel (0) target = $region21
  $region20: #{_forward_jit.33} parent=0 // pred_region
    _
  $region21: #{_forward_jit.33} parent=0 // pred_fallthru
    _

// kernel: _forward_jit.30
$region0: #{_forward_jit.30}
  #allocation0 [shape = 'u32[]', space=smem, size = 0x4, offset = 0x4, fixed_abs, tag = 'smem constant byte address 0x4 - core index']
  #allocation1 [shape = 'u32[144,128]{1,0:T(1,128)}', space=vmem, size = 0x12000, scoped, tag = 'internal scratch']
  %s0 = inlined_call_operand.vmem [shape: bf16[9,8,32], index: 0, kind: input, shape index: {}]
  %s1 = inlined_call_operand.vmem [shape: f32[8,9], index: 1, kind: input, shape index: {}]
  %s2 = inlined_call_operand.vmem [shape: bf16[8,8], index: 2, kind: input, shape index: {}]
  %s3 = inlined_call_operand.vmem [shape: f32[8,32], index: 3, kind: output, shape index: {}]
  %s4 = sld [smem:[#allocation0]]
  $region22: #{_forward_jit.30} parent=0
    _
  %s6 = ssub.s32 1, %s4
  %s7 = scalar_select 0, %s6, %s4
  // Predicated region
  $region2: #{_forward_jit.30} parent=0 // pred_check
    _
  $region3: #{_forward_jit.30} parent=0 // pred_check_branch
    %9 = sbr.rel (0) target = $region5
  $region4: #{_forward_jit.30} parent=0 // pred_region
    _
  $region5: #{_forward_jit.30} parent=0 // pred_fallthru
    _
  // Predicated region
  $region6: #{_forward_jit.30} parent=0 // pred_check
    _
  $region7: #{_forward_jit.30} parent=0 // pred_check_branch
    %11 = sbr.rel (0) target = $region9
  $region8: #{_forward_jit.30} parent=0 // pred_region
    _
  $region9: #{_forward_jit.30} parent=0 // pred_fallthru
    _
  // Predicated region
  $region10: #{_forward_jit.30} parent=0 // pred_check
    _
  $region11: #{_forward_jit.30} parent=0 // pred_check_branch
    %13 = sbr.rel (0) target = $region13
  $region12: #{_forward_jit.30} parent=0 // pred_region
    _
  $region13: #{_forward_jit.30} parent=0 // pred_fallthru
    _
  %v15 = vld [vmem:[%s1] sm:$0xff]
  %v16 = vld [vmem:[%s0] sm:$0xf]
  %v17 = vunpack.c.l.bf16 %v16
  %19 = vset.pattern.permute.xlu0 0
  %20 = vperm.xlu0 %19, %v15
  %v21 = vpop.permute.xlu0 %20
  %v23 = vmul.f32 %v17, %v21
  %s24 = scalar_lea.vmem %s0, 4
  %v25 = vld [vmem:[%s24] sm:$0xf]
  %v26 = vunpack.c.l.bf16 %v25
  %27 = vset.pattern.permute.xlu0 1
  %28 = vperm.xlu0 %27, %v15
  %v29 = vpop.permute.xlu0 %28
  %v31 = vmul.f32 %v26, %v29
  %v32 = vadd.f32 %v23, %v31
  %s33 = scalar_lea.vmem %s0, 8
  %v34 = vld [vmem:[%s33] sm:$0xf]
  %v35 = vunpack.c.l.bf16 %v34
  %36 = vset.pattern.permute.xlu0 2
  %37 = vperm.xlu0 %36, %v15
  %v38 = vpop.permute.xlu0 %37
  %v40 = vmul.f32 %v35, %v38
  %v41 = vadd.f32 %v32, %v40
  %s42 = scalar_lea.vmem %s0, 12
  %v43 = vld [vmem:[%s42] sm:$0xf]
  %v44 = vunpack.c.l.bf16 %v43
  %45 = vset.pattern.permute.xlu0 3
  %46 = vperm.xlu0 %45, %v15
  %v47 = vpop.permute.xlu0 %46
  %v49 = vmul.f32 %v44, %v47
  %v50 = vadd.f32 %v41, %v49
  %s51 = scalar_lea.vmem %s0, 16
  %v52 = vld [vmem:[%s51] sm:$0xf]
  %v53 = vunpack.c.l.bf16 %v52
  %54 = vset.pattern.permute.xlu0 4
  %55 = vperm.xlu0 %54, %v15
  %v56 = vpop.permute.xlu0 %55
  %v58 = vmul.f32 %v53, %v56
  %v59 = vadd.f32 %v50, %v58
  %s60 = scalar_lea.vmem %s0, 20
  %v61 = vld [vmem:[%s60] sm:$0xf]
  %v62 = vunpack.c.l.bf16 %v61
  %63 = vset.pattern.permute.xlu0 5
  %64 = vperm.xlu0 %63, %v15
  %v65 = vpop.permute.xlu0 %64
  %v67 = vmul.f32 %v62, %v65
  %v68 = vadd.f32 %v59, %v67
  %s69 = scalar_lea.vmem %s0, 24
  %v70 = vld [vmem:[%s69] sm:$0xf]
  %v71 = vunpack.c.l.bf16 %v70
  %72 = vset.pattern.permute.xlu0 6
  %73 = vperm.xlu0 %72, %v15
  %v74 = vpop.permute.xlu0 %73
  %v76 = vmul.f32 %v71, %v74
  %v77 = vadd.f32 %v68, %v76
  %s78 = scalar_lea.vmem %s0, 28
  %v79 = vld [vmem:[%s78] sm:$0xf]
  %v80 = vunpack.c.l.bf16 %v79
  %81 = vset.pattern.permute.xlu0 7
  %82 = vperm.xlu0 %81, %v15
  %v83 = vpop.permute.xlu0 %82
  %v85 = vmul.f32 %v80, %v83
  %v86 = vadd.f32 %v77, %v85
  %s87 = scalar_lea.vmem %s0, 32
  %v88 = vld [vmem:[%s87] sm:$0xf]
  %v89 = vunpack.c.l.bf16 %v88
  %90 = vset.pattern.permute.xlu0 8
  %91 = vperm.xlu0 %90, %v15
  %v92 = vpop.permute.xlu0 %91
  %v94 = vmul.f32 %v89, %v92
  %v95 = vadd.f32 %v86, %v94
  %v96 = vld [vmem:[%s2] sm:$0xf]
  %v97 = vpack.c.bf16 %v95, %v95
  %vm98 = vcmask 64512
  %v100 = vsel %vm98, %v96, 0
  %vm102 = vcmask 1043456
  %v104 = vsel %vm102, %v97, 0
  %106 = vmatprep.subr.bf16.mxu0 0
  %107 = vmatpush1.bf16.msra.mxu0 %v104
  %108 = vmatprep.subr.bf16.mxu0 0
  %109 = vmatpush1.bf16.msra.mxu0 0
  %110 = vmatprep.subr.bf16.mxu0 0
  %111 = vmatpush1.bf16.msra.mxu0 0
  %112 = vmatprep.subr.bf16.mxu0 0
  %113 = vmatpush1.bf16.msra.mxu0 0
  %114 = vmatprep.subr.bf16.mxu0 0
  %115 = vmatpush1.bf16.msra.mxu0 0
  %116 = vmatprep.subr.bf16.mxu0 0
  %117 = vmatpush1.bf16.msra.mxu0 0
  %118 = vmatprep.subr.bf16.mxu0 0
  %119 = vmatpush1.bf16.msra.mxu0 0
  %120 = vmatprep.subr.bf16.mxu0 0
  %121 = vmatpush1.bf16.msra.mxu0 0
  %122 = vmatprep.subr.bf16.mxu0 0
  %123 = vmatpush1.bf16.msra.mxu0 0
  %124 = vmatprep.subr.bf16.mxu0 0
  %125 = vmatpush1.bf16.msra.mxu0 0
  %126 = vmatprep.subr.bf16.mxu0 0
  %127 = vmatpush1.bf16.msra.mxu0 0
  %128 = vmatprep.subr.bf16.mxu0 0
  %129 = vmatpush1.bf16.msra.mxu0 0
  %130 = vmatprep.subr.bf16.mxu0 0
  %131 = vmatpush1.bf16.msra.mxu0 0
  %132 = vmatprep.subr.bf16.mxu0 0
  %133 = vmatpush1.bf16.msra.mxu0 0
  %134 = vmatprep.subr.bf16.mxu0 0
  %135 = vmatpush1.bf16.msra.mxu0 0
  %136 = vmatprep.subr.bf16.mxu0 0
  %137 = vmatpush1.bf16.msra.mxu0 0
  %138 = vmatprep.mubr.bf16.mxu0 0
  %139 = vmatmul.mubr.bf16.gmra.mrb[0].mxu0 %v100
  %v140 = vpop.f32.mrb[0].mxu0
  %v141 = vadd.f32 0.0, %v140
  %v142 = vpop.f32.mrb[0].mxu0
  %v143 = vpop.f32.mrb[0].mxu0
  %v144 = vpop.f32.mrb[0].mxu0
  %145 = vdwg.mxu0
  %vm146 = vcmask 261120
  %v147 = vsel %vm146, %v141, 0.0
  %148 = vadd.xlane.f32.xlu0 %v147
  %v149 = vpop.xlane.xlu0 %148
  %v150 = vmul.f32 %v141, %v141
  %v151 = vsel %vm146, %v150, 0.0
  %152 = vadd.xlane.f32.xlu0 %v151
  %v153 = vpop.xlane.xlu0 %152
  %v154 = vmul.f32 %v149, 0.03125
  %v155 = vmul.f32 %v153, 0.03125
  %v156 = vmul.f32 %v154, %v154
  %v157 = vsub.f32 %v155, %v156
  %v158 = vmax.f32 %v157, 0.0
  %v159 = vsub.f32 %v141, %v154
  %v160 = vadd.f32 %v158, 1e-05
  %v161 = vrsqrt.pop %v160
  %v162 = vmul.f32 %v159, %v161
  %163 = vst.msk [vmem:[%s3] sm:$0xff] %vm146, %v162
  // Predicated region
  $region14: #{_forward_jit.30} parent=0 // pred_check
    _
  $region15: #{_forward_jit.30} parent=0 // pred_check_branch
    %165 = sbr.rel (0) target = $region17
  $region16: #{_forward_jit.30} parent=0 // pred_region
    _
  $region17: #{_forward_jit.30} parent=0 // pred_fallthru
    _
  // Predicated region
  $region18: #{_forward_jit.30} parent=0 // pred_check
    _
  $region19: #{_forward_jit.30} parent=0 // pred_check_branch
    %167 = sbr.rel (0) target = $region21
  $region20: #{_forward_jit.30} parent=0 // pred_region
    _
  $region21: #{_forward_jit.30} parent=0 // pred_fallthru
    _

// kernel: _forward_jit.28
$region0: #{_forward_jit.28}
  #allocation0 [shape = 'u32[]', space=smem, size = 0x4, offset = 0x4, fixed_abs, tag = 'smem constant byte address 0x4 - core index']
  #allocation1 [shape = 'u32[144,128]{1,0:T(1,128)}', space=vmem, size = 0x12000, scoped, tag = 'internal scratch']
  %s0 = inlined_call_operand.vmem [shape: f32[9,8,32], index: 0, kind: input, shape index: {}]
  %s1 = inlined_call_operand.vmem [shape: f32[1,32], index: 1, kind: input, shape index: {}]
  %s2 = inlined_call_operand.vmem [shape: f32[8,32], index: 2, kind: output, shape index: {}]
  %s3 = sld [smem:[#allocation0]]
  $region18: #{_forward_jit.28} parent=0
    _
  %s5 = ssub.s32 1, %s3
  %s6 = scalar_select 0, %s5, %s3
  // Predicated region
  $region2: #{_forward_jit.28} parent=0 // pred_check
    _
  $region3: #{_forward_jit.28} parent=0 // pred_check_branch
    %8 = sbr.rel (0) target = $region5
  $region4: #{_forward_jit.28} parent=0 // pred_region
    _
  $region5: #{_forward_jit.28} parent=0 // pred_fallthru
    _
  // Predicated region
  $region6: #{_forward_jit.28} parent=0 // pred_check
    _
  $region7: #{_forward_jit.28} parent=0 // pred_check_branch
    %10 = sbr.rel (0) target = $region9
  $region8: #{_forward_jit.28} parent=0 // pred_region
    _
  $region9: #{_forward_jit.28} parent=0 // pred_fallthru
    _
  %v11 = vld [vmem:[%s0] sm:$0xff]
  %s12 = scalar_lea.vmem %s0, 8
  %v13 = vld [vmem:[%s12] sm:$0xff]
  %v14 = vadd.f32 %v11, %v13
  %s15 = scalar_lea.vmem %s0, 16
  %v16 = vld [vmem:[%s15] sm:$0xff]
  %v17 = vadd.f32 %v14, %v16
  %s18 = scalar_lea.vmem %s0, 24
  %v19 = vld [vmem:[%s18] sm:$0xff]
  %v20 = vadd.f32 %v17, %v19
  %s21 = scalar_lea.vmem %s0, 32
  %v22 = vld [vmem:[%s21] sm:$0xff]
  %v23 = vadd.f32 %v20, %v22
  %s24 = scalar_lea.vmem %s0, 40
  %v25 = vld [vmem:[%s24] sm:$0xff]
  %v26 = vadd.f32 %v23, %v25
  %s27 = scalar_lea.vmem %s0, 48
  %v28 = vld [vmem:[%s27] sm:$0xff]
  %v29 = vadd.f32 %v26, %v28
  %s30 = scalar_lea.vmem %s0, 56
  %v31 = vld [vmem:[%s30] sm:$0xff]
  %v32 = vadd.f32 %v29, %v31
  %s33 = scalar_lea.vmem %s0, 64
  %v34 = vld [vmem:[%s33] sm:$0xff]
  %v35 = vadd.f32 %v32, %v34
  %v36 = vld [vmem:[%s1] sm:$0x1]
  %v38 = vlaneseq
  %v39 = vshrl.u32 %v38, 7
  %v40 = vsub.s32 0, %v39
  %v41 = vrot.slane %v36, %v40
  %v43 = vmul.f32 %v35, %v41
  %vm44 = vcmask 261120
  %v45 = vsel %vm44, %v43, 0.0
  %46 = vadd.xlane.f32.xlu0 %v45
  %v47 = vpop.xlane.xlu0 %46
  %v48 = vmul.f32 %v43, %v43
  %v49 = vsel %vm44, %v48, 0.0
  %50 = vadd.xlane.f32.xlu0 %v49
  %v51 = vpop.xlane.xlu0 %50
  %v52 = vmul.f32 %v47, 0.03125
  %v53 = vmul.f32 %v51, 0.03125
  %v54 = vmul.f32 %v52, %v52
  %v55 = vsub.f32 %v53, %v54
  %v56 = vmax.f32 %v55, 0.0
  %v57 = vsub.f32 %v43, %v52
  %v58 = vadd.f32 %v56, 1e-05
  %v59 = vrsqrt.pop %v58
  %v60 = vmul.f32 %v57, %v59
  %61 = vst.msk [vmem:[%s2] sm:$0xff] %vm44, %v60
  // Predicated region
  $region10: #{_forward_jit.28} parent=0 // pred_check
    _
  $region11: #{_forward_jit.28} parent=0 // pred_check_branch
    %63 = sbr.rel (0) target = $region13
  $region12: #{_forward_jit.28} parent=0 // pred_region
    _
  $region13: #{_forward_jit.28} parent=0 // pred_fallthru
    _
  // Predicated region
  $region14: #{_forward_jit.28} parent=0 // pred_check
    _
  $region15: #{_forward_jit.28} parent=0 // pred_check_branch
    %65 = sbr.rel (0) target = $region17
  $region16: #{_forward_jit.28} parent=0 // pred_region
    _
  $region17: #{_forward_jit.28} parent=0 // pred_fallthru
    _

// kernel: _forward_jit.27
$region0: #{_forward_jit.27}
  #allocation0 [shape = 'u32[]', space=smem, size = 0x4, offset = 0x4, fixed_abs, tag = 'smem constant byte address 0x4 - core index']
  #allocation1 [shape = 'u32[144,128]{1,0:T(1,128)}', space=vmem, size = 0x12000, scoped, tag = 'internal scratch']
  %s0 = inlined_call_operand.vmem [shape: f32[9,8,32], index: 0, kind: input, shape index: {}]
  %s1 = inlined_call_operand.vmem [shape: f32[8,32], index: 1, kind: output, shape index: {}]
  %s2 = sld [smem:[#allocation0]]
  $region14: #{_forward_jit.27} parent=0
    _
  %s4 = ssub.s32 1, %s2
  %s5 = scalar_select 0, %s4, %s2
  // Predicated region
  $region2: #{_forward_jit.27} parent=0 // pred_check
    _
  $region3: #{_forward_jit.27} parent=0 // pred_check_branch
    %7 = sbr.rel (0) target = $region5
  $region4: #{_forward_jit.27} parent=0 // pred_region
    _
  $region5: #{_forward_jit.27} parent=0 // pred_fallthru
    _
  %v8 = vld [vmem:[%s0] sm:$0xff]
  %s9 = scalar_lea.vmem %s0, 8
  %v10 = vld [vmem:[%s9] sm:$0xff]
  %v11 = vmax.f32 %v8, %v10
  %s12 = scalar_lea.vmem %s0, 16
  %v13 = vld [vmem:[%s12] sm:$0xff]
  %v14 = vmax.f32 %v11, %v13
  %s15 = scalar_lea.vmem %s0, 24
  %v16 = vld [vmem:[%s15] sm:$0xff]
  %v17 = vmax.f32 %v14, %v16
  %s18 = scalar_lea.vmem %s0, 32
  %v19 = vld [vmem:[%s18] sm:$0xff]
  %v20 = vmax.f32 %v17, %v19
  %s21 = scalar_lea.vmem %s0, 40
  %v22 = vld [vmem:[%s21] sm:$0xff]
  %v23 = vmax.f32 %v20, %v22
  %s24 = scalar_lea.vmem %s0, 48
  %v25 = vld [vmem:[%s24] sm:$0xff]
  %v26 = vmax.f32 %v23, %v25
  %s27 = scalar_lea.vmem %s0, 56
  %v28 = vld [vmem:[%s27] sm:$0xff]
  %v29 = vmax.f32 %v26, %v28
  %s30 = scalar_lea.vmem %s0, 64
  %v31 = vld [vmem:[%s30] sm:$0xff]
  %v32 = vmax.f32 %v29, %v31
  %vm33 = vcmask 261120
  %v34 = vsel %vm33, %v32, 0.0
  %35 = vadd.xlane.f32.xlu0 %v34
  %v36 = vpop.xlane.xlu0 %35
  %v37 = vmul.f32 %v32, %v32
  %v38 = vsel %vm33, %v37, 0.0
  %39 = vadd.xlane.f32.xlu0 %v38
  %v40 = vpop.xlane.xlu0 %39
  %v41 = vmul.f32 %v36, 0.03125
  %v42 = vmul.f32 %v40, 0.03125
  %v43 = vmul.f32 %v41, %v41
  %v44 = vsub.f32 %v42, %v43
  %v45 = vmax.f32 %v44, 0.0
  %v46 = vsub.f32 %v32, %v41
  %v47 = vadd.f32 %v45, 1e-05
  %v48 = vrsqrt.pop %v47
  %v49 = vmul.f32 %v46, %v48
  %50 = vst.msk [vmem:[%s1] sm:$0xff] %vm33, %v49
  // Predicated region
  $region6: #{_forward_jit.27} parent=0 // pred_check
    _
  $region7: #{_forward_jit.27} parent=0 // pred_check_branch
    %52 = sbr.rel (0) target = $region9
  $region8: #{_forward_jit.27} parent=0 // pred_region
    _
  $region9: #{_forward_jit.27} parent=0 // pred_fallthru
    _
  // Predicated region
  $region10: #{_forward_jit.27} parent=0 // pred_check
    _
  $region11: #{_forward_jit.27} parent=0 // pred_check_branch
    %54 = sbr.rel (0) target = $region13
  $region12: #{_forward_jit.27} parent=0 // pred_region
    _
  $region13: #{_forward_jit.27} parent=0 // pred_fallthru
    _

// kernel: _forward_jit.29
$region0: #{_forward_jit.29}
  #allocation0 [shape = 'u32[]', space=smem, size = 0x4, offset = 0x4, fixed_abs, tag = 'smem constant byte address 0x4 - core index']
  #allocation1 [shape = 'u32[144,128]{1,0:T(1,128)}', space=vmem, size = 0x12000, scoped, tag = 'internal scratch']
  %s0 = inlined_call_operand.vmem [shape: bf16[8,32], index: 0, kind: input, shape index: {}]
  %s1 = inlined_call_operand.vmem [shape: bf16[8,32], index: 1, kind: input, shape index: {}]
  %s2 = inlined_call_operand.vmem [shape: bf16[4,8], index: 2, kind: input, shape index: {}]
  %s3 = inlined_call_operand.vmem [shape: bf16[4,8], index: 3, kind: input, shape index: {}]
  %s4 = inlined_call_operand.vmem [shape: f32[2,4,32], index: 4, kind: output, shape index: {}]
  %s5 = sld [smem:[#allocation0]]
  $region26: #{_forward_jit.29} parent=0
    _
  %s7 = ssub.s32 1, %s5
  %s8 = scalar_select 0, %s7, %s5
  // Predicated region
  $region2: #{_forward_jit.29} parent=0 // pred_check
    _
  $region3: #{_forward_jit.29} parent=0 // pred_check_branch
    %10 = sbr.rel (0) target = $region5
  $region4: #{_forward_jit.29} parent=0 // pred_region
    _
  $region5: #{_forward_jit.29} parent=0 // pred_fallthru
    _
  // Predicated region
  $region6: #{_forward_jit.29} parent=0 // pred_check
    _
  $region7: #{_forward_jit.29} parent=0 // pred_check_branch
    %12 = sbr.rel (0) target = $region9
  $region8: #{_forward_jit.29} parent=0 // pred_region
    _
  $region9: #{_forward_jit.29} parent=0 // pred_fallthru
    _
  // Predicated region
  $region10: #{_forward_jit.29} parent=0 // pred_check
    _
  $region11: #{_forward_jit.29} parent=0 // pred_check_branch
    %14 = sbr.rel (0) target = $region13
  $region12: #{_forward_jit.29} parent=0 // pred_region
    _
  $region13: #{_forward_jit.29} parent=0 // pred_fallthru
    _
  // Predicated region
  $region14: #{_forward_jit.29} parent=0 // pred_check
    _
  $region15: #{_forward_jit.29} parent=0 // pred_check_branch
    %16 = sbr.rel (0) target = $region17
  $region16: #{_forward_jit.29} parent=0 // pred_region
    _
  $region17: #{_forward_jit.29} parent=0 // pred_fallthru
    _
  %v18 = vld [vmem:[%s2] sm:$0x3]
  %v19 = vld [vmem:[%s0] sm:$0xf]
  %vm20 = vcmask 64512
  %v22 = vsel %vm20, %v18, 0
  %vm24 = vcmask 1043456
  %v26 = vsel %vm24, %v19, 0
  %28 = vmatprep.subr.bf16.mxu0 0
  %29 = vmatpush1.bf16.msra.mxu0 %v26
  %30 = vmatprep.subr.bf16.mxu0 0
  %31 = vmatpush1.bf16.msra.mxu0 0
  %32 = vmatprep.subr.bf16.mxu0 0
  %33 = vmatpush1.bf16.msra.mxu0 0
  %34 = vmatprep.subr.bf16.mxu0 0
  %35 = vmatpush1.bf16.msra.mxu0 0
  %36 = vmatprep.subr.bf16.mxu0 0
  %37 = vmatpush1.bf16.msra.mxu0 0
  %38 = vmatprep.subr.bf16.mxu0 0
  %39 = vmatpush1.bf16.msra.mxu0 0
  %40 = vmatprep.subr.bf16.mxu0 0
  %41 = vmatpush1.bf16.msra.mxu0 0
  %42 = vmatprep.subr.bf16.mxu0 0
  %43 = vmatpush1.bf16.msra.mxu0 0
  %44 = vmatprep.subr.bf16.mxu0 0
  %45 = vmatpush1.bf16.msra.mxu0 0
  %46 = vmatprep.subr.bf16.mxu0 0
  %47 = vmatpush1.bf16.msra.mxu0 0
  %48 = vmatprep.subr.bf16.mxu0 0
  %49 = vmatpush1.bf16.msra.mxu0 0
  %50 = vmatprep.subr.bf16.mxu0 0
  %51 = vmatpush1.bf16.msra.mxu0 0
  %52 = vmatprep.subr.bf16.mxu0 0
  %53 = vmatpush1.bf16.msra.mxu0 0
  %54 = vmatprep.subr.bf16.mxu0 0
  %55 = vmatpush1.bf16.msra.mxu0 0
  %56 = vmatprep.subr.bf16.mxu0 0
  %57 = vmatpush1.bf16.msra.mxu0 0
  %58 = vmatprep.subr.bf16.mxu0 0
  %59 = vmatpush1.bf16.msra.mxu0 0
  %60 = vmatprep.mubr.bf16.mxu0 0
  %61 = vmatmul.mubr.bf16.gmra.mrb[0].mxu0 %v22
  %v62 = vpop.f32.mrb[0].mxu0
  %v63 = vadd.f32 0.0, %v62
  %v64 = vpop.f32.mrb[0].mxu0
  %v65 = vpop.f32.mrb[0].mxu0
  %v66 = vpop.f32.mrb[0].mxu0
  %67 = vdwg.mxu0
  %vm68 = vcmask 257024
  %v69 = vsel %vm68, %v63, 0.0
  %70 = vadd.xlane.f32.xlu0 %v69
  %v71 = vpop.xlane.xlu0 %70
  %v72 = vmul.f32 %v63, %v63
  %v73 = vsel %vm68, %v72, 0.0
  %74 = vadd.xlane.f32.xlu0 %v73
  %v75 = vpop.xlane.xlu0 %74
  %v76 = vmul.f32 %v71, 0.03125
  %v77 = vmul.f32 %v75, 0.03125
  %v78 = vmul.f32 %v76, %v76
  %v79 = vsub.f32 %v77, %v78
  %v80 = vmax.f32 %v79, 0.0
  %v81 = vsub.f32 %v63, %v76
  %v82 = vadd.f32 %v80, 1e-05
  %v83 = vrsqrt.pop %v82
  %v84 = vmul.f32 %v81, %v83
  %85 = vst.msk [vmem:[%s4] sm:$0xf] %vm68, %v84
  %v86 = vld [vmem:[%s3] sm:$0x3]
  %v87 = vld [vmem:[%s1] sm:$0xf]
  %v89 = vsel %vm20, %v86, 0
  %v92 = vsel %vm24, %v87, 0
  %94 = vmatprep.subr.bf16.mxu0 0
  %95 = vmatpush1.bf16.msra.mxu0 %v92
  %96 = vmatprep.subr.bf16.mxu0 0
  %97 = vmatpush1.bf16.msra.mxu0 0
  %98 = vmatprep.subr.bf16.mxu0 0
  %99 = vmatpush1.bf16.msra.mxu0 0
  %100 = vmatprep.subr.bf16.mxu0 0
  %101 = vmatpush1.bf16.msra.mxu0 0
  %102 = vmatprep.subr.bf16.mxu0 0
  %103 = vmatpush1.bf16.msra.mxu0 0
  %104 = vmatprep.subr.bf16.mxu0 0
  %105 = vmatpush1.bf16.msra.mxu0 0
  %106 = vmatprep.subr.bf16.mxu0 0
  %107 = vmatpush1.bf16.msra.mxu0 0
  %108 = vmatprep.subr.bf16.mxu0 0
  %109 = vmatpush1.bf16.msra.mxu0 0
  %110 = vmatprep.subr.bf16.mxu0 0
  %111 = vmatpush1.bf16.msra.mxu0 0
  %112 = vmatprep.subr.bf16.mxu0 0
  %113 = vmatpush1.bf16.msra.mxu0 0
  %114 = vmatprep.subr.bf16.mxu0 0
  %115 = vmatpush1.bf16.msra.mxu0 0
  %116 = vmatprep.subr.bf16.mxu0 0
  %117 = vmatpush1.bf16.msra.mxu0 0
  %118 = vmatprep.subr.bf16.mxu0 0
  %119 = vmatpush1.bf16.msra.mxu0 0
  %120 = vmatprep.subr.bf16.mxu0 0
  %121 = vmatpush1.bf16.msra.mxu0 0
  %122 = vmatprep.subr.bf16.mxu0 0
  %123 = vmatpush1.bf16.msra.mxu0 0
  %124 = vmatprep.subr.bf16.mxu0 0
  %125 = vmatpush1.bf16.msra.mxu0 0
  %126 = vmatprep.mubr.bf16.mxu0 0
  %127 = vmatmul.mubr.bf16.gmra.mrb[0].mxu0 %v89
  %v128 = vpop.f32.mrb[0].mxu0
  %v129 = vadd.f32 0.0, %v128
  %v130 = vpop.f32.mrb[0].mxu0
  %v131 = vpop.f32.mrb[0].mxu0
  %v132 = vpop.f32.mrb[0].mxu0
  %133 = vdwg.mxu0
  %v134 = vsel %vm68, %v129, 0.0
  %135 = vadd.xlane.f32.xlu0 %v134
  %v136 = vpop.xlane.xlu0 %135
  %v137 = vmul.f32 %v129, %v129
  %v138 = vsel %vm68, %v137, 0.0
  %139 = vadd.xlane.f32.xlu0 %v138
  %v140 = vpop.xlane.xlu0 %139
  %v141 = vmul.f32 %v136, 0.03125
  %v142 = vmul.f32 %v140, 0.03125
  %v143 = vmul.f32 %v141, %v141
  %v144 = vsub.f32 %v142, %v143
  %v145 = vmax.f32 %v144, 0.0
  %v146 = vsub.f32 %v129, %v141
  %v147 = vadd.f32 %v145, 1e-05
  %v148 = vrsqrt.pop %v147
  %v149 = vmul.f32 %v146, %v148
  %s150 = scalar_lea.vmem %s4, 4
  %151 = vst.msk [vmem:[%s150] sm:$0xf] %vm68, %v149
  // Predicated region
  $region18: #{_forward_jit.29} parent=0 // pred_check
    _
  $region19: #{_forward_jit.29} parent=0 // pred_check_branch
    %153 = sbr.rel (0) target = $region21
  $region20: #{_forward_jit.29} parent=0 // pred_region
    _
  $region21: #{_forward_jit.29} parent=0 // pred_fallthru
    _
  // Predicated region
  $region22: #{_forward_jit.29} parent=0 // pred_check
    _
  $region23: #{_forward_jit.29} parent=0 // pred_check_branch
    %155 = sbr.rel (0) target = $region25
  $region24: #{_forward_jit.29} parent=0 // pred_region
    _
  $region25: #{_forward_jit.29} parent=0 // pred_fallthru
    _

// kernel: _forward_jit.36
$region0: #{_forward_jit.36}
  #allocation0 [shape = 'u32[]', space=smem, size = 0x4, offset = 0x4, fixed_abs, tag = 'smem constant byte address 0x4 - core index']
  #allocation1 [shape = 'u32[144,128]{1,0:T(1,128)}', space=vmem, size = 0x12000, scoped, tag = 'internal scratch']
  %s0 = inlined_call_operand.vmem [shape: bf16[32,32], index: 0, kind: input, shape index: {}]
  %s1 = inlined_call_operand.vmem [shape: bf16[16,32], index: 1, kind: input, shape index: {}]
  %s2 = inlined_call_operand.vmem [shape: f32[16,32], index: 2, kind: output, shape index: {}]
  %s3 = sld [smem:[#allocation0]]
  $region18: #{_forward_jit.36} parent=0
    _
  %s5 = ssub.s32 1, %s3
  %s6 = scalar_select 0, %s5, %s3
  // Predicated region
  $region2: #{_forward_jit.36} parent=0 // pred_check
    _
  $region3: #{_forward_jit.36} parent=0 // pred_check_branch
    %8 = sbr.rel (0) target = $region5
  $region4: #{_forward_jit.36} parent=0 // pred_region
    _
  $region5: #{_forward_jit.36} parent=0 // pred_fallthru
    _
  // Predicated region
  $region6: #{_forward_jit.36} parent=0 // pred_check
    _
  $region7: #{_forward_jit.36} parent=0 // pred_check_branch
    %10 = sbr.rel (0) target = $region9
  $region8: #{_forward_jit.36} parent=0 // pred_region
    _
  $region9: #{_forward_jit.36} parent=0 // pred_fallthru
    _
  %v12 = vld [vmem:[%s1] sm:$0xf]
  %v13 = vld [vmem:[%s1 + $0x4] sm:$0xf]
  %v14 = vld [vmem:[%s0] sm:$0xf]
  %v15 = vld [vmem:[%s0 + $0x4] sm:$0xf]
  %v16 = vld [vmem:[%s0 + $0x8] sm:$0xf]
  %v17 = vld [vmem:[%s0 + $0xc] sm:$0xf]
  %v20 = vunpack.c.l.b16 %v12
  %v21 = vunpack.c.l.b16 %v13
  %v22 = vpack.c.b16 %v21, %v20
  %v27 = vunpack.c.l.b16 %v14
  %v28 = vunpack.c.l.b16 %v15
  %v29 = vunpack.c.l.b16 %v16
  %v30 = vunpack.c.l.b16 %v17
  %v31 = vpack.c.b16 %v28, %v27
  %v32 = vpack.c.b16 %v30, %v29
  %vm35 = vcmask 261120
  %v37 = vsel %vm35, %v22, 0
  %39 = vmatprep.subr.bf16.mxu0 0
  %40 = vmatpush1.bf16.msra.mxu0 %v31
  %41 = vmatprep.subr.bf16.mxu0 0
  %42 = vmatpush1.bf16.msra.mxu0 %v32
  %43 = vmatprep.subr.bf16.mxu0 0
  %44 = vmatpush1.bf16.msra.mxu0 0
  %45 = vmatprep.subr.bf16.mxu0 0
  %46 = vmatpush1.bf16.msra.mxu0 0
  %47 = vmatprep.subr.bf16.mxu0 0
  %48 = vmatpush1.bf16.msra.mxu0 0
  %49 = vmatprep.subr.bf16.mxu0 0
  %50 = vmatpush1.bf16.msra.mxu0 0
  %51 = vmatprep.subr.bf16.mxu0 0
  %52 = vmatpush1.bf16.msra.mxu0 0
  %53 = vmatprep.subr.bf16.mxu0 0
  %54 = vmatpush1.bf16.msra.mxu0 0
  %55 = vmatprep.subr.bf16.mxu0 0
  %56 = vmatpush1.bf16.msra.mxu0 0
  %57 = vmatprep.subr.bf16.mxu0 0
  %58 = vmatpush1.bf16.msra.mxu0 0
  %59 = vmatprep.subr.bf16.mxu0 0
  %60 = vmatpush1.bf16.msra.mxu0 0
  %61 = vmatprep.subr.bf16.mxu0 0
  %62 = vmatpush1.bf16.msra.mxu0 0
  %63 = vmatprep.subr.bf16.mxu0 0
  %64 = vmatpush1.bf16.msra.mxu0 0
  %65 = vmatprep.subr.bf16.mxu0 0
  %66 = vmatpush1.bf16.msra.mxu0 0
  %67 = vmatprep.subr.bf16.mxu0 0
  %68 = vmatpush1.bf16.msra.mxu0 0
  %69 = vmatprep.subr.bf16.mxu0 0
  %70 = vmatpush1.bf16.msra.mxu0 0
  %71 = vmatprep.mubr.bf16.mxu0 0
  %72 = vmatmul.mubr.bf16.gmra.mrb[0].mxu0 %v37
  %v73 = vpop.f32.mrb[0].mxu0
  %v74 = vadd.f32 0.0, %v73
  %v75 = vpop.f32.mrb[0].mxu0
  %v76 = vpop.f32.mrb[0].mxu0
  %v77 = vadd.f32 0.0, %v76
  %v78 = vpop.f32.mrb[0].mxu0
  %79 = vdwg.mxu0
  %v80 = vsel %vm35, %v74, 0.0
  %81 = vadd.xlane.f32.xlu0 %v80
  %v82 = vpop.xlane.xlu0 %81
  %v83 = vsel %vm35, %v77, 0.0
  %84 = vadd.xlane.f32.xlu0 %v83
  %v85 = vpop.xlane.xlu0 %84
  %v86 = vmul.f32 %v74, %v74
  %v87 = vmul.f32 %v77, %v77
  %v88 = vsel %vm35, %v86, 0.0
  %89 = vadd.xlane.f32.xlu0 %v88
  %v90 = vpop.xlane.xlu0 %89
  %v91 = vsel %vm35, %v87, 0.0
  %92 = vadd.xlane.f32.xlu0 %v91
  %v93 = vpop.xlane.xlu0 %92
  %v94 = vmul.f32 %v82, 0.03125
  %v95 = vmul.f32 %v85, 0.03125
  %v96 = vmul.f32 %v90, 0.03125
  %v97 = vmul.f32 %v93, 0.03125
  %v98 = vmul.f32 %v94, %v94
  %v99 = vmul.f32 %v95, %v95
  %v100 = vsub.f32 %v96, %v98
  %v101 = vsub.f32 %v97, %v99
  %v102 = vmax.f32 %v100, 0.0
  %v103 = vmax.f32 %v101, 0.0
  %v104 = vsub.f32 %v74, %v94
  %v105 = vsub.f32 %v77, %v95
  %v106 = vadd.f32 %v102, 1e-05
  %v107 = vadd.f32 %v103, 1e-05
  %v108 = vrsqrt.pop %v106
  %v109 = vrsqrt.pop %v107
  %v110 = vmul.f32 %v104, %v108
  %v111 = vmul.f32 %v105, %v109
  %112 = vst.msk [vmem:[%s2] sm:$0xff] %vm35, %v110
  %113 = vst.msk [vmem:[%s2 + $0x8] sm:$0xff] %vm35, %v111
  // Predicated region
  $region10: #{_forward_jit.36} parent=0 // pred_check
    _
  $region11: #{_forward_jit.36} parent=0 // pred_check_branch
    %115 = sbr.rel (0) target = $region13
  $region12: #{_forward_jit.36} parent=0 // pred_region
    _
  $region13: #{_forward_jit.36} parent=0 // pred_fallthru
    _
  // Predicated region
  $region14: #{_forward_jit.36} parent=0 // pred_check
    _
  $region15: #{_forward_jit.36} parent=0 // pred_check_branch
    %117 = sbr.rel (0) target = $region17
  $region16: #{_forward_jit.36} parent=0 // pred_region
    _
  $region17: #{_forward_jit.36} parent=0 // pred_fallthru
    _

// kernel: _forward_jit.39
$region0: #{_forward_jit.39}
  #allocation0 [shape = 'u32[]', space=smem, size = 0x4, offset = 0x4, fixed_abs, tag = 'smem constant byte address 0x4 - core index']
  #allocation1 [shape = 'u32[144,128]{1,0:T(1,128)}', space=vmem, size = 0x12000, scoped, tag = 'internal scratch']
  %s0 = inlined_call_operand.vmem [shape: bf16[16,8], index: 0, kind: input, shape index: {}]
  %s1 = inlined_call_operand.vmem [shape: bf16[16,8], index: 1, kind: input, shape index: {}]
  %s2 = inlined_call_operand.vmem [shape: bf16[8,16], index: 2, kind: input, shape index: {}]
  %s3 = inlined_call_operand.vmem [shape: bf16[8,16], index: 3, kind: input, shape index: {}]
  %s4 = inlined_call_operand.vmem [shape: f32[2,8,8], index: 4, kind: output, shape index: {}]
  %s5 = sld [smem:[#allocation0]]
  $region26: #{_forward_jit.39} parent=0
    _
  %s7 = ssub.s32 1, %s5
  %s8 = scalar_select 0, %s7, %s5
  // Predicated region
  $region2: #{_forward_jit.39} parent=0 // pred_check
    _
  $region3: #{_forward_jit.39} parent=0 // pred_check_branch
    %10 = sbr.rel (0) target = $region5
  $region4: #{_forward_jit.39} parent=0 // pred_region
    _
  $region5: #{_forward_jit.39} parent=0 // pred_fallthru
    _
  // Predicated region
  $region6: #{_forward_jit.39} parent=0 // pred_check
    _
  $region7: #{_forward_jit.39} parent=0 // pred_check_branch
    %12 = sbr.rel (0) target = $region9
  $region8: #{_forward_jit.39} parent=0 // pred_region
    _
  $region9: #{_forward_jit.39} parent=0 // pred_fallthru
    _
  // Predicated region
  $region10: #{_forward_jit.39} parent=0 // pred_check
    _
  $region11: #{_forward_jit.39} parent=0 // pred_check_branch
    %14 = sbr.rel (0) target = $region13
  $region12: #{_forward_jit.39} parent=0 // pred_region
    _
  $region13: #{_forward_jit.39} parent=0 // pred_fallthru
    _
  // Predicated region
  $region14: #{_forward_jit.39} parent=0 // pred_check
    _
  $region15: #{_forward_jit.39} parent=0 // pred_check_branch
    %16 = sbr.rel (0) target = $region17
  $region16: #{_forward_jit.39} parent=0 // pred_region
    _
  $region17: #{_forward_jit.39} parent=0 // pred_fallthru
    _
  %v18 = vld [vmem:[%s2] sm:$0xf]
  %v19 = vld [vmem:[%s0] sm:$0xf]
  %v20 = vld [vmem:[%s0 + $0x4] sm:$0xf]
  %v23 = vunpack.c.l.b16 %v19
  %v24 = vunpack.c.l.b16 %v20
  %v25 = vpack.c.b16 %v24, %v23
  %vm27 = vcmask 130048
  %v29 = vsel %vm27, %v18, 0
  %31 = vmatprep.subr.bf16.mxu0 0
  %32 = vmatpush1.bf16.msra.mxu0 %v25
  %33 = vmatprep.subr.bf16.mxu0 0
  %34 = vmatpush1.bf16.msra.mxu0 0
  %35 = vmatprep.subr.bf16.mxu0 0
  %36 = vmatpush1.bf16.msra.mxu0 0
  %37 = vmatprep.subr.bf16.mxu0 0
  %38 = vmatpush1.bf16.msra.mxu0 0
  %39 = vmatprep.subr.bf16.mxu0 0
  %40 = vmatpush1.bf16.msra.mxu0 0
  %41 = vmatprep.subr.bf16.mxu0 0
  %42 = vmatpush1.bf16.msra.mxu0 0
  %43 = vmatprep.subr.bf16.mxu0 0
  %44 = vmatpush1.bf16.msra.mxu0 0
  %45 = vmatprep.subr.bf16.mxu0 0
  %46 = vmatpush1.bf16.msra.mxu0 0
  %47 = vmatprep.subr.bf16.mxu0 0
  %48 = vmatpush1.bf16.msra.mxu0 0
  %49 = vmatprep.subr.bf16.mxu0 0
  %50 = vmatpush1.bf16.msra.mxu0 0
  %51 = vmatprep.subr.bf16.mxu0 0
  %52 = vmatpush1.bf16.msra.mxu0 0
  %53 = vmatprep.subr.bf16.mxu0 0
  %54 = vmatpush1.bf16.msra.mxu0 0
  %55 = vmatprep.subr.bf16.mxu0 0
  %56 = vmatpush1.bf16.msra.mxu0 0
  %57 = vmatprep.subr.bf16.mxu0 0
  %58 = vmatpush1.bf16.msra.mxu0 0
  %59 = vmatprep.subr.bf16.mxu0 0
  %60 = vmatpush1.bf16.msra.mxu0 0
  %61 = vmatprep.subr.bf16.mxu0 0
  %62 = vmatpush1.bf16.msra.mxu0 0
  %63 = vmatprep.mubr.bf16.mxu0 0
  %64 = vmatmul.mubr.bf16.gmra.mrb[0].mxu0 %v29
  %v65 = vpop.f32.mrb[0].mxu0
  %v66 = vadd.f32 0.0, %v65
  %v67 = vpop.f32.mrb[0].mxu0
  %v68 = vpop.f32.mrb[0].mxu0
  %v69 = vpop.f32.mrb[0].mxu0
  %70 = vdwg.mxu0
  %vm71 = vcmask 64512
  %v72 = vsel %vm71, %v66, 0.0
  %73 = vadd.xlane.f32.xlu0 %v72
  %v74 = vpop.xlane.xlu0 %73
  %v75 = vmul.f32 %v66, %v66
  %v76 = vsel %vm71, %v75, 0.0
  %77 = vadd.xlane.f32.xlu0 %v76
  %v78 = vpop.xlane.xlu0 %77
  %v79 = vmul.f32 %v74, 0.125
  %v80 = vmul.f32 %v78, 0.125
  %v81 = vmul.f32 %v79, %v79
  %v82 = vsub.f32 %v80, %v81
  %v83 = vmax.f32 %v82, 0.0
  %v84 = vsub.f32 %v66, %v79
  %v85 = vadd.f32 %v83, 1e-05
  %v86 = vrsqrt.pop %v85
  %v87 = vmul.f32 %v84, %v86
  %88 = vst.msk [vmem:[%s4] sm:$0xff] %vm71, %v87
  %v89 = vld [vmem:[%s3] sm:$0xf]
  %v90 = vld [vmem:[%s1] sm:$0xf]
  %v91 = vld [vmem:[%s1 + $0x4] sm:$0xf]
  %v94 = vunpack.c.l.b16 %v90
  %v95 = vunpack.c.l.b16 %v91
  %v96 = vpack.c.b16 %v95, %v94
  %v99 = vsel %vm27, %v89, 0
  %101 = vmatprep.subr.bf16.mxu0 0
  %102 = vmatpush1.bf16.msra.mxu0 %v96
  %103 = vmatprep.subr.bf16.mxu0 0
  %104 = vmatpush1.bf16.msra.mxu0 0
  %105 = vmatprep.subr.bf16.mxu0 0
  %106 = vmatpush1.bf16.msra.mxu0 0
  %107 = vmatprep.subr.bf16.mxu0 0
  %108 = vmatpush1.bf16.msra.mxu0 0
  %109 = vmatprep.subr.bf16.mxu0 0
  %110 = vmatpush1.bf16.msra.mxu0 0
  %111 = vmatprep.subr.bf16.mxu0 0
  %112 = vmatpush1.bf16.msra.mxu0 0
  %113 = vmatprep.subr.bf16.mxu0 0
  %114 = vmatpush1.bf16.msra.mxu0 0
  %115 = vmatprep.subr.bf16.mxu0 0
  %116 = vmatpush1.bf16.msra.mxu0 0
  %117 = vmatprep.subr.bf16.mxu0 0
  %118 = vmatpush1.bf16.msra.mxu0 0
  %119 = vmatprep.subr.bf16.mxu0 0
  %120 = vmatpush1.bf16.msra.mxu0 0
  %121 = vmatprep.subr.bf16.mxu0 0
  %122 = vmatpush1.bf16.msra.mxu0 0
  %123 = vmatprep.subr.bf16.mxu0 0
  %124 = vmatpush1.bf16.msra.mxu0 0
  %125 = vmatprep.subr.bf16.mxu0 0
  %126 = vmatpush1.bf16.msra.mxu0 0
  %127 = vmatprep.subr.bf16.mxu0 0
  %128 = vmatpush1.bf16.msra.mxu0 0
  %129 = vmatprep.subr.bf16.mxu0 0
  %130 = vmatpush1.bf16.msra.mxu0 0
  %131 = vmatprep.subr.bf16.mxu0 0
  %132 = vmatpush1.bf16.msra.mxu0 0
  %133 = vmatprep.mubr.bf16.mxu0 0
  %134 = vmatmul.mubr.bf16.gmra.mrb[0].mxu0 %v99
  %v135 = vpop.f32.mrb[0].mxu0
  %v136 = vadd.f32 0.0, %v135
  %v137 = vpop.f32.mrb[0].mxu0
  %v138 = vpop.f32.mrb[0].mxu0
  %v139 = vpop.f32.mrb[0].mxu0
  %140 = vdwg.mxu0
  %v141 = vsel %vm71, %v136, 0.0
  %142 = vadd.xlane.f32.xlu0 %v141
  %v143 = vpop.xlane.xlu0 %142
  %v144 = vmul.f32 %v136, %v136
  %v145 = vsel %vm71, %v144, 0.0
  %146 = vadd.xlane.f32.xlu0 %v145
  %v147 = vpop.xlane.xlu0 %146
  %v148 = vmul.f32 %v143, 0.125
  %v149 = vmul.f32 %v147, 0.125
  %v150 = vmul.f32 %v148, %v148
  %v151 = vsub.f32 %v149, %v150
  %v152 = vmax.f32 %v151, 0.0
  %v153 = vsub.f32 %v136, %v148
  %v154 = vadd.f32 %v152, 1e-05
  %v155 = vrsqrt.pop %v154
  %v156 = vmul.f32 %v153, %v155
  %s157 = scalar_lea.vmem %s4, 8
  %158 = vst.msk [vmem:[%s157] sm:$0xff] %vm71, %v156
  // Predicated region
  $region18: #{_forward_jit.39} parent=0 // pred_check
    _
  $region19: #{_forward_jit.39} parent=0 // pred_check_branch
    %160 = sbr.rel (0) target = $region21
  $region20: #{_forward_jit.39} parent=0 // pred_region
    _
  $region21: #{_forward_jit.39} parent=0 // pred_fallthru
    _
  // Predicated region
  $region22: #{_forward_jit.39} parent=0 // pred_check
    _
  $region23: #{_forward_jit.39} parent=0 // pred_check_branch
    %162 = sbr.rel (0) target = $region25
  $region24: #{_forward_jit.39} parent=0 // pred_region
    _
  $region25: #{_forward_jit.39} parent=0 // pred_fallthru
    _

// kernel: _forward_jit.40
$region0: #{_forward_jit.40}
  #allocation0 [shape = 'u32[]', space=smem, size = 0x4, offset = 0x4, fixed_abs, tag = 'smem constant byte address 0x4 - core index']
  #allocation1 [shape = 'u32[144,128]{1,0:T(1,128)}', space=vmem, size = 0x12000, scoped, tag = 'internal scratch']
  %s0 = inlined_call_operand.vmem [shape: bf16[9,16,8], index: 0, kind: input, shape index: {}]
  %s1 = inlined_call_operand.vmem [shape: f32[16,9], index: 1, kind: input, shape index: {}]
  %s2 = inlined_call_operand.vmem [shape: bf16[16,16], index: 2, kind: input, shape index: {}]
  %s3 = inlined_call_operand.vmem [shape: f32[16,8], index: 3, kind: output, shape index: {}]
  %s4 = sld [smem:[#allocation0]]
  $region22: #{_forward_jit.40} parent=0
    _
  %s6 = ssub.s32 1, %s4
  %s7 = scalar_select 0, %s6, %s4
  // Predicated region
  $region2: #{_forward_jit.40} parent=0 // pred_check
    _
  $region3: #{_forward_jit.40} parent=0 // pred_check_branch
    %9 = sbr.rel (0) target = $region5
  $region4: #{_forward_jit.40} parent=0 // pred_region
    _
  $region5: #{_forward_jit.40} parent=0 // pred_fallthru
    _
  // Predicated region
  $region6: #{_forward_jit.40} parent=0 // pred_check
    _
  $region7: #{_forward_jit.40} parent=0 // pred_check_branch
    %11 = sbr.rel (0) target = $region9
  $region8: #{_forward_jit.40} parent=0 // pred_region
    _
  $region9: #{_forward_jit.40} parent=0 // pred_fallthru
    _
  // Predicated region
  $region10: #{_forward_jit.40} parent=0 // pred_check
    _
  $region11: #{_forward_jit.40} parent=0 // pred_check_branch
    %13 = sbr.rel (0) target = $region13
  $region12: #{_forward_jit.40} parent=0 // pred_region
    _
  $region13: #{_forward_jit.40} parent=0 // pred_fallthru
    _
  %v15 = vld [vmem:[%s1] sm:$0xff]
  %v16 = vld [vmem:[%s1 + $0x8] sm:$0xff]
  %v17 = vld [vmem:[%s0] sm:$0xf]
  %v18 = vld [vmem:[%s0 + $0x4] sm:$0xf]
  %v19 = vunpack.c.l.bf16 %v17
  %v20 = vunpack.c.l.bf16 %v18
  %22 = vset.pattern.permute.xlu0 0
  %23 = vperm.xlu0 %22, %v15
  %v24 = vpop.permute.xlu0 %23
  %27 = vset.pattern.permute.xlu0 0
  %28 = vperm.xlu0 %27, %v16
  %v29 = vpop.permute.xlu0 %28
  %v31 = vmul.f32 %v19, %v24
  %v32 = vmul.f32 %v20, %v29
  %s33 = scalar_lea.vmem %s0, 8
  %v34 = vld [vmem:[%s33] sm:$0xf]
  %v35 = vld [vmem:[%s33 + $0x4] sm:$0xf]
  %v36 = vunpack.c.l.bf16 %v34
  %v37 = vunpack.c.l.bf16 %v35
  %38 = vset.pattern.permute.xlu0 1
  %39 = vperm.xlu0 %38, %v15
  %v40 = vpop.permute.xlu0 %39
  %42 = vset.pattern.permute.xlu0 1
  %43 = vperm.xlu0 %42, %v16
  %v44 = vpop.permute.xlu0 %43
  %v46 = vmul.f32 %v36, %v40
  %v47 = vmul.f32 %v37, %v44
  %v48 = vadd.f32 %v31, %v46
  %v49 = vadd.f32 %v32, %v47
  %s50 = scalar_lea.vmem %s0, 16
  %v51 = vld [vmem:[%s50] sm:$0xf]
  %v52 = vld [vmem:[%s50 + $0x4] sm:$0xf]
  %v53 = vunpack.c.l.bf16 %v51
  %v54 = vunpack.c.l.bf16 %v52
  %55 = vset.pattern.permute.xlu0 2
  %56 = vperm.xlu0 %55, %v15
  %v57 = vpop.permute.xlu0 %56
  %59 = vset.pattern.permute.xlu0 2
  %60 = vperm.xlu0 %59, %v16
  %v61 = vpop.permute.xlu0 %60
  %v63 = vmul.f32 %v53, %v57
  %v64 = vmul.f32 %v54, %v61
  %v65 = vadd.f32 %v48, %v63
  %v66 = vadd.f32 %v49, %v64
  %s67 = scalar_lea.vmem %s0, 24
  %v68 = vld [vmem:[%s67] sm:$0xf]
  %v69 = vld [vmem:[%s67 + $0x4] sm:$0xf]
  %v70 = vunpack.c.l.bf16 %v68
  %v71 = vunpack.c.l.bf16 %v69
  %72 = vset.pattern.permute.xlu0 3
  %73 = vperm.xlu0 %72, %v15
  %v74 = vpop.permute.xlu0 %73
  %76 = vset.pattern.permute.xlu0 3
  %77 = vperm.xlu0 %76, %v16
  %v78 = vpop.permute.xlu0 %77
  %v80 = vmul.f32 %v70, %v74
  %v81 = vmul.f32 %v71, %v78
  %v82 = vadd.f32 %v65, %v80
  %v83 = vadd.f32 %v66, %v81
  %s84 = scalar_lea.vmem %s0, 32
  %v85 = vld [vmem:[%s84] sm:$0xf]
  %v86 = vld [vmem:[%s84 + $0x4] sm:$0xf]
  %v87 = vunpack.c.l.bf16 %v85
  %v88 = vunpack.c.l.bf16 %v86
  %89 = vset.pattern.permute.xlu0 4
  %90 = vperm.xlu0 %89, %v15
  %v91 = vpop.permute.xlu0 %90
  %93 = vset.pattern.permute.xlu0 4
  %94 = vperm.xlu0 %93, %v16
  %v95 = vpop.permute.xlu0 %94
  %v97 = vmul.f32 %v87, %v91
  %v98 = vmul.f32 %v88, %v95
  %v99 = vadd.f32 %v82, %v97
  %v100 = vadd.f32 %v83, %v98
  %s101 = scalar_lea.vmem %s0, 40
  %v102 = vld [vmem:[%s101] sm:$0xf]
  %v103 = vld [vmem:[%s101 + $0x4] sm:$0xf]
  %v104 = vunpack.c.l.bf16 %v102
  %v105 = vunpack.c.l.bf16 %v103
  %106 = vset.pattern.permute.xlu0 5
  %107 = vperm.xlu0 %106, %v15
  %v108 = vpop.permute.xlu0 %107
  %110 = vset.pattern.permute.xlu0 5
  %111 = vperm.xlu0 %110, %v16
  %v112 = vpop.permute.xlu0 %111
  %v114 = vmul.f32 %v104, %v108
  %v115 = vmul.f32 %v105, %v112
  %v116 = vadd.f32 %v99, %v114
  %v117 = vadd.f32 %v100, %v115
  %s118 = scalar_lea.vmem %s0, 48
  %v119 = vld [vmem:[%s118] sm:$0xf]
  %v120 = vld [vmem:[%s118 + $0x4] sm:$0xf]
  %v121 = vunpack.c.l.bf16 %v119
  %v122 = vunpack.c.l.bf16 %v120
  %123 = vset.pattern.permute.xlu0 6
  %124 = vperm.xlu0 %123, %v15
  %v125 = vpop.permute.xlu0 %124
  %127 = vset.pattern.permute.xlu0 6
  %128 = vperm.xlu0 %127, %v16
  %v129 = vpop.permute.xlu0 %128
  %v131 = vmul.f32 %v121, %v125
  %v132 = vmul.f32 %v122, %v129
  %v133 = vadd.f32 %v116, %v131
  %v134 = vadd.f32 %v117, %v132
  %s135 = scalar_lea.vmem %s0, 56
  %v136 = vld [vmem:[%s135] sm:$0xf]
  %v137 = vld [vmem:[%s135 + $0x4] sm:$0xf]
  %v138 = vunpack.c.l.bf16 %v136
  %v139 = vunpack.c.l.bf16 %v137
  %140 = vset.pattern.permute.xlu0 7
  %141 = vperm.xlu0 %140, %v15
  %v142 = vpop.permute.xlu0 %141
  %144 = vset.pattern.permute.xlu0 7
  %145 = vperm.xlu0 %144, %v16
  %v146 = vpop.permute.xlu0 %145
  %v148 = vmul.f32 %v138, %v142
  %v149 = vmul.f32 %v139, %v146
  %v150 = vadd.f32 %v133, %v148
  %v151 = vadd.f32 %v134, %v149
  %s152 = scalar_lea.vmem %s0, 64
  %v153 = vld [vmem:[%s152] sm:$0xf]
  %v154 = vld [vmem:[%s152 + $0x4] sm:$0xf]
  %v155 = vunpack.c.l.bf16 %v153
  %v156 = vunpack.c.l.bf16 %v154
  %157 = vset.pattern.permute.xlu0 8
  %158 = vperm.xlu0 %157, %v15
  %v159 = vpop.permute.xlu0 %158
  %161 = vset.pattern.permute.xlu0 8
  %162 = vperm.xlu0 %161, %v16
  %v163 = vpop.permute.xlu0 %162
  %v165 = vmul.f32 %v155, %v159
  %v166 = vmul.f32 %v156, %v163
  %v167 = vadd.f32 %v150, %v165
  %v168 = vadd.f32 %v151, %v166
  %v169 = vld [vmem:[%s2] sm:$0xf]
  %v170 = vld [vmem:[%s2 + $0x4] sm:$0xf]
  %v171 = vpack.c.bf16 %v168, %v167
  %v174 = vunpack.c.l.b16 %v169
  %v175 = vunpack.c.l.b16 %v170
  %v176 = vpack.c.b16 %v175, %v174
  %vm177 = vcmask 130048
  %v179 = vsel %vm177, %v176, 0
  %181 = vmatprep.subr.bf16.mxu0 0
  %182 = vmatpush1.bf16.msra.mxu0 %v171
  %183 = vmatprep.subr.bf16.mxu0 0
  %184 = vmatpush1.bf16.msra.mxu0 0
  %185 = vmatprep.subr.bf16.mxu0 0
  %186 = vmatpush1.bf16.msra.mxu0 0
  %187 = vmatprep.subr.bf16.mxu0 0
  %188 = vmatpush1.bf16.msra.mxu0 0
  %189 = vmatprep.subr.bf16.mxu0 0
  %190 = vmatpush1.bf16.msra.mxu0 0
  %191 = vmatprep.subr.bf16.mxu0 0
  %192 = vmatpush1.bf16.msra.mxu0 0
  %193 = vmatprep.subr.bf16.mxu0 0
  %194 = vmatpush1.bf16.msra.mxu0 0
  %195 = vmatprep.subr.bf16.mxu0 0
  %196 = vmatpush1.bf16.msra.mxu0 0
  %197 = vmatprep.subr.bf16.mxu0 0
  %198 = vmatpush1.bf16.msra.mxu0 0
  %199 = vmatprep.subr.bf16.mxu0 0
  %200 = vmatpush1.bf16.msra.mxu0 0
  %201 = vmatprep.subr.bf16.mxu0 0
  %202 = vmatpush1.bf16.msra.mxu0 0
  %203 = vmatprep.subr.bf16.mxu0 0
  %204 = vmatpush1.bf16.msra.mxu0 0
  %205 = vmatprep.subr.bf16.mxu0 0
  %206 = vmatpush1.bf16.msra.mxu0 0
  %207 = vmatprep.subr.bf16.mxu0 0
  %208 = vmatpush1.bf16.msra.mxu0 0
  %209 = vmatprep.subr.bf16.mxu0 0
  %210 = vmatpush1.bf16.msra.mxu0 0
  %211 = vmatprep.subr.bf16.mxu0 0
  %212 = vmatpush1.bf16.msra.mxu0 0
  %213 = vmatprep.mubr.bf16.mxu0 0
  %214 = vmatmul.mubr.bf16.gmra.mrb[0].mxu0 %v179
  %v215 = vpop.f32.mrb[0].mxu0
  %v216 = vadd.f32 0.0, %v215
  %v217 = vpop.f32.mrb[0].mxu0
  %v218 = vpop.f32.mrb[0].mxu0
  %v219 = vadd.f32 0.0, %v218
  %v220 = vpop.f32.mrb[0].mxu0
  %221 = vdwg.mxu0
  %vm222 = vcmask 64512
  %v223 = vsel %vm222, %v216, 0.0
  %224 = vadd.xlane.f32.xlu0 %v223
  %v225 = vpop.xlane.xlu0 %224
  %v226 = vsel %vm222, %v219, 0.0
  %227 = vadd.xlane.f32.xlu0 %v226
  %v228 = vpop.xlane.xlu0 %227
  %v229 = vmul.f32 %v216, %v216
  %v230 = vmul.f32 %v219, %v219
  %v231 = vsel %vm222, %v229, 0.0
  %232 = vadd.xlane.f32.xlu0 %v231
  %v233 = vpop.xlane.xlu0 %232
  %v234 = vsel %vm222, %v230, 0.0
  %235 = vadd.xlane.f32.xlu0 %v234
  %v236 = vpop.xlane.xlu0 %235
  %v237 = vmul.f32 %v225, 0.125
  %v238 = vmul.f32 %v228, 0.125
  %v239 = vmul.f32 %v233, 0.125
  %v240 = vmul.f32 %v236, 0.125
  %v241 = vmul.f32 %v237, %v237
  %v242 = vmul.f32 %v238, %v238
  %v243 = vsub.f32 %v239, %v241
  %v244 = vsub.f32 %v240, %v242
  %v245 = vmax.f32 %v243, 0.0
  %v246 = vmax.f32 %v244, 0.0
  %v247 = vsub.f32 %v216, %v237
  %v248 = vsub.f32 %v219, %v238
  %v249 = vadd.f32 %v245, 1e-05
  %v250 = vadd.f32 %v246, 1e-05
  %v251 = vrsqrt.pop %v249
  %v252 = vrsqrt.pop %v250
  %v253 = vmul.f32 %v247, %v251
  %v254 = vmul.f32 %v248, %v252
  %255 = vst.msk [vmem:[%s3] sm:$0xff] %vm222, %v253
  %256 = vst.msk [vmem:[%s3 + $0x8] sm:$0xff] %vm222, %v254
  // Predicated region
  $region14: #{_forward_jit.40} parent=0 // pred_check
    _
  $region15: #{_forward_jit.40} parent=0 // pred_check_branch
    %258 = sbr.rel (0) target = $region17
  $region16: #{_forward_jit.40} parent=0 // pred_region
    _
  $region17: #{_forward_jit.40} parent=0 // pred_fallthru
    _
  // Predicated region
  $region18: #{_forward_jit.40} parent=0 // pred_check
    _
  $region19: #{_forward_jit.40} parent=0 // pred_check_branch
    %260 = sbr.rel (0) target = $region21
  $region20: #{_forward_jit.40} parent=0 // pred_region
    _
  $region21: #{_forward_jit.40} parent=0 // pred_fallthru
    _

// kernel: _forward_jit.42
$region0: #{_forward_jit.42}
  #allocation0 [shape = 'u32[]', space=smem, size = 0x4, offset = 0x4, fixed_abs, tag = 'smem constant byte address 0x4 - core index']
  #allocation1 [shape = 'u32[144,128]{1,0:T(1,128)}', space=vmem, size = 0x12000, scoped, tag = 'internal scratch']
  %s0 = inlined_call_operand.vmem [shape: bf16[25,16,8], index: 0, kind: input, shape index: {}]
  %s1 = inlined_call_operand.vmem [shape: f32[16,25], index: 1, kind: input, shape index: {}]
  %s2 = inlined_call_operand.vmem [shape: bf16[16,16], index: 2, kind: input, shape index: {}]
  %s3 = inlined_call_operand.vmem [shape: f32[16,8], index: 3, kind: output, shape index: {}]
  %s4 = sld [smem:[#allocation0]]
  $region22: #{_forward_jit.42} parent=0
    _
  %s6 = ssub.s32 1, %s4
  %s7 = scalar_select 0, %s6, %s4
  // Predicated region
  $region2: #{_forward_jit.42} parent=0 // pred_check
    _
  $region3: #{_forward_jit.42} parent=0 // pred_check_branch
    %9 = sbr.rel (0) target = $region5
  $region4: #{_forward_jit.42} parent=0 // pred_region
    _
  $region5: #{_forward_jit.42} parent=0 // pred_fallthru
    _
  // Predicated region
  $region6: #{_forward_jit.42} parent=0 // pred_check
    _
  $region7: #{_forward_jit.42} parent=0 // pred_check_branch
    %11 = sbr.rel (0) target = $region9
  $region8: #{_forward_jit.42} parent=0 // pred_region
    _
  $region9: #{_forward_jit.42} parent=0 // pred_fallthru
    _
  // Predicated region
  $region10: #{_forward_jit.42} parent=0 // pred_check
    _
  $region11: #{_forward_jit.42} parent=0 // pred_check_branch
    %13 = sbr.rel (0) target = $region13
  $region12: #{_forward_jit.42} parent=0 // pred_region
    _
  $region13: #{_forward_jit.42} parent=0 // pred_fallthru
    _
  %v15 = vld [vmem:[%s1] sm:$0xff]
  %v16 = vld [vmem:[%s1 + $0x8] sm:$0xff]
  %v17 = vld [vmem:[%s0] sm:$0xf]
  %v18 = vld [vmem:[%s0 + $0x4] sm:$0xf]
  %v19 = vunpack.c.l.bf16 %v17
  %v20 = vunpack.c.l.bf16 %v18
  %22 = vset.pattern.permute.xlu0 0
  %23 = vperm.xlu0 %22, %v15
  %v24 = vpop.permute.xlu0 %23
  %27 = vset.pattern.permute.xlu0 0
  %28 = vperm.xlu0 %27, %v16
  %v29 = vpop.permute.xlu0 %28
  %v31 = vmul.f32 %v19, %v24
  %v32 = vmul.f32 %v20, %v29
  %s33 = scalar_lea.vmem %s0, 8
  %v34 = vld [vmem:[%s33] sm:$0xf]
  %v35 = vld [vmem:[%s33 + $0x4] sm:$0xf]
  %v36 = vunpack.c.l.bf16 %v34
  %v37 = vunpack.c.l.bf16 %v35
  %38 = vset.pattern.permute.xlu0 1
  %39 = vperm.xlu0 %38, %v15
  %v40 = vpop.permute.xlu0 %39
  %42 = vset.pattern.permute.xlu0 1
  %43 = vperm.xlu0 %42, %v16
  %v44 = vpop.permute.xlu0 %43
  %v46 = vmul.f32 %v36, %v40
  %v47 = vmul.f32 %v37, %v44
  %v48 = vadd.f32 %v31, %v46
  %v49 = vadd.f32 %v32, %v47
  %s50 = scalar_lea.vmem %s0, 16
  %v51 = vld [vmem:[%s50] sm:$0xf]
  %v52 = vld [vmem:[%s50 + $0x4] sm:$0xf]
  %v53 = vunpack.c.l.bf16 %v51
  %v54 = vunpack.c.l.bf16 %v52
  %55 = vset.pattern.permute.xlu0 2
  %56 = vperm.xlu0 %55, %v15
  %v57 = vpop.permute.xlu0 %56
  %59 = vset.pattern.permute.xlu0 2
  %60 = vperm.xlu0 %59, %v16
  %v61 = vpop.permute.xlu0 %60
  %v63 = vmul.f32 %v53, %v57
  %v64 = vmul.f32 %v54, %v61
  %v65 = vadd.f32 %v48, %v63
  %v66 = vadd.f32 %v49, %v64
  %s67 = scalar_lea.vmem %s0, 24
  %v68 = vld [vmem:[%s67] sm:$0xf]
  %v69 = vld [vmem:[%s67 + $0x4] sm:$0xf]
  %v70 = vunpack.c.l.bf16 %v68
  %v71 = vunpack.c.l.bf16 %v69
  %72 = vset.pattern.permute.xlu0 3
  %73 = vperm.xlu0 %72, %v15
  %v74 = vpop.permute.xlu0 %73
  %76 = vset.pattern.permute.xlu0 3
  %77 = vperm.xlu0 %76, %v16
  %v78 = vpop.permute.xlu0 %77
  %v80 = vmul.f32 %v70, %v74
  %v81 = vmul.f32 %v71, %v78
  %v82 = vadd.f32 %v65, %v80
  %v83 = vadd.f32 %v66, %v81
  %s84 = scalar_lea.vmem %s0, 32
  %v85 = vld [vmem:[%s84] sm:$0xf]
  %v86 = vld [vmem:[%s84 + $0x4] sm:$0xf]
  %v87 = vunpack.c.l.bf16 %v85
  %v88 = vunpack.c.l.bf16 %v86
  %89 = vset.pattern.permute.xlu0 4
  %90 = vperm.xlu0 %89, %v15
  %v91 = vpop.permute.xlu0 %90
  %93 = vset.pattern.permute.xlu0 4
  %94 = vperm.xlu0 %93, %v16
  %v95 = vpop.permute.xlu0 %94
  %v97 = vmul.f32 %v87, %v91
  %v98 = vmul.f32 %v88, %v95
  %v99 = vadd.f32 %v82, %v97
  %v100 = vadd.f32 %v83, %v98
  %s101 = scalar_lea.vmem %s0, 40
  %v102 = vld [vmem:[%s101] sm:$0xf]
  %v103 = vld [vmem:[%s101 + $0x4] sm:$0xf]
  %v104 = vunpack.c.l.bf16 %v102
  %v105 = vunpack.c.l.bf16 %v103
  %106 = vset.pattern.permute.xlu0 5
  %107 = vperm.xlu0 %106, %v15
  %v108 = vpop.permute.xlu0 %107
  %110 = vset.pattern.permute.xlu0 5
  %111 = vperm.xlu0 %110, %v16
  %v112 = vpop.permute.xlu0 %111
  %v114 = vmul.f32 %v104, %v108
  %v115 = vmul.f32 %v105, %v112
  %v116 = vadd.f32 %v99, %v114
  %v117 = vadd.f32 %v100, %v115
  %s118 = scalar_lea.vmem %s0, 48
  %v119 = vld [vmem:[%s118] sm:$0xf]
  %v120 = vld [vmem:[%s118 + $0x4] sm:$0xf]
  %v121 = vunpack.c.l.bf16 %v119
  %v122 = vunpack.c.l.bf16 %v120
  %123 = vset.pattern.permute.xlu0 6
  %124 = vperm.xlu0 %123, %v15
  %v125 = vpop.permute.xlu0 %124
  %127 = vset.pattern.permute.xlu0 6
  %128 = vperm.xlu0 %127, %v16
  %v129 = vpop.permute.xlu0 %128
  %v131 = vmul.f32 %v121, %v125
  %v132 = vmul.f32 %v122, %v129
  %v133 = vadd.f32 %v116, %v131
  %v134 = vadd.f32 %v117, %v132
  %s135 = scalar_lea.vmem %s0, 56
  %v136 = vld [vmem:[%s135] sm:$0xf]
  %v137 = vld [vmem:[%s135 + $0x4] sm:$0xf]
  %v138 = vunpack.c.l.bf16 %v136
  %v139 = vunpack.c.l.bf16 %v137
  %140 = vset.pattern.permute.xlu0 7
  %141 = vperm.xlu0 %140, %v15
  %v142 = vpop.permute.xlu0 %141
  %144 = vset.pattern.permute.xlu0 7
  %145 = vperm.xlu0 %144, %v16
  %v146 = vpop.permute.xlu0 %145
  %v148 = vmul.f32 %v138, %v142
  %v149 = vmul.f32 %v139, %v146
  %v150 = vadd.f32 %v133, %v148
  %v151 = vadd.f32 %v134, %v149
  %s152 = scalar_lea.vmem %s0, 64
  %v153 = vld [vmem:[%s152] sm:$0xf]
  %v154 = vld [vmem:[%s152 + $0x4] sm:$0xf]
  %v155 = vunpack.c.l.bf16 %v153
  %v156 = vunpack.c.l.bf16 %v154
  %157 = vset.pattern.permute.xlu0 8
  %158 = vperm.xlu0 %157, %v15
  %v159 = vpop.permute.xlu0 %158
  %161 = vset.pattern.permute.xlu0 8
  %162 = vperm.xlu0 %161, %v16
  %v163 = vpop.permute.xlu0 %162
  %v165 = vmul.f32 %v155, %v159
  %v166 = vmul.f32 %v156, %v163
  %v167 = vadd.f32 %v150, %v165
  %v168 = vadd.f32 %v151, %v166
  %s169 = scalar_lea.vmem %s0, 72
  %v170 = vld [vmem:[%s169] sm:$0xf]
  %v171 = vld [vmem:[%s169 + $0x4] sm:$0xf]
  %v172 = vunpack.c.l.bf16 %v170
  %v173 = vunpack.c.l.bf16 %v171
  %174 = vset.pattern.permute.xlu0 9
  %175 = vperm.xlu0 %174, %v15
  %v176 = vpop.permute.xlu0 %175
  %178 = vset.pattern.permute.xlu0 9
  %179 = vperm.xlu0 %178, %v16
  %v180 = vpop.permute.xlu0 %179
  %v182 = vmul.f32 %v172, %v176
  %v183 = vmul.f32 %v173, %v180
  %v184 = vadd.f32 %v167, %v182
  %v185 = vadd.f32 %v168, %v183
  %s186 = scalar_lea.vmem %s0, 80
  %v187 = vld [vmem:[%s186] sm:$0xf]
  %v188 = vld [vmem:[%s186 + $0x4] sm:$0xf]
  %v189 = vunpack.c.l.bf16 %v187
  %v190 = vunpack.c.l.bf16 %v188
  %191 = vset.pattern.permute.xlu0 10
  %192 = vperm.xlu0 %191, %v15
  %v193 = vpop.permute.xlu0 %192
  %195 = vset.pattern.permute.xlu0 10
  %196 = vperm.xlu0 %195, %v16
  %v197 = vpop.permute.xlu0 %196
  %v199 = vmul.f32 %v189, %v193
  %v200 = vmul.f32 %v190, %v197
  %v201 = vadd.f32 %v184, %v199
  %v202 = vadd.f32 %v185, %v200
  %s203 = scalar_lea.vmem %s0, 88
  %v204 = vld [vmem:[%s203] sm:$0xf]
  %v205 = vld [vmem:[%s203 + $0x4] sm:$0xf]
  %v206 = vunpack.c.l.bf16 %v204
  %v207 = vunpack.c.l.bf16 %v205
  %208 = vset.pattern.permute.xlu0 11
  %209 = vperm.xlu0 %208, %v15
  %v210 = vpop.permute.xlu0 %209
  %212 = vset.pattern.permute.xlu0 11
  %213 = vperm.xlu0 %212, %v16
  %v214 = vpop.permute.xlu0 %213
  %v216 = vmul.f32 %v206, %v210
  %v217 = vmul.f32 %v207, %v214
  %v218 = vadd.f32 %v201, %v216
  %v219 = vadd.f32 %v202, %v217
  %s220 = scalar_lea.vmem %s0, 96
  %v221 = vld [vmem:[%s220] sm:$0xf]
  %v222 = vld [vmem:[%s220 + $0x4] sm:$0xf]
  %v223 = vunpack.c.l.bf16 %v221
  %v224 = vunpack.c.l.bf16 %v222
  %225 = vset.pattern.permute.xlu0 12
  %226 = vperm.xlu0 %225, %v15
  %v227 = vpop.permute.xlu0 %226
  %229 = vset.pattern.permute.xlu0 12
  %230 = vperm.xlu0 %229, %v16
  %v231 = vpop.permute.xlu0 %230
  %v233 = vmul.f32 %v223, %v227
  %v234 = vmul.f32 %v224, %v231
  %v235 = vadd.f32 %v218, %v233
  %v236 = vadd.f32 %v219, %v234
  %s237 = scalar_lea.vmem %s0, 104
  %v238 = vld [vmem:[%s237] sm:$0xf]
  %v239 = vld [vmem:[%s237 + $0x4] sm:$0xf]
  %v240 = vunpack.c.l.bf16 %v238
  %v241 = vunpack.c.l.bf16 %v239
  %242 = vset.pattern.permute.xlu0 13
  %243 = vperm.xlu0 %242, %v15
  %v244 = vpop.permute.xlu0 %243
  %246 = vset.pattern.permute.xlu0 13
  %247 = vperm.xlu0 %246, %v16
  %v248 = vpop.permute.xlu0 %247
  %v250 = vmul.f32 %v240, %v244
  %v251 = vmul.f32 %v241, %v248
  %v252 = vadd.f32 %v235, %v250
  %v253 = vadd.f32 %v236, %v251
  %s254 = scalar_lea.vmem %s0, 112
  %v255 = vld [vmem:[%s254] sm:$0xf]
  %v256 = vld [vmem:[%s254 + $0x4] sm:$0xf]
  %v257 = vunpack.c.l.bf16 %v255
  %v258 = vunpack.c.l.bf16 %v256
  %259 = vset.pattern.permute.xlu0 14
  %260 = vperm.xlu0 %259, %v15
  %v261 = vpop.permute.xlu0 %260
  %263 = vset.pattern.permute.xlu0 14
  %264 = vperm.xlu0 %263, %v16
  %v265 = vpop.permute.xlu0 %264
  %v267 = vmul.f32 %v257, %v261
  %v268 = vmul.f32 %v258, %v265
  %v269 = vadd.f32 %v252, %v267
  %v270 = vadd.f32 %v253, %v268
  %s271 = scalar_lea.vmem %s0, 120
  %v272 = vld [vmem:[%s271] sm:$0xf]
  %v273 = vld [vmem:[%s271 + $0x4] sm:$0xf]
  %v274 = vunpack.c.l.bf16 %v272
  %v275 = vunpack.c.l.bf16 %v273
  %276 = vset.pattern.permute.xlu0 15
  %277 = vperm.xlu0 %276, %v15
  %v278 = vpop.permute.xlu0 %277
  %280 = vset.pattern.permute.xlu0 15
  %281 = vperm.xlu0 %280, %v16
  %v282 = vpop.permute.xlu0 %281
  %v284 = vmul.f32 %v274, %v278
  %v285 = vmul.f32 %v275, %v282
  %v286 = vadd.f32 %v269, %v284
  %v287 = vadd.f32 %v270, %v285
  %s288 = scalar_lea.vmem %s0, 128
  %v289 = vld [vmem:[%s288] sm:$0xf]
  %v290 = vld [vmem:[%s288 + $0x4] sm:$0xf]
  %v291 = vunpack.c.l.bf16 %v289
  %v292 = vunpack.c.l.bf16 %v290
  %293 = vset.pattern.permute.xlu0 16
  %294 = vperm.xlu0 %293, %v15
  %v295 = vpop.permute.xlu0 %294
  %297 = vset.pattern.permute.xlu0 16
  %298 = vperm.xlu0 %297, %v16
  %v299 = vpop.permute.xlu0 %298
  %v301 = vmul.f32 %v291, %v295
  %v302 = vmul.f32 %v292, %v299
  %v303 = vadd.f32 %v286, %v301
  %v304 = vadd.f32 %v287, %v302
  %s305 = scalar_lea.vmem %s0, 136
  %v306 = vld [vmem:[%s305] sm:$0xf]
  %v307 = vld [vmem:[%s305 + $0x4] sm:$0xf]
  %v308 = vunpack.c.l.bf16 %v306
  %v309 = vunpack.c.l.bf16 %v307
  %310 = vset.pattern.permute.xlu0 17
  %311 = vperm.xlu0 %310, %v15
  %v312 = vpop.permute.xlu0 %311
  %314 = vset.pattern.permute.xlu0 17
  %315 = vperm.xlu0 %314, %v16
  %v316 = vpop.permute.xlu0 %315
  %v318 = vmul.f32 %v308, %v312
  %v319 = vmul.f32 %v309, %v316
  %v320 = vadd.f32 %v303, %v318
  %v321 = vadd.f32 %v304, %v319
  %s322 = scalar_lea.vmem %s0, 144
  %v323 = vld [vmem:[%s322] sm:$0xf]
  %v324 = vld [vmem:[%s322 + $0x4] sm:$0xf]
  %v325 = vunpack.c.l.bf16 %v323
  %v326 = vunpack.c.l.bf16 %v324
  %327 = vset.pattern.permute.xlu0 18
  %328 = vperm.xlu0 %327, %v15
  %v329 = vpop.permute.xlu0 %328
  %331 = vset.pattern.permute.xlu0 18
  %332 = vperm.xlu0 %331, %v16
  %v333 = vpop.permute.xlu0 %332
  %v335 = vmul.f32 %v325, %v329
  %v336 = vmul.f32 %v326, %v333
  %v337 = vadd.f32 %v320, %v335
  %v338 = vadd.f32 %v321, %v336
  %s339 = scalar_lea.vmem %s0, 152
  %v340 = vld [vmem:[%s339] sm:$0xf]
  %v341 = vld [vmem:[%s339 + $0x4] sm:$0xf]
  %v342 = vunpack.c.l.bf16 %v340
  %v343 = vunpack.c.l.bf16 %v341
  %344 = vset.pattern.permute.xlu0 19
  %345 = vperm.xlu0 %344, %v15
  %v346 = vpop.permute.xlu0 %345
  %348 = vset.pattern.permute.xlu0 19
  %349 = vperm.xlu0 %348, %v16
  %v350 = vpop.permute.xlu0 %349
  %v352 = vmul.f32 %v342, %v346
  %v353 = vmul.f32 %v343, %v350
  %v354 = vadd.f32 %v337, %v352
  %v355 = vadd.f32 %v338, %v353
  %s356 = scalar_lea.vmem %s0, 160
  %v357 = vld [vmem:[%s356] sm:$0xf]
  %v358 = vld [vmem:[%s356 + $0x4] sm:$0xf]
  %v359 = vunpack.c.l.bf16 %v357
  %v360 = vunpack.c.l.bf16 %v358
  %361 = vset.pattern.permute.xlu0 20
  %362 = vperm.xlu0 %361, %v15
  %v363 = vpop.permute.xlu0 %362
  %365 = vset.pattern.permute.xlu0 20
  %366 = vperm.xlu0 %365, %v16
  %v367 = vpop.permute.xlu0 %366
  %v369 = vmul.f32 %v359, %v363
  %v370 = vmul.f32 %v360, %v367
  %v371 = vadd.f32 %v354, %v369
  %v372 = vadd.f32 %v355, %v370
  %s373 = scalar_lea.vmem %s0, 168
  %v374 = vld [vmem:[%s373] sm:$0xf]
  %v375 = vld [vmem:[%s373 + $0x4] sm:$0xf]
  %v376 = vunpack.c.l.bf16 %v374
  %v377 = vunpack.c.l.bf16 %v375
  %378 = vset.pattern.permute.xlu0 21
  %379 = vperm.xlu0 %378, %v15
  %v380 = vpop.permute.xlu0 %379
  %382 = vset.pattern.permute.xlu0 21
  %383 = vperm.xlu0 %382, %v16
  %v384 = vpop.permute.xlu0 %383
  %v386 = vmul.f32 %v376, %v380
  %v387 = vmul.f32 %v377, %v384
  %v388 = vadd.f32 %v371, %v386
  %v389 = vadd.f32 %v372, %v387
  %s390 = scalar_lea.vmem %s0, 176
  %v391 = vld [vmem:[%s390] sm:$0xf]
  %v392 = vld [vmem:[%s390 + $0x4] sm:$0xf]
  %v393 = vunpack.c.l.bf16 %v391
  %v394 = vunpack.c.l.bf16 %v392
  %395 = vset.pattern.permute.xlu0 22
  %396 = vperm.xlu0 %395, %v15
  %v397 = vpop.permute.xlu0 %396
  %399 = vset.pattern.permute.xlu0 22
  %400 = vperm.xlu0 %399, %v16
  %v401 = vpop.permute.xlu0 %400
  %v403 = vmul.f32 %v393, %v397
  %v404 = vmul.f32 %v394, %v401
  %v405 = vadd.f32 %v388, %v403
  %v406 = vadd.f32 %v389, %v404
  %s407 = scalar_lea.vmem %s0, 184
  %v408 = vld [vmem:[%s407] sm:$0xf]
  %v409 = vld [vmem:[%s407 + $0x4] sm:$0xf]
  %v410 = vunpack.c.l.bf16 %v408
  %v411 = vunpack.c.l.bf16 %v409
  %412 = vset.pattern.permute.xlu0 23
  %413 = vperm.xlu0 %412, %v15
  %v414 = vpop.permute.xlu0 %413
  %416 = vset.pattern.permute.xlu0 23
  %417 = vperm.xlu0 %416, %v16
  %v418 = vpop.permute.xlu0 %417
  %v420 = vmul.f32 %v410, %v414
  %v421 = vmul.f32 %v411, %v418
  %v422 = vadd.f32 %v405, %v420
  %v423 = vadd.f32 %v406, %v421
  %s424 = scalar_lea.vmem %s0, 192
  %v425 = vld [vmem:[%s424] sm:$0xf]
  %v426 = vld [vmem:[%s424 + $0x4] sm:$0xf]
  %v427 = vunpack.c.l.bf16 %v425
  %v428 = vunpack.c.l.bf16 %v426
  %429 = vset.pattern.permute.xlu0 24
  %430 = vperm.xlu0 %429, %v15
  %v431 = vpop.permute.xlu0 %430
  %433 = vset.pattern.permute.xlu0 24
  %434 = vperm.xlu0 %433, %v16
  %v435 = vpop.permute.xlu0 %434
  %v437 = vmul.f32 %v427, %v431
  %v438 = vmul.f32 %v428, %v435
  %v439 = vadd.f32 %v422, %v437
  %v440 = vadd.f32 %v423, %v438
  %v441 = vld [vmem:[%s2] sm:$0xf]
  %v442 = vld [vmem:[%s2 + $0x4] sm:$0xf]
  %v443 = vpack.c.bf16 %v440, %v439
  %v446 = vunpack.c.l.b16 %v441
  %v447 = vunpack.c.l.b16 %v442
  %v448 = vpack.c.b16 %v447, %v446
  %vm449 = vcmask 130048
  %v451 = vsel %vm449, %v448, 0
  %453 = vmatprep.subr.bf16.mxu0 0
  %454 = vmatpush1.bf16.msra.mxu0 %v443
  %455 = vmatprep.subr.bf16.mxu0 0
  %456 = vmatpush1.bf16.msra.mxu0 0
  %457 = vmatprep.subr.bf16.mxu0 0
  %458 = vmatpush1.bf16.msra.mxu0 0
  %459 = vmatprep.subr.bf16.mxu0 0
  %460 = vmatpush1.bf16.msra.mxu0 0
  %461 = vmatprep.subr.bf16.mxu0 0
  %462 = vmatpush1.bf16.msra.mxu0 0
  %463 = vmatprep.subr.bf16.mxu0 0
  %464 = vmatpush1.bf16.msra.mxu0 0
  %465 = vmatprep.subr.bf16.mxu0 0
  %466 = vmatpush1.bf16.msra.mxu0 0
  %467 = vmatprep.subr.bf16.mxu0 0
  %468 = vmatpush1.bf16.msra.mxu0 0
  %469 = vmatprep.subr.bf16.mxu0 0
  %470 = vmatpush1.bf16.msra.mxu0 0
  %471 = vmatprep.subr.bf16.mxu0 0
  %472 = vmatpush1.bf16.msra.mxu0 0
  %473 = vmatprep.subr.bf16.mxu0 0
  %474 = vmatpush1.bf16.msra.mxu0 0
  %475 = vmatprep.subr.bf16.mxu0 0
  %476 = vmatpush1.bf16.msra.mxu0 0
  %477 = vmatprep.subr.bf16.mxu0 0
  %478 = vmatpush1.bf16.msra.mxu0 0
  %479 = vmatprep.subr.bf16.mxu0 0
  %480 = vmatpush1.bf16.msra.mxu0 0
  %481 = vmatprep.subr.bf16.mxu0 0
  %482 = vmatpush1.bf16.msra.mxu0 0
  %483 = vmatprep.subr.bf16.mxu0 0
  %484 = vmatpush1.bf16.msra.mxu0 0
  %485 = vmatprep.mubr.bf16.mxu0 0
  %486 = vmatmul.mubr.bf16.gmra.mrb[0].mxu0 %v451
  %v487 = vpop.f32.mrb[0].mxu0
  %v488 = vadd.f32 0.0, %v487
  %v489 = vpop.f32.mrb[0].mxu0
  %v490 = vpop.f32.mrb[0].mxu0
  %v491 = vadd.f32 0.0, %v490
  %v492 = vpop.f32.mrb[0].mxu0
  %493 = vdwg.mxu0
  %vm494 = vcmask 64512
  %v495 = vsel %vm494, %v488, 0.0
  %496 = vadd.xlane.f32.xlu0 %v495
  %v497 = vpop.xlane.xlu0 %496
  %v498 = vsel %vm494, %v491, 0.0
  %499 = vadd.xlane.f32.xlu0 %v498
  %v500 = vpop.xlane.xlu0 %499
  %v501 = vmul.f32 %v488, %v488
  %v502 = vmul.f32 %v491, %v491
  %v503 = vsel %vm494, %v501, 0.0
  %504 = vadd.xlane.f32.xlu0 %v503
  %v505 = vpop.xlane.xlu0 %504
  %v506 = vsel %vm494, %v502, 0.0
  %507 = vadd.xlane.f32.xlu0 %v506
  %v508 = vpop.xlane.xlu0 %507
  %v509 = vmul.f32 %v497, 0.125
  %v510 = vmul.f32 %v500, 0.125
  %v511 = vmul.f32 %v505, 0.125
  %v512 = vmul.f32 %v508, 0.125
  %v513 = vmul.f32 %v509, %v509
  %v514 = vmul.f32 %v510, %v510
  %v515 = vsub.f32 %v511, %v513
  %v516 = vsub.f32 %v512, %v514
  %v517 = vmax.f32 %v515, 0.0
  %v518 = vmax.f32 %v516, 0.0
  %v519 = vsub.f32 %v488, %v509
  %v520 = vsub.f32 %v491, %v510
  %v521 = vadd.f32 %v517, 1e-05
  %v522 = vadd.f32 %v518, 1e-05
  %v523 = vrsqrt.pop %v521
  %v524 = vrsqrt.pop %v522
  %v525 = vmul.f32 %v519, %v523
  %v526 = vmul.f32 %v520, %v524
  %527 = vst.msk [vmem:[%s3] sm:$0xff] %vm494, %v525
  %528 = vst.msk [vmem:[%s3 + $0x8] sm:$0xff] %vm494, %v526
  // Predicated region
  $region14: #{_forward_jit.42} parent=0 // pred_check
    _
  $region15: #{_forward_jit.42} parent=0 // pred_check_branch
    %530 = sbr.rel (0) target = $region17
  $region16: #{_forward_jit.42} parent=0 // pred_region
    _
  $region17: #{_forward_jit.42} parent=0 // pred_fallthru
    _
  // Predicated region
  $region18: #{_forward_jit.42} parent=0 // pred_check
    _
  $region19: #{_forward_jit.42} parent=0 // pred_check_branch
    %532 = sbr.rel (0) target = $region21
  $region20: #{_forward_jit.42} parent=0 // pred_region
    _
  $region21: #{_forward_jit.42} parent=0 // pred_fallthru
    _

// kernel: _forward_jit.35
$region0: #{_forward_jit.35}
  #allocation0 [shape = 'u32[]', space=smem, size = 0x4, offset = 0x4, fixed_abs, tag = 'smem constant byte address 0x4 - core index']
  #allocation1 [shape = 'u32[144,128]{1,0:T(1,128)}', space=vmem, size = 0x12000, scoped, tag = 'internal scratch']
  %s0 = inlined_call_operand.vmem [shape: bf16[12,32], index: 0, kind: input, shape index: {}]
  %s1 = inlined_call_operand.vmem [shape: bf16[12,32], index: 1, kind: input, shape index: {}]
  %s2 = inlined_call_operand.vmem [shape: bf16[8,12], index: 2, kind: input, shape index: {}]
  %s3 = inlined_call_operand.vmem [shape: bf16[8,12], index: 3, kind: input, shape index: {}]
  %s4 = inlined_call_operand.vmem [shape: f32[2,8,32], index: 4, kind: output, shape index: {}]
  %s5 = sld [smem:[#allocation0]]
  $region26: #{_forward_jit.35} parent=0
    _
  %s7 = ssub.s32 1, %s5
  %s8 = scalar_select 0, %s7, %s5
  // Predicated region
  $region2: #{_forward_jit.35} parent=0 // pred_check
    _
  $region3: #{_forward_jit.35} parent=0 // pred_check_branch
    %10 = sbr.rel (0) target = $region5
  $region4: #{_forward_jit.35} parent=0 // pred_region
    _
  $region5: #{_forward_jit.35} parent=0 // pred_fallthru
    _
  // Predicated region
  $region6: #{_forward_jit.35} parent=0 // pred_check
    _
  $region7: #{_forward_jit.35} parent=0 // pred_check_branch
    %12 = sbr.rel (0) target = $region9
  $region8: #{_forward_jit.35} parent=0 // pred_region
    _
  $region9: #{_forward_jit.35} parent=0 // pred_fallthru
    _
  // Predicated region
  $region10: #{_forward_jit.35} parent=0 // pred_check
    _
  $region11: #{_forward_jit.35} parent=0 // pred_check_branch
    %14 = sbr.rel (0) target = $region13
  $region12: #{_forward_jit.35} parent=0 // pred_region
    _
  $region13: #{_forward_jit.35} parent=0 // pred_fallthru
    _
  // Predicated region
  $region14: #{_forward_jit.35} parent=0 // pred_check
    _
  $region15: #{_forward_jit.35} parent=0 // pred_check_branch
    %16 = sbr.rel (0) target = $region17
  $region16: #{_forward_jit.35} parent=0 // pred_region
    _
  $region17: #{_forward_jit.35} parent=0 // pred_fallthru
    _
  %v18 = vld [vmem:[%s2] sm:$0xf]
  %v19 = vld [vmem:[%s0] sm:$0xf]
  %v20 = vld [vmem:[%s0 + $0x4] sm:$0x3]
  %v23 = vunpack.c.l.b16 %v19
  %v24 = vunpack.c.l.b16 %v20
  %v25 = vpack.c.b16 %v24, %v23
  %vm26 = vcmask 97280
  %v28 = vsel %vm26, %v18, 0
  %vm30 = vcmask 1045504
  %v32 = vsel %vm30, %v25, 0
  %34 = vmatprep.subr.bf16.mxu0 0
  %35 = vmatpush1.bf16.msra.mxu0 %v32
  %36 = vmatprep.subr.bf16.mxu0 0
  %37 = vmatpush1.bf16.msra.mxu0 0
  %38 = vmatprep.subr.bf16.mxu0 0
  %39 = vmatpush1.bf16.msra.mxu0 0
  %40 = vmatprep.subr.bf16.mxu0 0
  %41 = vmatpush1.bf16.msra.mxu0 0
  %42 = vmatprep.subr.bf16.mxu0 0
  %43 = vmatpush1.bf16.msra.mxu0 0
  %44 = vmatprep.subr.bf16.mxu0 0
  %45 = vmatpush1.bf16.msra.mxu0 0
  %46 = vmatprep.subr.bf16.mxu0 0
  %47 = vmatpush1.bf16.msra.mxu0 0
  %48 = vmatprep.subr.bf16.mxu0 0
  %49 = vmatpush1.bf16.msra.mxu0 0
  %50 = vmatprep.subr.bf16.mxu0 0
  %51 = vmatpush1.bf16.msra.mxu0 0
  %52 = vmatprep.subr.bf16.mxu0 0
  %53 = vmatpush1.bf16.msra.mxu0 0
  %54 = vmatprep.subr.bf16.mxu0 0
  %55 = vmatpush1.bf16.msra.mxu0 0
  %56 = vmatprep.subr.bf16.mxu0 0
  %57 = vmatpush1.bf16.msra.mxu0 0
  %58 = vmatprep.subr.bf16.mxu0 0
  %59 = vmatpush1.bf16.msra.mxu0 0
  %60 = vmatprep.subr.bf16.mxu0 0
  %61 = vmatpush1.bf16.msra.mxu0 0
  %62 = vmatprep.subr.bf16.mxu0 0
  %63 = vmatpush1.bf16.msra.mxu0 0
  %64 = vmatprep.subr.bf16.mxu0 0
  %65 = vmatpush1.bf16.msra.mxu0 0
  %66 = vmatprep.mubr.bf16.mxu0 0
  %67 = vmatmul.mubr.bf16.gmra.mrb[0].mxu0 %v28
  %v68 = vpop.f32.mrb[0].mxu0
  %v69 = vadd.f32 0.0, %v68
  %v70 = vpop.f32.mrb[0].mxu0
  %v71 = vpop.f32.mrb[0].mxu0
  %v72 = vpop.f32.mrb[0].mxu0
  %73 = vdwg.mxu0
  %vm74 = vcmask 261120
  %v75 = vsel %vm74, %v69, 0.0
  %76 = vadd.xlane.f32.xlu0 %v75
  %v77 = vpop.xlane.xlu0 %76
  %v78 = vmul.f32 %v69, %v69
  %v79 = vsel %vm74, %v78, 0.0
  %80 = vadd.xlane.f32.xlu0 %v79
  %v81 = vpop.xlane.xlu0 %80
  %v82 = vmul.f32 %v77, 0.03125
  %v83 = vmul.f32 %v81, 0.03125
  %v84 = vmul.f32 %v82, %v82
  %v85 = vsub.f32 %v83, %v84
  %v86 = vmax.f32 %v85, 0.0
  %v87 = vsub.f32 %v69, %v82
  %v88 = vadd.f32 %v86, 1e-05
  %v89 = vrsqrt.pop %v88
  %v90 = vmul.f32 %v87, %v89
  %91 = vst.msk [vmem:[%s4] sm:$0xff] %vm74, %v90
  %v92 = vld [vmem:[%s3] sm:$0xf]
  %v93 = vld [vmem:[%s1] sm:$0xf]
  %v94 = vld [vmem:[%s1 + $0x4] sm:$0x3]
  %v97 = vunpack.c.l.b16 %v93
  %v98 = vunpack.c.l.b16 %v94
  %v99 = vpack.c.b16 %v98, %v97
  %v101 = vsel %vm26, %v92, 0
  %v104 = vsel %vm30, %v99, 0
  %106 = vmatprep.subr.bf16.mxu0 0
  %107 = vmatpush1.bf16.msra.mxu0 %v104
  %108 = vmatprep.subr.bf16.mxu0 0
  %109 = vmatpush1.bf16.msra.mxu0 0
  %110 = vmatprep.subr.bf16.mxu0 0
  %111 = vmatpush1.bf16.msra.mxu0 0
  %112 = vmatprep.subr.bf16.mxu0 0
  %113 = vmatpush1.bf16.msra.mxu0 0
  %114 = vmatprep.subr.bf16.mxu0 0
  %115 = vmatpush1.bf16.msra.mxu0 0
  %116 = vmatprep.subr.bf16.mxu0 0
  %117 = vmatpush1.bf16.msra.mxu0 0
  %118 = vmatprep.subr.bf16.mxu0 0
  %119 = vmatpush1.bf16.msra.mxu0 0
  %120 = vmatprep.subr.bf16.mxu0 0
  %121 = vmatpush1.bf16.msra.mxu0 0
  %122 = vmatprep.subr.bf16.mxu0 0
  %123 = vmatpush1.bf16.msra.mxu0 0
  %124 = vmatprep.subr.bf16.mxu0 0
  %125 = vmatpush1.bf16.msra.mxu0 0
  %126 = vmatprep.subr.bf16.mxu0 0
  %127 = vmatpush1.bf16.msra.mxu0 0
  %128 = vmatprep.subr.bf16.mxu0 0
  %129 = vmatpush1.bf16.msra.mxu0 0
  %130 = vmatprep.subr.bf16.mxu0 0
  %131 = vmatpush1.bf16.msra.mxu0 0
  %132 = vmatprep.subr.bf16.mxu0 0
  %133 = vmatpush1.bf16.msra.mxu0 0
  %134 = vmatprep.subr.bf16.mxu0 0
  %135 = vmatpush1.bf16.msra.mxu0 0
  %136 = vmatprep.subr.bf16.mxu0 0
  %137 = vmatpush1.bf16.msra.mxu0 0
  %138 = vmatprep.mubr.bf16.mxu0 0
  %139 = vmatmul.mubr.bf16.gmra.mrb[0].mxu0 %v101
  %v140 = vpop.f32.mrb[0].mxu0
  %v141 = vadd.f32 0.0, %v140
  %v142 = vpop.f32.mrb[0].mxu0
  %v143 = vpop.f32.mrb[0].mxu0
  %v144 = vpop.f32.mrb[0].mxu0
  %145 = vdwg.mxu0
  %v146 = vsel %vm74, %v141, 0.0
  %147 = vadd.xlane.f32.xlu0 %v146
  %v148 = vpop.xlane.xlu0 %147
  %v149 = vmul.f32 %v141, %v141
  %v150 = vsel %vm74, %v149, 0.0
  %151 = vadd.xlane.f32.xlu0 %v150
  %v152 = vpop.xlane.xlu0 %151
  %v153 = vmul.f32 %v148, 0.03125
  %v154 = vmul.f32 %v152, 0.03125
  %v155 = vmul.f32 %v153, %v153
  %v156 = vsub.f32 %v154, %v155
  %v157 = vmax.f32 %v156, 0.0
  %v158 = vsub.f32 %v141, %v153
  %v159 = vadd.f32 %v157, 1e-05
  %v160 = vrsqrt.pop %v159
  %v161 = vmul.f32 %v158, %v160
  %s162 = scalar_lea.vmem %s4, 8
  %163 = vst.msk [vmem:[%s162] sm:$0xff] %vm74, %v161
  // Predicated region
  $region18: #{_forward_jit.35} parent=0 // pred_check
    _
  $region19: #{_forward_jit.35} parent=0 // pred_check_branch
    %165 = sbr.rel (0) target = $region21
  $region20: #{_forward_jit.35} parent=0 // pred_region
    _
  $region21: #{_forward_jit.35} parent=0 // pred_fallthru
    _
  // Predicated region
  $region22: #{_forward_jit.35} parent=0 // pred_check
    _
  $region23: #{_forward_jit.35} parent=0 // pred_check_branch
    %167 = sbr.rel (0) target = $region25
  $region24: #{_forward_jit.35} parent=0 // pred_region
    _
  $region25: #{_forward_jit.35} parent=0 // pred_fallthru
    _

// kernel: _forward_jit.38
$region0: #{_forward_jit.38}
  #allocation0 [shape = 'u32[]', space=smem, size = 0x4, offset = 0x4, fixed_abs, tag = 'smem constant byte address 0x4 - core index']
  #allocation1 [shape = 'u32[144,128]{1,0:T(1,128)}', space=vmem, size = 0x12000, scoped, tag = 'internal scratch']
  %s0 = inlined_call_operand.vmem [shape: f32[9,16,8], index: 0, kind: input, shape index: {}]
  %s1 = inlined_call_operand.vmem [shape: f32[1,8], index: 1, kind: input, shape index: {}]
  %s2 = inlined_call_operand.vmem [shape: f32[16,8], index: 2, kind: output, shape index: {}]
  %s3 = sld [smem:[#allocation0]]
  $region18: #{_forward_jit.38} parent=0
    _
  %s5 = ssub.s32 1, %s3
  %s6 = scalar_select 0, %s5, %s3
  // Predicated region
  $region2: #{_forward_jit.38} parent=0 // pred_check
    _
  $region3: #{_forward_jit.38} parent=0 // pred_check_branch
    %8 = sbr.rel (0) target = $region5
  $region4: #{_forward_jit.38} parent=0 // pred_region
    _
  $region5: #{_forward_jit.38} parent=0 // pred_fallthru
    _
  // Predicated region
  $region6: #{_forward_jit.38} parent=0 // pred_check
    _
  $region7: #{_forward_jit.38} parent=0 // pred_check_branch
    %10 = sbr.rel (0) target = $region9
  $region8: #{_forward_jit.38} parent=0 // pred_region
    _
  $region9: #{_forward_jit.38} parent=0 // pred_fallthru
    _
  %v11 = vld [vmem:[%s0] sm:$0xff]
  %v12 = vld [vmem:[%s0 + $0x8] sm:$0xff]
  %s13 = scalar_lea.vmem %s0, 16
  %v14 = vld [vmem:[%s13] sm:$0xff]
  %v15 = vld [vmem:[%s13 + $0x8] sm:$0xff]
  %v16 = vadd.f32 %v11, %v14
  %v17 = vadd.f32 %v12, %v15
  %s18 = scalar_lea.vmem %s0, 32
  %v19 = vld [vmem:[%s18] sm:$0xff]
  %v20 = vld [vmem:[%s18 + $0x8] sm:$0xff]
  %v21 = vadd.f32 %v16, %v19
  %v22 = vadd.f32 %v17, %v20
  %s23 = scalar_lea.vmem %s0, 48
  %v24 = vld [vmem:[%s23] sm:$0xff]
  %v25 = vld [vmem:[%s23 + $0x8] sm:$0xff]
  %v26 = vadd.f32 %v21, %v24
  %v27 = vadd.f32 %v22, %v25
  %s28 = scalar_lea.vmem %s0, 64
  %v29 = vld [vmem:[%s28] sm:$0xff]
  %v30 = vld [vmem:[%s28 + $0x8] sm:$0xff]
  %v31 = vadd.f32 %v26, %v29
  %v32 = vadd.f32 %v27, %v30
  %s33 = scalar_lea.vmem %s0, 80
  %v34 = vld [vmem:[%s33] sm:$0xff]
  %v35 = vld [vmem:[%s33 + $0x8] sm:$0xff]
  %v36 = vadd.f32 %v31, %v34
  %v37 = vadd.f32 %v32, %v35
  %s38 = scalar_lea.vmem %s0, 96
  %v39 = vld [vmem:[%s38] sm:$0xff]
  %v40 = vld [vmem:[%s38 + $0x8] sm:$0xff]
  %v41 = vadd.f32 %v36, %v39
  %v42 = vadd.f32 %v37, %v40
  %s43 = scalar_lea.vmem %s0, 112
  %v44 = vld [vmem:[%s43] sm:$0xff]
  %v45 = vld [vmem:[%s43 + $0x8] sm:$0xff]
  %v46 = vadd.f32 %v41, %v44
  %v47 = vadd.f32 %v42, %v45
  %s48 = scalar_lea.vmem %s0, 128
  %v49 = vld [vmem:[%s48] sm:$0xff]
  %v50 = vld [vmem:[%s48 + $0x8] sm:$0xff]
  %v51 = vadd.f32 %v46, %v49
  %v52 = vadd.f32 %v47, %v50
  %v53 = vld [vmem:[%s1] sm:$0x1]
  %v55 = vlaneseq
  %v56 = vshrl.u32 %v55, 7
  %v57 = vsub.s32 0, %v56
  %v58 = vrot.slane %v53, %v57
  %v60 = vmul.f32 %v51, %v58
  %v61 = vmul.f32 %v52, %v58
  %vm62 = vcmask 64512
  %v63 = vsel %vm62, %v60, 0.0
  %64 = vadd.xlane.f32.xlu0 %v63
  %v65 = vpop.xlane.xlu0 %64
  %v66 = vsel %vm62, %v61, 0.0
  %67 = vadd.xlane.f32.xlu0 %v66
  %v68 = vpop.xlane.xlu0 %67
  %v69 = vmul.f32 %v60, %v60
  %v70 = vmul.f32 %v61, %v61
  %v71 = vsel %vm62, %v69, 0.0
  %72 = vadd.xlane.f32.xlu0 %v71
  %v73 = vpop.xlane.xlu0 %72
  %v74 = vsel %vm62, %v70, 0.0
  %75 = vadd.xlane.f32.xlu0 %v74
  %v76 = vpop.xlane.xlu0 %75
  %v77 = vmul.f32 %v65, 0.125
  %v78 = vmul.f32 %v68, 0.125
  %v79 = vmul.f32 %v73, 0.125
  %v80 = vmul.f32 %v76, 0.125
  %v81 = vmul.f32 %v77, %v77
  %v82 = vmul.f32 %v78, %v78
  %v83 = vsub.f32 %v79, %v81
  %v84 = vsub.f32 %v80, %v82
  %v85 = vmax.f32 %v83, 0.0
  %v86 = vmax.f32 %v84, 0.0
  %v87 = vsub.f32 %v60, %v77
  %v88 = vsub.f32 %v61, %v78
  %v89 = vadd.f32 %v85, 1e-05
  %v90 = vadd.f32 %v86, 1e-05
  %v91 = vrsqrt.pop %v89
  %v92 = vrsqrt.pop %v90
  %v93 = vmul.f32 %v87, %v91
  %v94 = vmul.f32 %v88, %v92
  %95 = vst.msk [vmem:[%s2] sm:$0xff] %vm62, %v93
  %96 = vst.msk [vmem:[%s2 + $0x8] sm:$0xff] %vm62, %v94
  // Predicated region
  $region10: #{_forward_jit.38} parent=0 // pred_check
    _
  $region11: #{_forward_jit.38} parent=0 // pred_check_branch
    %98 = sbr.rel (0) target = $region13
  $region12: #{_forward_jit.38} parent=0 // pred_region
    _
  $region13: #{_forward_jit.38} parent=0 // pred_fallthru
    _
  // Predicated region
  $region14: #{_forward_jit.38} parent=0 // pred_check
    _
  $region15: #{_forward_jit.38} parent=0 // pred_check_branch
    %100 = sbr.rel (0) target = $region17
  $region16: #{_forward_jit.38} parent=0 // pred_region
    _
  $region17: #{_forward_jit.38} parent=0 // pred_fallthru
    _

// kernel: _forward_jit.37
$region0: #{_forward_jit.37}
  #allocation0 [shape = 'u32[]', space=smem, size = 0x4, offset = 0x4, fixed_abs, tag = 'smem constant byte address 0x4 - core index']
  #allocation1 [shape = 'u32[144,128]{1,0:T(1,128)}', space=vmem, size = 0x12000, scoped, tag = 'internal scratch']
  %s0 = inlined_call_operand.vmem [shape: f32[9,16,8], index: 0, kind: input, shape index: {}]
  %s1 = inlined_call_operand.vmem [shape: f32[16,8], index: 1, kind: output, shape index: {}]
  %s2 = sld [smem:[#allocation0]]
  $region14: #{_forward_jit.37} parent=0
    _
  %s4 = ssub.s32 1, %s2
  %s5 = scalar_select 0, %s4, %s2
  // Predicated region
  $region2: #{_forward_jit.37} parent=0 // pred_check
    _
  $region3: #{_forward_jit.37} parent=0 // pred_check_branch
    %7 = sbr.rel (0) target = $region5
  $region4: #{_forward_jit.37} parent=0 // pred_region
    _
  $region5: #{_forward_jit.37} parent=0 // pred_fallthru
    _
  %v8 = vld [vmem:[%s0] sm:$0xff]
  %v9 = vld [vmem:[%s0 + $0x8] sm:$0xff]
  %s10 = scalar_lea.vmem %s0, 16
  %v11 = vld [vmem:[%s10] sm:$0xff]
  %v12 = vld [vmem:[%s10 + $0x8] sm:$0xff]
  %v13 = vmax.f32 %v8, %v11
  %v14 = vmax.f32 %v9, %v12
  %s15 = scalar_lea.vmem %s0, 32
  %v16 = vld [vmem:[%s15] sm:$0xff]
  %v17 = vld [vmem:[%s15 + $0x8] sm:$0xff]
  %v18 = vmax.f32 %v13, %v16
  %v19 = vmax.f32 %v14, %v17
  %s20 = scalar_lea.vmem %s0, 48
  %v21 = vld [vmem:[%s20] sm:$0xff]
  %v22 = vld [vmem:[%s20 + $0x8] sm:$0xff]
  %v23 = vmax.f32 %v18, %v21
  %v24 = vmax.f32 %v19, %v22
  %s25 = scalar_lea.vmem %s0, 64
  %v26 = vld [vmem:[%s25] sm:$0xff]
  %v27 = vld [vmem:[%s25 + $0x8] sm:$0xff]
  %v28 = vmax.f32 %v23, %v26
  %v29 = vmax.f32 %v24, %v27
  %s30 = scalar_lea.vmem %s0, 80
  %v31 = vld [vmem:[%s30] sm:$0xff]
  %v32 = vld [vmem:[%s30 + $0x8] sm:$0xff]
  %v33 = vmax.f32 %v28, %v31
  %v34 = vmax.f32 %v29, %v32
  %s35 = scalar_lea.vmem %s0, 96
  %v36 = vld [vmem:[%s35] sm:$0xff]
  %v37 = vld [vmem:[%s35 + $0x8] sm:$0xff]
  %v38 = vmax.f32 %v33, %v36
  %v39 = vmax.f32 %v34, %v37
  %s40 = scalar_lea.vmem %s0, 112
  %v41 = vld [vmem:[%s40] sm:$0xff]
  %v42 = vld [vmem:[%s40 + $0x8] sm:$0xff]
  %v43 = vmax.f32 %v38, %v41
  %v44 = vmax.f32 %v39, %v42
  %s45 = scalar_lea.vmem %s0, 128
  %v46 = vld [vmem:[%s45] sm:$0xff]
  %v47 = vld [vmem:[%s45 + $0x8] sm:$0xff]
  %v48 = vmax.f32 %v43, %v46
  %v49 = vmax.f32 %v44, %v47
  %vm50 = vcmask 64512
  %v51 = vsel %vm50, %v48, 0.0
  %52 = vadd.xlane.f32.xlu0 %v51
  %v53 = vpop.xlane.xlu0 %52
  %v54 = vsel %vm50, %v49, 0.0
  %55 = vadd.xlane.f32.xlu0 %v54
  %v56 = vpop.xlane.xlu0 %55
  %v57 = vmul.f32 %v48, %v48
  %v58 = vmul.f32 %v49, %v49
  %v59 = vsel %vm50, %v57, 0.0
  %60 = vadd.xlane.f32.xlu0 %v59
  %v61 = vpop.xlane.xlu0 %60
  %v62 = vsel %vm50, %v58, 0.0
  %63 = vadd.xlane.f32.xlu0 %v62
  %v64 = vpop.xlane.xlu0 %63
  %v65 = vmul.f32 %v53, 0.125
  %v66 = vmul.f32 %v56, 0.125
  %v67 = vmul.f32 %v61, 0.125
  %v68 = vmul.f32 %v64, 0.125
  %v69 = vmul.f32 %v65, %v65
  %v70 = vmul.f32 %v66, %v66
  %v71 = vsub.f32 %v67, %v69
  %v72 = vsub.f32 %v68, %v70
  %v73 = vmax.f32 %v71, 0.0
  %v74 = vmax.f32 %v72, 0.0
  %v75 = vsub.f32 %v48, %v65
  %v76 = vsub.f32 %v49, %v66
  %v77 = vadd.f32 %v73, 1e-05
  %v78 = vadd.f32 %v74, 1e-05
  %v79 = vrsqrt.pop %v77
  %v80 = vrsqrt.pop %v78
  %v81 = vmul.f32 %v75, %v79
  %v82 = vmul.f32 %v76, %v80
  %83 = vst.msk [vmem:[%s1] sm:$0xff] %vm50, %v81
  %84 = vst.msk [vmem:[%s1 + $0x8] sm:$0xff] %vm50, %v82
  // Predicated region
  $region6: #{_forward_jit.37} parent=0 // pred_check
    _
  $region7: #{_forward_jit.37} parent=0 // pred_check_branch
    %86 = sbr.rel (0) target = $region9
  $region8: #{_forward_jit.37} parent=0 // pred_region
    _
  $region9: #{_forward_jit.37} parent=0 // pred_fallthru
    _
  // Predicated region
  $region10: #{_forward_jit.37} parent=0 // pred_check
    _
  $region11: #{_forward_jit.37} parent=0 // pred_check_branch
    %88 = sbr.rel (0) target = $region13
  $region12: #{_forward_jit.37} parent=0 // pred_region
    _
  $region13: #{_forward_jit.37} parent=0 // pred_fallthru
    _

// kernel: _forward_jit.45
$region0: #{_forward_jit.45}
  #allocation0 [shape = 'u32[]', space=smem, size = 0x4, offset = 0x4, fixed_abs, tag = 'smem constant byte address 0x4 - core index']
  #allocation1 [shape = 'u32[144,128]{1,0:T(1,128)}', space=vmem, size = 0x12000, scoped, tag = 'internal scratch']
  %s0 = inlined_call_operand.vmem [shape: f32[64,2], index: 0, kind: input, shape index: {}]
  %s1 = inlined_call_operand.vmem [shape: f32[10,64], index: 1, kind: input, shape index: {}]
  %s2 = inlined_call_operand.vmem [shape: f32[10,1], index: 2, kind: input, shape index: {}]
  %s3 = inlined_call_operand.vmem [shape: f32[10,1], index: 3, kind: input, shape index: {}]
  %s4 = inlined_call_operand.vmem [shape: f32[10,2], index: 4, kind: output, shape index: {}]
  %s5 = sld [smem:[#allocation0]]
  $region26: #{_forward_jit.45} parent=0
    _
  %s7 = ssub.s32 1, %s5
  %s8 = scalar_select 0, %s7, %s5
  // Predicated region
  $region2: #{_forward_jit.45} parent=0 // pred_check
    _
  $region3: #{_forward_jit.45} parent=0 // pred_check_branch
    %10 = sbr.rel (0) target = $region5
  $region4: #{_forward_jit.45} parent=0 // pred_region
    _
  $region5: #{_forward_jit.45} parent=0 // pred_fallthru
    _
  // Predicated region
  $region6: #{_forward_jit.45} parent=0 // pred_check
    _
  $region7: #{_forward_jit.45} parent=0 // pred_check_branch
    %12 = sbr.rel (0) target = $region9
  $region8: #{_forward_jit.45} parent=0 // pred_region
    _
  $region9: #{_forward_jit.45} parent=0 // pred_fallthru
    _
  // Predicated region
  $region10: #{_forward_jit.45} parent=0 // pred_check
    _
  $region11: #{_forward_jit.45} parent=0 // pred_check_branch
    %14 = sbr.rel (0) target = $region13
  $region12: #{_forward_jit.45} parent=0 // pred_region
    _
  $region13: #{_forward_jit.45} parent=0 // pred_fallthru
    _
  // Predicated region
  $region14: #{_forward_jit.45} parent=0 // pred_check
    _
  $region15: #{_forward_jit.45} parent=0 // pred_check_branch
    %16 = sbr.rel (0) target = $region17
  $region16: #{_forward_jit.45} parent=0 // pred_region
    _
  $region17: #{_forward_jit.45} parent=0 // pred_fallthru
    _
  %v17 = vld [vmem:[%s1] sm:$0xff]
  %v18 = vld [vmem:[%s1 + $0x8] sm:$0x3]
  %v19 = vld [vmem:[%s0] sm:$0xff]
  %v20 = vld [vmem:[%s0 + $0x8] sm:$0xff]
  %v21 = vld [vmem:[%s0 + $0x10] sm:$0xff]
  %v22 = vld [vmem:[%s0 + $0x18] sm:$0xff]
  %v23 = vld [vmem:[%s0 + $0x20] sm:$0xff]
  %v24 = vld [vmem:[%s0 + $0x28] sm:$0xff]
  %v25 = vld [vmem:[%s0 + $0x30] sm:$0xff]
  %v26 = vld [vmem:[%s0 + $0x38] sm:$0xff]
  %vm27 = vcmask 523264
  %v29 = vsel %vm27, %v17, 0
  %v32 = vsel %vm27, %v18, 0
  %34 = vmatprep.subr.mxu0 0.0
  %35 = vmatpush1.msra.mxu0 %v19
  %36 = vmatprep.subr.mxu0 0.0
  %37 = vmatpush1.msra.mxu0 %v20
  %38 = vmatprep.subr.mxu0 0.0
  %39 = vmatpush1.msra.mxu0 %v21
  %40 = vmatprep.subr.mxu0 0.0
  %41 = vmatpush1.msra.mxu0 %v22
  %42 = vmatprep.subr.mxu0 0.0
  %43 = vmatpush1.msra.mxu0 %v23
  %44 = vmatprep.subr.mxu0 0.0
  %45 = vmatpush1.msra.mxu0 %v24
  %46 = vmatprep.subr.mxu0 0.0
  %47 = vmatpush1.msra.mxu0 %v25
  %48 = vmatprep.subr.mxu0 0.0
  %49 = vmatpush1.msra.mxu0 %v26
  %50 = vmatprep.subr.mxu0 0.0
  %51 = vmatpush1.msra.mxu0 0.0
  %52 = vmatprep.subr.mxu0 0.0
  %53 = vmatpush1.msra.mxu0 0.0
  %54 = vmatprep.subr.mxu0 0.0
  %55 = vmatpush1.msra.mxu0 0.0
  %56 = vmatprep.subr.mxu0 0.0
  %57 = vmatpush1.msra.mxu0 0.0
  %58 = vmatprep.subr.mxu0 0.0
  %59 = vmatpush1.msra.mxu0 0.0
  %60 = vmatprep.subr.mxu0 0.0
  %61 = vmatpush1.msra.mxu0 0.0
  %62 = vmatprep.subr.mxu0 0.0
  %63 = vmatpush1.msra.mxu0 0.0
  %64 = vmatprep.subr.mxu0 0.0
  %65 = vmatpush1.msra.mxu0 0.0
  %66 = vmatprep.subr.mxu0 0.0
  %67 = vmatpush1.msra.mxu0 0.0
  %68 = vmatprep.subr.mxu0 0.0
  %69 = vmatpush1.msra.mxu0 0.0
  %70 = vmatprep.subr.mxu0 0.0
  %71 = vmatpush1.msra.mxu0 0.0
  %72 = vmatprep.subr.mxu0 0.0
  %73 = vmatpush1.msra.mxu0 0.0
  %74 = vmatprep.subr.mxu0 0.0
  %75 = vmatpush1.msra.mxu0 0.0
  %76 = vmatprep.subr.mxu0 0.0
  %77 = vmatpush1.msra.mxu0 0.0
  %78 = vmatprep.subr.mxu0 0.0
  %79 = vmatpush1.msra.mxu0 0.0
  %80 = vmatprep.subr.mxu0 0.0
  %81 = vmatpush1.msra.mxu0 0.0
  %82 = vmatprep.subr.mxu0 0.0
  %83 = vmatpush1.msra.mxu0 0.0
  %84 = vmatprep.subr.mxu0 0.0
  %85 = vmatpush1.msra.mxu0 0.0
  %86 = vmatprep.subr.mxu0 0.0
  %87 = vmatpush1.msra.mxu0 0.0
  %88 = vmatprep.subr.mxu0 0.0
  %89 = vmatpush1.msra.mxu0 0.0
  %90 = vmatprep.subr.mxu0 0.0
  %91 = vmatpush1.msra.mxu0 0.0
  %92 = vmatprep.subr.mxu0 0.0
  %93 = vmatpush1.msra.mxu0 0.0
  %94 = vmatprep.subr.mxu0 0.0
  %95 = vmatpush1.msra.mxu0 0.0
  %96 = vmatprep.subr.mxu0 0.0
  %97 = vmatpush1.msra.mxu0 0.0
  %98 = vmatprep.mubr.f32.mxu0 0.0
  %99 = vmatmul.mubr.f32.gmra.mrb[0].mxu0 %v29
  %v100 = vpop.f32.mrb[0].mxu0
  %v101 = vadd.f32 0.0, %v100
  %v102 = vpop.f32.mrb[0].mxu0
  %103 = vmatprep.mubr.f32.mxu0 0.0
  %104 = vmatmul.mubr.f32.gmra.mrb[0].mxu0 %v32
  %v105 = vpop.f32.mrb[0].mxu0
  %v106 = vadd.f32 0.0, %v105
  %v107 = vpop.f32.mrb[0].mxu0
  %108 = vdwg.mxu0
  %v109 = vld [vmem:[%s2] sm:$0xff]
  %v110 = vld [vmem:[%s2 + $0x8] sm:$0x3]
  %112 = vset.pattern.permute.xlu0 0
  %113 = vperm.xlu0 %112, %v109
  %v114 = vpop.permute.xlu0 %113
  %117 = vset.pattern.permute.xlu0 0
  %118 = vperm.xlu0 %117, %v110
  %v119 = vpop.permute.xlu0 %118
  %v121 = vmul.f32 %v101, %v114
  %v122 = vmul.f32 %v106, %v119
  %v123 = vld [vmem:[%s3] sm:$0xff]
  %v124 = vld [vmem:[%s3 + $0x8] sm:$0x3]
  %126 = vset.pattern.permute.xlu0 0
  %127 = vperm.xlu0 %126, %v123
  %v128 = vpop.permute.xlu0 %127
  %131 = vset.pattern.permute.xlu0 0
  %132 = vperm.xlu0 %131, %v124
  %v133 = vpop.permute.xlu0 %132
  %v135 = vadd.f32 %v121, %v128
  %v136 = vadd.f32 %v122, %v133
  %vm137 = vcmask 15360
  %138 = vst.msk [vmem:[%s4] sm:$0xff] %vm137, %v135
  %vm139 = vcmask 9216
  %140 = vst.msk [vmem:[%s4 + $0x8] sm:$0x3] %vm139, %v136
  // Predicated region
  $region18: #{_forward_jit.45} parent=0 // pred_check
    _
  $region19: #{_forward_jit.45} parent=0 // pred_check_branch
    %142 = sbr.rel (0) target = $region21
  $region20: #{_forward_jit.45} parent=0 // pred_region
    _
  $region21: #{_forward_jit.45} parent=0 // pred_fallthru
    _
  // Predicated region
  $region22: #{_forward_jit.45} parent=0 // pred_check
    _
  $region23: #{_forward_jit.45} parent=0 // pred_check_branch
    %144 = sbr.rel (0) target = $region25
  $region24: #{_forward_jit.45} parent=0 // pred_region
    _
  $region25: #{_forward_jit.45} parent=0 // pred_fallthru
    _

</llo_original>
